<compile_context>
chip_gen: v5e
topology: v5e:2x2
jax: 0.10.0
libtpu: 0.0.40
codegen_flags: <defaults>
</compile_context>

<pallas_src>
from functools import partial

import jax
import jax.numpy as jnp
from jax import lax
from jax.experimental import pallas as pl
from jax.experimental.pallas import tpu as pltpu

BN_EPS = 1e-5
INV_1414 = 1.0 / 1.414  # reciprocal of the module's literal


def _round_up(v, m):
    return (v + m - 1) // m * m


# ------------------------------ in-kernel math ------------------------------
def _erf(x):
    # Abramowitz & Stegun 7.1.26 (max abs err ~1.5e-7): mul/add/exp only,
    # which lower cleanly on the TPU VPU/EUP.
    a1, a2, a3, a4, a5 = 0.254829592, -0.284496736, 1.421413741, -1.453152027, 1.061405429
    p = 0.3275911
    sign = jnp.where(x >= 0, 1.0, -1.0)
    ax = jnp.abs(x)
    t = 1.0 / (1.0 + p * ax)
    poly = ((((a5 * t + a4) * t + a3) * t + a2) * t + a1) * t
    return sign * (1.0 - poly * jnp.exp(-ax * ax))


def _gelu_exact(x):
    return 0.5 * x * (1.0 + _erf(x * 0.7071067811865475))


def _advance(x, k):
    """y[..., p] = x[..., (p + k) % L] for static k (cheap lane rotation).

    Wrap-around only contaminates border/tail positions, which the caller
    masks back to zero, so circular shifts are safe here.
    """
    L = x.shape[-1]
    k = k % L
    if k == 0:
        return x
    return jnp.concatenate([x[..., k:], x[..., :k]], axis=-1)


def _conv3x3_flat(x, w_ref, cin, cout, wp, use_mxu):
    """3x3 'same' conv in padded-flat (C, Lpad) layout.

    x:     (cin, Lpad) value, zeros at border / tail positions.
    w_ref: (cout, 9*cin) VMEM ref, w[co, t*cin + ci] with t = kh*3 + kw.
    Returns the raw (cout, Lpad) conv; the caller re-masks border/tail positions.
    """
    lpad = x.shape[-1]
    offs = [(kh - 1) * wp + (kw - 1) for kh in range(3) for kw in range(3)]
    if use_mxu:
        # Large-channel path: single deep-K matmul (K = 9*cin) on the MXU.
        patches = jnp.concatenate([_advance(x, d) for d in offs], axis=0)
        return jnp.dot(w_ref[...], patches, preferred_element_type=jnp.float32)
    # Small-channel path (shipped config): 9*cin broadcast-FMAs on the VPU with
    # the spatial axis lane-dense; skips the MXU entirely (exact f32 FMAs).
    acc = jnp.zeros((cout, lpad), jnp.float32)
    for t, d in enumerate(offs):
        sh = _advance(x, d)                              # (cin, Lpad)
        for ci in range(cin):
            idx = t * cin + ci
            wcol = w_ref[:, idx:idx + 1]                 # (cout, 1)
            acc = acc + wcol * sh[ci:ci + 1, :]          # (cout, Lpad) FMA
    return acc


def _stats(acc, mask, inv_hw):
    """Per-image per-channel (sum, centered sum-of-squares); acc already masked."""
    s1 = jnp.sum(acc, axis=1, keepdims=True)             # (cout, 1)
    centered = (acc - s1 * inv_hw) * mask
    q = jnp.sum(centered * centered, axis=1, keepdims=True)
    return jnp.concatenate([s1, q], axis=1)              # (cout, 2)


# --------------------------------- kernels ----------------------------------
def _make_conv1_kernel(cin, cout, wp, inv_hw, use_mxu):
    def kernel(xp_ref, w_ref, mask_ref, z_ref, st_ref):
        mask = mask_ref[...]
        acc = _conv3x3_flat(xp_ref[...], w_ref, cin, cout, wp, use_mxu) * mask
        z_ref[...] = acc
        st_ref[...] = _stats(acc, mask, inv_hw)
    return kernel


def _make_conv2_kernel(cout, wp, inv_hw, use_mxu, emit_x1):
    def kernel(z1_ref, a_ref, c_ref, mask_ref, w_ref, *outs):
        if emit_x1:
            z2_ref, st_ref, x1_ref = outs
        else:
            z2_ref, st_ref = outs
        mask = mask_ref[...]
        # conv1 epilogue: folded BN (scale/shift) + exact GELU; the mask restores
        # the zero border/tail so x1 is directly conv2's zero-padded input.
        x1 = _gelu_exact(z1_ref[...] * a_ref[...] + c_ref[...]) * mask
        if emit_x1:
            x1_ref[...] = x1        # only needed as the residual when Cin != Cout
        acc = _conv3x3_flat(x1, w_ref, cout, cout, wp, use_mxu) * mask
        z2_ref[...] = acc
        st_ref[...] = _stats(acc, mask, inv_hw)
    return kernel


def _bn_gelu_res_kernel(z_ref, a_ref, c_ref, r_ref, o_ref):
    o_ref[...] = (r_ref[...] + _gelu_exact(z_ref[...] * a_ref[...] + c_ref[...])) * INV_1414


def _bn_gelu_kernel(z_ref, a_ref, c_ref, o_ref):
    o_ref[...] = _gelu_exact(z_ref[...] * a_ref[...] + c_ref[...])


# --------------------------------- wrapper -----------------------------------
def _w_to_mat(w_oihw):
    # (Cout, Cin, 3, 3) -> (Cout, 9*Cin), column order t*Cin + ci with t = kh*3 + kw.
    cout, cin, k, _ = w_oihw.shape
    return jnp.transpose(w_oihw, (0, 2, 3, 1)).reshape(cout, k * k * cin).astype(jnp.float32)


def _bn_fold(st, gamma, beta, hw, count):
    """Chan-combine per-image (sum, centered SSQ) -> per-channel (scale, shift)."""
    s1 = st[:, :, 0]                                    # (N, C)
    q = st[:, :, 1]
    mean = jnp.sum(s1, axis=0) / count                  # (C,)
    m_i = s1 / hw
    var = (jnp.sum(q, axis=0) + hw * jnp.sum((m_i - mean) ** 2, axis=0)) / count
    var = jnp.maximum(var, 0.0)                         # biased batch variance
    a = gamma * lax.rsqrt(var + BN_EPS)
    c = beta - a * mean
    return a[:, None].astype(jnp.float32), c[:, None].astype(jnp.float32)


def residual_conv_block(x_nchw, params, is_res=True):
    """Forward pass of ResidualConvBlock.  Input/output layout: NCHW (PyTorch)."""
    n, cin, h, w = x_nchw.shape
    cout = params["w1"].shape[0]
    assert params["w1"].shape[2] == 3, "module uses 3x3 convs with padding=1"
    same_channels = cin == cout
    hp, wp = h + 2, w + 2
    lpad = _round_up(hp * wp, 128)
    hw = h * w
    count = float(n * hw)
    inv_hw = 1.0 / float(hw)
    # TODO(synk): add spatial row-tiling (extra grid axis with a 1-row halo) for
    # large images so per-step VMEM stays bounded on v7x's 64 MiB.

    # channel-major, spatially zero-padded, lane-flattened layout: (N, C, Lpad)
    xp = jnp.pad(x_nchw.astype(jnp.float32), ((0, 0), (0, 0), (1, 1), (1, 1)))
    xp = xp.reshape(n, cin, hp * wp)
    xp = jnp.pad(xp, ((0, 0), (0, 0), (0, lpad - hp * wp)))

    # interior mask (1, Lpad): 1 on real pixels, 0 on padding border + lane tail
    mask = jnp.pad(jnp.ones((h, w), jnp.float32), ((1, 1), (1, 1))).reshape(1, hp * wp)
    mask = jnp.pad(mask, ((0, 0), (0, lpad - hp * wp)))

    w1 = _w_to_mat(params["w1"])        # (cout, 9*cin)
    w2 = _w_to_mat(params["w2"])        # (cout, 9*cout)
    # NOTE: conv biases (params["b1"/"b2"]) are intentionally unused: train-mode
    # BatchNorm subtracts the batch mean, so a pre-BN per-channel bias cancels.
    # TODO(synk): reinstate the biases if eval-mode (running-stats) BN is needed.

    use_mxu1 = max(cin, cout) >= 32     # VPU conv for small channel counts
    use_mxu2 = cout >= 32

    def per_img(shape):
        zeros = (0,) * len(shape)
        return pl.BlockSpec((None,) + shape, lambda i: (i,) + zeros)

    def full(shape):
        zeros = (0,) * len(shape)
        return pl.BlockSpec(shape, lambda i: zeros)

    cparams = pltpu.CompilerParams(
        dimension_semantics=("parallel",),       # per-image steps are independent
        vmem_limit_bytes=48 * 1024 * 1024,       # < v7x's 64 MiB physical VMEM
    )

    # ---- stage 1: conv1 (lane-dense) + per-image BN statistics ----
    z1, st1 = pl.pallas_call(
        _make_conv1_kernel(cin, cout, wp, inv_hw, use_mxu1),
        grid=(n,),
        in_specs=[per_img((cin, lpad)), full((cout, 9 * cin)), full((1, lpad))],
        out_specs=[per_img((cout, lpad)), per_img((cout, 2))],
        out_shape=[jax.ShapeDtypeStruct((n, cout, lpad), jnp.float32),
                   jax.ShapeDtypeStruct((n, cout, 2), jnp.float32)],
        compiler_params=cparams,
    )(xp, w1, mask)
    a1, c1 = _bn_fold(st1, params["g1"], params["beta1"], hw, count)

    # ---- stage 2: conv1 BN+GELU fused with conv2 + its statistics ----
    need_x1 = is_res and not same_channels
    out_specs = [per_img((cout, lpad)), per_img((cout, 2))]
    out_shape = [jax.ShapeDtypeStruct((n, cout, lpad), jnp.float32),
                 jax.ShapeDtypeStruct((n, cout, 2), jnp.float32)]
    if need_x1:
        out_specs.append(per_img((cout, lpad)))
        out_shape.append(jax.ShapeDtypeStruct((n, cout, lpad), jnp.float32))
    stage2 = pl.pallas_call(
        _make_conv2_kernel(cout, wp, inv_hw, use_mxu2, need_x1),
        grid=(n,),
        in_specs=[per_img((cout, lpad)), full((cout, 1)), full((cout, 1)),
                  full((1, lpad)), full((cout, 9 * cout))],
        out_specs=out_specs,
        out_shape=out_shape,
        compiler_params=cparams,
    )(z1, a1, c1, mask, w2)
    if need_x1:
        z2, st2, x1 = stage2
    else:
        z2, st2 = stage2
        x1 = None
    a2, c2 = _bn_fold(st2, params["g2"], params["beta2"], hw, count)

    # ---- stage 3: conv2 BN+GELU (+ residual add and *1/1.414), lane-dense ----
    if is_res:
        resid = xp if same_channels else x1
        out = pl.pallas_call(
            _bn_gelu_res_kernel,
            grid=(n,),
            in_specs=[per_img((cout, lpad)), full((cout, 1)), full((cout, 1)),
                      per_img((cout, lpad))],
            out_specs=per_img((cout, lpad)),
            out_shape=jax.ShapeDtypeStruct((n, cout, lpad), jnp.float32),
            compiler_params=cparams,
        )(z2, a2, c2, resid)
    else:
        out = pl.pallas_call(
            _bn_gelu_kernel,
            grid=(n,),
            in_specs=[per_img((cout, lpad)), full((cout, 1)), full((cout, 1))],
            out_specs=per_img((cout, lpad)),
            out_shape=jax.ShapeDtypeStruct((n, cout, lpad), jnp.float32),
            compiler_params=cparams,
        )(z2, a2, c2)

    # Extract the interior; layout is already channel-major -> directly NCHW.
    out = out[:, :, :hp * wp].reshape(n, cout, hp, wp)[:, :, 1:h + 1, 1:w + 1]
    return out


# ----------------------------- params + reference -----------------------------
def init_params(key, in_channels, out_channels, z_channels):
    k = z_channels
    k1, k2, k3, k4 = jax.random.split(key, 4)
    b1 = 1.0 / (in_channels * k * k) ** 0.5
    b2 = 1.0 / (out_channels * k * k) ** 0.5
    return dict(
        w1=jax.random.uniform(k1, (out_channels, in_channels, k, k), jnp.float32, -b1, b1),
        b1=jax.random.uniform(k2, (out_channels,), jnp.float32, -b1, b1),
        g1=jnp.ones((out_channels,), jnp.float32),
        beta1=jnp.zeros((out_channels,), jnp.float32),
        w2=jax.random.uniform(k3, (out_channels, out_channels, k, k), jnp.float32, -b2, b2),
        b2=jax.random.uniform(k4, (out_channels,), jnp.float32, -b2, b2),
        g2=jnp.ones((out_channels,), jnp.float32),
        beta2=jnp.zeros((out_channels,), jnp.float32),
    )


def reference_forward(x, params, is_res=True):
    # Pure-JAX reference mirroring the PyTorch module
    # (conv with bias -> train-mode BN -> exact GELU), x2, residual, /1.414.
    def block(x, w, b, g, beta):
        y = lax.conv_general_dilated(
            x, w, (1, 1), ((1, 1), (1, 1)),
            dimension_numbers=("NCHW", "OIHW", "NCHW"),
            precision=lax.Precision.HIGHEST)
        y = y + b[None, :, None, None]
        mean = jnp.mean(y, axis=(0, 2, 3), keepdims=True)
        var = jnp.mean(jnp.square(y - mean), axis=(0, 2, 3), keepdims=True)
        y = (y - mean) * lax.rsqrt(var + BN_EPS) * g[None, :, None, None] + beta[None, :, None, None]
        return jax.nn.gelu(y, approximate=False)

    x1 = block(x, params["w1"], params["b1"], params["g1"], params["beta1"])
    x2 = block(x1, params["w2"], params["b2"], params["g2"], params["beta2"])
    if is_res:
        same = x.shape[1] == x2.shape[1]
        return ((x + x2) if same else (x1 + x2)) / 1.414
    return x2


# ----------------------------------- main ------------------------------------
if __name__ == "__main__":
    # ResidualConvBlock(in_channels=4, out_channels=4, z_channels=3, is_res=True)
    in_channels, out_channels, z_channels, is_res = 4, 4, 3, True
    key = jax.random.PRNGKey(0)
    kx, kp = jax.random.split(key)
    x = jax.random.normal(kx, (2, in_channels, 16, 16), jnp.float32)  # NCHW
    params = init_params(kp, in_channels, out_channels, z_channels)

    fwd = jax.jit(partial(residual_conv_block, is_res=is_res))
    out = jax.block_until_ready(fwd(x, params))

    ref = reference_forward(x, params, is_res=is_res)
    assert out.shape == ref.shape == (2, out_channels, 16, 16)
    max_err = float(jnp.max(jnp.abs(out - ref)))
    assert jnp.allclose(out, ref, atol=1e-4, rtol=1e-4), f"max_err={max_err}"

    print("KERNEL_OK")
</pallas_src>

<mosaic_0001>
module attributes {stable_mosaic.version = 11 : i64} {
  func.func @kernel(%arg0: i32, %arg1: memref<1x4x384xf32, #tpu.memory_space<vmem>>, %arg2: memref<4x36xf32, #tpu.memory_space<vmem>>, %arg3: memref<1x384xf32, #tpu.memory_space<vmem>>, %arg4: memref<1x4x384xf32, #tpu.memory_space<vmem>>, %arg5: memref<1x4x2xf32, #tpu.memory_space<vmem>>) attributes {dimension_semantics = [#tpu.dimension_semantics<parallel>], iteration_bounds = array<i64: 2>, scalar_prefetch = 0 : i64, scratch_operands = 0 : i64, tpu.core_type = #tpu.core_type<tc>, window_params = [{transform_indices = @transform_0, window_bounds = array<i64: 1, 4, 384>}, {pipeline_mode = #tpu.pipeline_mode<synchronous>, transform_indices = @transform_1, window_bounds = array<i64: 4, 36>}, {pipeline_mode = #tpu.pipeline_mode<synchronous>, transform_indices = @transform_2, window_bounds = array<i64: 1, 384>}, {transform_indices = @transform_3, window_bounds = array<i64: 1, 4, 384>}, {transform_indices = @transform_4, window_bounds = array<i64: 1, 4, 2>}]} {
    %c0 = arith.constant 0 : index
    %c0_0 = arith.constant 0 : index
    %0 = vector.load %arg3[%c0, %c0_0] : memref<1x384xf32, #tpu.memory_space<vmem>>, vector<1x384xf32>
    %c0_1 = arith.constant 0 : index
    %c0_2 = arith.constant 0 : index
    %c0_3 = arith.constant 0 : index
    %1 = vector.load %arg1[%c0_1, %c0_2, %c0_3] : memref<1x4x384xf32, #tpu.memory_space<vmem>>, vector<1x4x384xf32>
    %2 = vector.shape_cast %1 : vector<1x4x384xf32> to vector<4x384xf32>
    %cst = arith.constant 0.000000e+00 : f32
    %3 = vector.broadcast %cst : f32 to vector<4x384xf32>
    %4 = vector.extract_strided_slice %2 {offsets = [0, 365], sizes = [4, 19], strides = [1, 1]} : vector<4x384xf32> to vector<4x19xf32>
    %5 = vector.extract_strided_slice %2 {offsets = [0, 0], sizes = [4, 365], strides = [1, 1]} : vector<4x384xf32> to vector<4x365xf32>
    %6 = tpu.concatenate %4, %5 in 1 : vector<4x19xf32>, vector<4x365xf32> -> vector<4x384xf32>
    %c0_4 = arith.constant 0 : index
    %c0_5 = arith.constant 0 : index
    %7 = vector.load %arg2[%c0_4, %c0_5] : memref<4x36xf32, #tpu.memory_space<vmem>>, vector<4x1xf32>
    %8 = vector.extract_strided_slice %6 {offsets = [0, 0], sizes = [1, 384], strides = [1, 1]} : vector<4x384xf32> to vector<1x384xf32>
    %9 = vector.broadcast %7 : vector<4x1xf32> to vector<4x384xf32>
    %10 = vector.broadcast %8 : vector<1x384xf32> to vector<4x384xf32>
    %11 = arith.mulf %9, %10 : vector<4x384xf32>
    %12 = arith.addf %3, %11 : vector<4x384xf32>
    %c0_6 = arith.constant 0 : index
    %c1 = arith.constant 1 : index
    %13 = vector.load %arg2[%c0_6, %c1] : memref<4x36xf32, #tpu.memory_space<vmem>>, vector<4x1xf32>
    %14 = vector.extract_strided_slice %6 {offsets = [1, 0], sizes = [1, 384], strides = [1, 1]} : vector<4x384xf32> to vector<1x384xf32>
    %15 = vector.broadcast %13 : vector<4x1xf32> to vector<4x384xf32>
    %16 = vector.broadcast %14 : vector<1x384xf32> to vector<4x384xf32>
    %17 = arith.mulf %15, %16 : vector<4x384xf32>
    %18 = arith.addf %12, %17 : vector<4x384xf32>
    %c0_7 = arith.constant 0 : index
    %c2 = arith.constant 2 : index
    %19 = vector.load %arg2[%c0_7, %c2] : memref<4x36xf32, #tpu.memory_space<vmem>>, vector<4x1xf32>
    %20 = vector.extract_strided_slice %6 {offsets = [2, 0], sizes = [1, 384], strides = [1, 1]} : vector<4x384xf32> to vector<1x384xf32>
    %21 = vector.broadcast %19 : vector<4x1xf32> to vector<4x384xf32>
    %22 = vector.broadcast %20 : vector<1x384xf32> to vector<4x384xf32>
    %23 = arith.mulf %21, %22 : vector<4x384xf32>
    %24 = arith.addf %18, %23 : vector<4x384xf32>
    %c0_8 = arith.constant 0 : index
    %c3 = arith.constant 3 : index
    %25 = vector.load %arg2[%c0_8, %c3] : memref<4x36xf32, #tpu.memory_space<vmem>>, vector<4x1xf32>
    %26 = vector.extract_strided_slice %6 {offsets = [3, 0], sizes = [1, 384], strides = [1, 1]} : vector<4x384xf32> to vector<1x384xf32>
    %27 = vector.broadcast %25 : vector<4x1xf32> to vector<4x384xf32>
    %28 = vector.broadcast %26 : vector<1x384xf32> to vector<4x384xf32>
    %29 = arith.mulf %27, %28 : vector<4x384xf32>
    %30 = arith.addf %24, %29 : vector<4x384xf32>
    %31 = vector.extract_strided_slice %2 {offsets = [0, 366], sizes = [4, 18], strides = [1, 1]} : vector<4x384xf32> to vector<4x18xf32>
    %32 = vector.extract_strided_slice %2 {offsets = [0, 0], sizes = [4, 366], strides = [1, 1]} : vector<4x384xf32> to vector<4x366xf32>
    %33 = tpu.concatenate %31, %32 in 1 : vector<4x18xf32>, vector<4x366xf32> -> vector<4x384xf32>
    %c0_9 = arith.constant 0 : index
    %c4 = arith.constant 4 : index
    %34 = vector.load %arg2[%c0_9, %c4] : memref<4x36xf32, #tpu.memory_space<vmem>>, vector<4x1xf32>
    %35 = vector.extract_strided_slice %33 {offsets = [0, 0], sizes = [1, 384], strides = [1, 1]} : vector<4x384xf32> to vector<1x384xf32>
    %36 = vector.broadcast %34 : vector<4x1xf32> to vector<4x384xf32>
    %37 = vector.broadcast %35 : vector<1x384xf32> to vector<4x384xf32>
    %38 = arith.mulf %36, %37 : vector<4x384xf32>
    %39 = arith.addf %30, %38 : vector<4x384xf32>
    %c0_10 = arith.constant 0 : index
    %c5 = arith.constant 5 : index
    %40 = vector.load %arg2[%c0_10, %c5] : memref<4x36xf32, #tpu.memory_space<vmem>>, vector<4x1xf32>
    %41 = vector.extract_strided_slice %33 {offsets = [1, 0], sizes = [1, 384], strides = [1, 1]} : vector<4x384xf32> to vector<1x384xf32>
    %42 = vector.broadcast %40 : vector<4x1xf32> to vector<4x384xf32>
    %43 = vector.broadcast %41 : vector<1x384xf32> to vector<4x384xf32>
    %44 = arith.mulf %42, %43 : vector<4x384xf32>
    %45 = arith.addf %39, %44 : vector<4x384xf32>
    %c0_11 = arith.constant 0 : index
    %c6 = arith.constant 6 : index
    %46 = vector.load %arg2[%c0_11, %c6] : memref<4x36xf32, #tpu.memory_space<vmem>>, vector<4x1xf32>
    %47 = vector.extract_strided_slice %33 {offsets = [2, 0], sizes = [1, 384], strides = [1, 1]} : vector<4x384xf32> to vector<1x384xf32>
    %48 = vector.broadcast %46 : vector<4x1xf32> to vector<4x384xf32>
    %49 = vector.broadcast %47 : vector<1x384xf32> to vector<4x384xf32>
    %50 = arith.mulf %48, %49 : vector<4x384xf32>
    %51 = arith.addf %45, %50 : vector<4x384xf32>
    %c0_12 = arith.constant 0 : index
    %c7 = arith.constant 7 : index
    %52 = vector.load %arg2[%c0_12, %c7] : memref<4x36xf32, #tpu.memory_space<vmem>>, vector<4x1xf32>
    %53 = vector.extract_strided_slice %33 {offsets = [3, 0], sizes = [1, 384], strides = [1, 1]} : vector<4x384xf32> to vector<1x384xf32>
    %54 = vector.broadcast %52 : vector<4x1xf32> to vector<4x384xf32>
    %55 = vector.broadcast %53 : vector<1x384xf32> to vector<4x384xf32>
    %56 = arith.mulf %54, %55 : vector<4x384xf32>
    %57 = arith.addf %51, %56 : vector<4x384xf32>
    %58 = vector.extract_strided_slice %2 {offsets = [0, 367], sizes = [4, 17], strides = [1, 1]} : vector<4x384xf32> to vector<4x17xf32>
    %59 = vector.extract_strided_slice %2 {offsets = [0, 0], sizes = [4, 367], strides = [1, 1]} : vector<4x384xf32> to vector<4x367xf32>
    %60 = tpu.concatenate %58, %59 in 1 : vector<4x17xf32>, vector<4x367xf32> -> vector<4x384xf32>
    %c0_13 = arith.constant 0 : index
    %c8 = arith.constant 8 : index
    %61 = vector.load %arg2[%c0_13, %c8] : memref<4x36xf32, #tpu.memory_space<vmem>>, vector<4x1xf32>
    %62 = vector.extract_strided_slice %60 {offsets = [0, 0], sizes = [1, 384], strides = [1, 1]} : vector<4x384xf32> to vector<1x384xf32>
    %63 = vector.broadcast %61 : vector<4x1xf32> to vector<4x384xf32>
    %64 = vector.broadcast %62 : vector<1x384xf32> to vector<4x384xf32>
    %65 = arith.mulf %63, %64 : vector<4x384xf32>
    %66 = arith.addf %57, %65 : vector<4x384xf32>
    %c0_14 = arith.constant 0 : index
    %c9 = arith.constant 9 : index
    %67 = vector.load %arg2[%c0_14, %c9] : memref<4x36xf32, #tpu.memory_space<vmem>>, vector<4x1xf32>
    %68 = vector.extract_strided_slice %60 {offsets = [1, 0], sizes = [1, 384], strides = [1, 1]} : vector<4x384xf32> to vector<1x384xf32>
    %69 = vector.broadcast %67 : vector<4x1xf32> to vector<4x384xf32>
    %70 = vector.broadcast %68 : vector<1x384xf32> to vector<4x384xf32>
    %71 = arith.mulf %69, %70 : vector<4x384xf32>
    %72 = arith.addf %66, %71 : vector<4x384xf32>
    %c0_15 = arith.constant 0 : index
    %c10 = arith.constant 10 : index
    %73 = vector.load %arg2[%c0_15, %c10] : memref<4x36xf32, #tpu.memory_space<vmem>>, vector<4x1xf32>
    %74 = vector.extract_strided_slice %60 {offsets = [2, 0], sizes = [1, 384], strides = [1, 1]} : vector<4x384xf32> to vector<1x384xf32>
    %75 = vector.broadcast %73 : vector<4x1xf32> to vector<4x384xf32>
    %76 = vector.broadcast %74 : vector<1x384xf32> to vector<4x384xf32>
    %77 = arith.mulf %75, %76 : vector<4x384xf32>
    %78 = arith.addf %72, %77 : vector<4x384xf32>
    %c0_16 = arith.constant 0 : index
    %c11 = arith.constant 11 : index
    %79 = vector.load %arg2[%c0_16, %c11] : memref<4x36xf32, #tpu.memory_space<vmem>>, vector<4x1xf32>
    %80 = vector.extract_strided_slice %60 {offsets = [3, 0], sizes = [1, 384], strides = [1, 1]} : vector<4x384xf32> to vector<1x384xf32>
    %81 = vector.broadcast %79 : vector<4x1xf32> to vector<4x384xf32>
    %82 = vector.broadcast %80 : vector<1x384xf32> to vector<4x384xf32>
    %83 = arith.mulf %81, %82 : vector<4x384xf32>
    %84 = arith.addf %78, %83 : vector<4x384xf32>
    %85 = vector.extract_strided_slice %2 {offsets = [0, 383], sizes = [4, 1], strides = [1, 1]} : vector<4x384xf32> to vector<4x1xf32>
    %86 = vector.extract_strided_slice %2 {offsets = [0, 0], sizes = [4, 383], strides = [1, 1]} : vector<4x384xf32> to vector<4x383xf32>
    %87 = tpu.concatenate %85, %86 in 1 : vector<4x1xf32>, vector<4x383xf32> -> vector<4x384xf32>
    %c0_17 = arith.constant 0 : index
    %c12 = arith.constant 12 : index
    %88 = vector.load %arg2[%c0_17, %c12] : memref<4x36xf32, #tpu.memory_space<vmem>>, vector<4x1xf32>
    %89 = vector.extract_strided_slice %87 {offsets = [0, 0], sizes = [1, 384], strides = [1, 1]} : vector<4x384xf32> to vector<1x384xf32>
    %90 = vector.broadcast %88 : vector<4x1xf32> to vector<4x384xf32>
    %91 = vector.broadcast %89 : vector<1x384xf32> to vector<4x384xf32>
    %92 = arith.mulf %90, %91 : vector<4x384xf32>
    %93 = arith.addf %84, %92 : vector<4x384xf32>
    %c0_18 = arith.constant 0 : index
    %c13 = arith.constant 13 : index
    %94 = vector.load %arg2[%c0_18, %c13] : memref<4x36xf32, #tpu.memory_space<vmem>>, vector<4x1xf32>
    %95 = vector.extract_strided_slice %87 {offsets = [1, 0], sizes = [1, 384], strides = [1, 1]} : vector<4x384xf32> to vector<1x384xf32>
    %96 = vector.broadcast %94 : vector<4x1xf32> to vector<4x384xf32>
    %97 = vector.broadcast %95 : vector<1x384xf32> to vector<4x384xf32>
    %98 = arith.mulf %96, %97 : vector<4x384xf32>
    %99 = arith.addf %93, %98 : vector<4x384xf32>
    %c0_19 = arith.constant 0 : index
    %c14 = arith.constant 14 : index
    %100 = vector.load %arg2[%c0_19, %c14] : memref<4x36xf32, #tpu.memory_space<vmem>>, vector<4x1xf32>
    %101 = vector.extract_strided_slice %87 {offsets = [2, 0], sizes = [1, 384], strides = [1, 1]} : vector<4x384xf32> to vector<1x384xf32>
    %102 = vector.broadcast %100 : vector<4x1xf32> to vector<4x384xf32>
    %103 = vector.broadcast %101 : vector<1x384xf32> to vector<4x384xf32>
    %104 = arith.mulf %102, %103 : vector<4x384xf32>
    %105 = arith.addf %99, %104 : vector<4x384xf32>
    %c0_20 = arith.constant 0 : index
    %c15 = arith.constant 15 : index
    %106 = vector.load %arg2[%c0_20, %c15] : memref<4x36xf32, #tpu.memory_space<vmem>>, vector<4x1xf32>
    %107 = vector.extract_strided_slice %87 {offsets = [3, 0], sizes = [1, 384], strides = [1, 1]} : vector<4x384xf32> to vector<1x384xf32>
    %108 = vector.broadcast %106 : vector<4x1xf32> to vector<4x384xf32>
    %109 = vector.broadcast %107 : vector<1x384xf32> to vector<4x384xf32>
    %110 = arith.mulf %108, %109 : vector<4x384xf32>
    %111 = arith.addf %105, %110 : vector<4x384xf32>
    %c0_21 = arith.constant 0 : index
    %c16 = arith.constant 16 : index
    %112 = vector.load %arg2[%c0_21, %c16] : memref<4x36xf32, #tpu.memory_space<vmem>>, vector<4x1xf32>
    %113 = vector.extract_strided_slice %2 {offsets = [0, 0], sizes = [1, 384], strides = [1, 1]} : vector<4x384xf32> to vector<1x384xf32>
    %114 = vector.broadcast %112 : vector<4x1xf32> to vector<4x384xf32>
    %115 = vector.broadcast %113 : vector<1x384xf32> to vector<4x384xf32>
    %116 = arith.mulf %114, %115 : vector<4x384xf32>
    %117 = arith.addf %111, %116 : vector<4x384xf32>
    %c0_22 = arith.constant 0 : index
    %c17 = arith.constant 17 : index
    %118 = vector.load %arg2[%c0_22, %c17] : memref<4x36xf32, #tpu.memory_space<vmem>>, vector<4x1xf32>
    %119 = vector.extract_strided_slice %2 {offsets = [1, 0], sizes = [1, 384], strides = [1, 1]} : vector<4x384xf32> to vector<1x384xf32>
    %120 = vector.broadcast %118 : vector<4x1xf32> to vector<4x384xf32>
    %121 = vector.broadcast %119 : vector<1x384xf32> to vector<4x384xf32>
    %122 = arith.mulf %120, %121 : vector<4x384xf32>
    %123 = arith.addf %117, %122 : vector<4x384xf32>
    %c0_23 = arith.constant 0 : index
    %c18 = arith.constant 18 : index
    %124 = vector.load %arg2[%c0_23, %c18] : memref<4x36xf32, #tpu.memory_space<vmem>>, vector<4x1xf32>
    %125 = vector.extract_strided_slice %2 {offsets = [2, 0], sizes = [1, 384], strides = [1, 1]} : vector<4x384xf32> to vector<1x384xf32>
    %126 = vector.broadcast %124 : vector<4x1xf32> to vector<4x384xf32>
    %127 = vector.broadcast %125 : vector<1x384xf32> to vector<4x384xf32>
    %128 = arith.mulf %126, %127 : vector<4x384xf32>
    %129 = arith.addf %123, %128 : vector<4x384xf32>
    %c0_24 = arith.constant 0 : index
    %c19 = arith.constant 19 : index
    %130 = vector.load %arg2[%c0_24, %c19] : memref<4x36xf32, #tpu.memory_space<vmem>>, vector<4x1xf32>
    %131 = vector.extract_strided_slice %2 {offsets = [3, 0], sizes = [1, 384], strides = [1, 1]} : vector<4x384xf32> to vector<1x384xf32>
    %132 = vector.broadcast %130 : vector<4x1xf32> to vector<4x384xf32>
    %133 = vector.broadcast %131 : vector<1x384xf32> to vector<4x384xf32>
    %134 = arith.mulf %132, %133 : vector<4x384xf32>
    %135 = arith.addf %129, %134 : vector<4x384xf32>
    %136 = vector.extract_strided_slice %2 {offsets = [0, 1], sizes = [4, 383], strides = [1, 1]} : vector<4x384xf32> to vector<4x383xf32>
    %137 = vector.extract_strided_slice %2 {offsets = [0, 0], sizes = [4, 1], strides = [1, 1]} : vector<4x384xf32> to vector<4x1xf32>
    %138 = tpu.concatenate %136, %137 in 1 : vector<4x383xf32>, vector<4x1xf32> -> vector<4x384xf32>
    %c0_25 = arith.constant 0 : index
    %c20 = arith.constant 20 : index
    %139 = vector.load %arg2[%c0_25, %c20] : memref<4x36xf32, #tpu.memory_space<vmem>>, vector<4x1xf32>
    %140 = vector.extract_strided_slice %138 {offsets = [0, 0], sizes = [1, 384], strides = [1, 1]} : vector<4x384xf32> to vector<1x384xf32>
    %141 = vector.broadcast %139 : vector<4x1xf32> to vector<4x384xf32>
    %142 = vector.broadcast %140 : vector<1x384xf32> to vector<4x384xf32>
    %143 = arith.mulf %141, %142 : vector<4x384xf32>
    %144 = arith.addf %135, %143 : vector<4x384xf32>
    %c0_26 = arith.constant 0 : index
    %c21 = arith.constant 21 : index
    %145 = vector.load %arg2[%c0_26, %c21] : memref<4x36xf32, #tpu.memory_space<vmem>>, vector<4x1xf32>
    %146 = vector.extract_strided_slice %138 {offsets = [1, 0], sizes = [1, 384], strides = [1, 1]} : vector<4x384xf32> to vector<1x384xf32>
    %147 = vector.broadcast %145 : vector<4x1xf32> to vector<4x384xf32>
    %148 = vector.broadcast %146 : vector<1x384xf32> to vector<4x384xf32>
    %149 = arith.mulf %147, %148 : vector<4x384xf32>
    %150 = arith.addf %144, %149 : vector<4x384xf32>
    %c0_27 = arith.constant 0 : index
    %c22 = arith.constant 22 : index
    %151 = vector.load %arg2[%c0_27, %c22] : memref<4x36xf32, #tpu.memory_space<vmem>>, vector<4x1xf32>
    %152 = vector.extract_strided_slice %138 {offsets = [2, 0], sizes = [1, 384], strides = [1, 1]} : vector<4x384xf32> to vector<1x384xf32>
    %153 = vector.broadcast %151 : vector<4x1xf32> to vector<4x384xf32>
    %154 = vector.broadcast %152 : vector<1x384xf32> to vector<4x384xf32>
    %155 = arith.mulf %153, %154 : vector<4x384xf32>
    %156 = arith.addf %150, %155 : vector<4x384xf32>
    %c0_28 = arith.constant 0 : index
    %c23 = arith.constant 23 : index
    %157 = vector.load %arg2[%c0_28, %c23] : memref<4x36xf32, #tpu.memory_space<vmem>>, vector<4x1xf32>
    %158 = vector.extract_strided_slice %138 {offsets = [3, 0], sizes = [1, 384], strides = [1, 1]} : vector<4x384xf32> to vector<1x384xf32>
    %159 = vector.broadcast %157 : vector<4x1xf32> to vector<4x384xf32>
    %160 = vector.broadcast %158 : vector<1x384xf32> to vector<4x384xf32>
    %161 = arith.mulf %159, %160 : vector<4x384xf32>
    %162 = arith.addf %156, %161 : vector<4x384xf32>
    %163 = vector.extract_strided_slice %2 {offsets = [0, 17], sizes = [4, 367], strides = [1, 1]} : vector<4x384xf32> to vector<4x367xf32>
    %164 = vector.extract_strided_slice %2 {offsets = [0, 0], sizes = [4, 17], strides = [1, 1]} : vector<4x384xf32> to vector<4x17xf32>
    %165 = tpu.concatenate %163, %164 in 1 : vector<4x367xf32>, vector<4x17xf32> -> vector<4x384xf32>
    %c0_29 = arith.constant 0 : index
    %c24 = arith.constant 24 : index
    %166 = vector.load %arg2[%c0_29, %c24] : memref<4x36xf32, #tpu.memory_space<vmem>>, vector<4x1xf32>
    %167 = vector.extract_strided_slice %165 {offsets = [0, 0], sizes = [1, 384], strides = [1, 1]} : vector<4x384xf32> to vector<1x384xf32>
    %168 = vector.broadcast %166 : vector<4x1xf32> to vector<4x384xf32>
    %169 = vector.broadcast %167 : vector<1x384xf32> to vector<4x384xf32>
    %170 = arith.mulf %168, %169 : vector<4x384xf32>
    %171 = arith.addf %162, %170 : vector<4x384xf32>
    %c0_30 = arith.constant 0 : index
    %c25 = arith.constant 25 : index
    %172 = vector.load %arg2[%c0_30, %c25] : memref<4x36xf32, #tpu.memory_space<vmem>>, vector<4x1xf32>
    %173 = vector.extract_strided_slice %165 {offsets = [1, 0], sizes = [1, 384], strides = [1, 1]} : vector<4x384xf32> to vector<1x384xf32>
    %174 = vector.broadcast %172 : vector<4x1xf32> to vector<4x384xf32>
    %175 = vector.broadcast %173 : vector<1x384xf32> to vector<4x384xf32>
    %176 = arith.mulf %174, %175 : vector<4x384xf32>
    %177 = arith.addf %171, %176 : vector<4x384xf32>
    %c0_31 = arith.constant 0 : index
    %c26 = arith.constant 26 : index
    %178 = vector.load %arg2[%c0_31, %c26] : memref<4x36xf32, #tpu.memory_space<vmem>>, vector<4x1xf32>
    %179 = vector.extract_strided_slice %165 {offsets = [2, 0], sizes = [1, 384], strides = [1, 1]} : vector<4x384xf32> to vector<1x384xf32>
    %180 = vector.broadcast %178 : vector<4x1xf32> to vector<4x384xf32>
    %181 = vector.broadcast %179 : vector<1x384xf32> to vector<4x384xf32>
    %182 = arith.mulf %180, %181 : vector<4x384xf32>
    %183 = arith.addf %177, %182 : vector<4x384xf32>
    %c0_32 = arith.constant 0 : index
    %c27 = arith.constant 27 : index
    %184 = vector.load %arg2[%c0_32, %c27] : memref<4x36xf32, #tpu.memory_space<vmem>>, vector<4x1xf32>
    %185 = vector.extract_strided_slice %165 {offsets = [3, 0], sizes = [1, 384], strides = [1, 1]} : vector<4x384xf32> to vector<1x384xf32>
    %186 = vector.broadcast %184 : vector<4x1xf32> to vector<4x384xf32>
    %187 = vector.broadcast %185 : vector<1x384xf32> to vector<4x384xf32>
    %188 = arith.mulf %186, %187 : vector<4x384xf32>
    %189 = arith.addf %183, %188 : vector<4x384xf32>
    %190 = vector.extract_strided_slice %2 {offsets = [0, 18], sizes = [4, 366], strides = [1, 1]} : vector<4x384xf32> to vector<4x366xf32>
    %191 = vector.extract_strided_slice %2 {offsets = [0, 0], sizes = [4, 18], strides = [1, 1]} : vector<4x384xf32> to vector<4x18xf32>
    %192 = tpu.concatenate %190, %191 in 1 : vector<4x366xf32>, vector<4x18xf32> -> vector<4x384xf32>
    %c0_33 = arith.constant 0 : index
    %c28 = arith.constant 28 : index
    %193 = vector.load %arg2[%c0_33, %c28] : memref<4x36xf32, #tpu.memory_space<vmem>>, vector<4x1xf32>
    %194 = vector.extract_strided_slice %192 {offsets = [0, 0], sizes = [1, 384], strides = [1, 1]} : vector<4x384xf32> to vector<1x384xf32>
    %195 = vector.broadcast %193 : vector<4x1xf32> to vector<4x384xf32>
    %196 = vector.broadcast %194 : vector<1x384xf32> to vector<4x384xf32>
    %197 = arith.mulf %195, %196 : vector<4x384xf32>
    %198 = arith.addf %189, %197 : vector<4x384xf32>
    %c0_34 = arith.constant 0 : index
    %c29 = arith.constant 29 : index
    %199 = vector.load %arg2[%c0_34, %c29] : memref<4x36xf32, #tpu.memory_space<vmem>>, vector<4x1xf32>
    %200 = vector.extract_strided_slice %192 {offsets = [1, 0], sizes = [1, 384], strides = [1, 1]} : vector<4x384xf32> to vector<1x384xf32>
    %201 = vector.broadcast %199 : vector<4x1xf32> to vector<4x384xf32>
    %202 = vector.broadcast %200 : vector<1x384xf32> to vector<4x384xf32>
    %203 = arith.mulf %201, %202 : vector<4x384xf32>
    %204 = arith.addf %198, %203 : vector<4x384xf32>
    %c0_35 = arith.constant 0 : index
    %c30 = arith.constant 30 : index
    %205 = vector.load %arg2[%c0_35, %c30] : memref<4x36xf32, #tpu.memory_space<vmem>>, vector<4x1xf32>
    %206 = vector.extract_strided_slice %192 {offsets = [2, 0], sizes = [1, 384], strides = [1, 1]} : vector<4x384xf32> to vector<1x384xf32>
    %207 = vector.broadcast %205 : vector<4x1xf32> to vector<4x384xf32>
    %208 = vector.broadcast %206 : vector<1x384xf32> to vector<4x384xf32>
    %209 = arith.mulf %207, %208 : vector<4x384xf32>
    %210 = arith.addf %204, %209 : vector<4x384xf32>
    %c0_36 = arith.constant 0 : index
    %c31 = arith.constant 31 : index
    %211 = vector.load %arg2[%c0_36, %c31] : memref<4x36xf32, #tpu.memory_space<vmem>>, vector<4x1xf32>
    %212 = vector.extract_strided_slice %192 {offsets = [3, 0], sizes = [1, 384], strides = [1, 1]} : vector<4x384xf32> to vector<1x384xf32>
    %213 = vector.broadcast %211 : vector<4x1xf32> to vector<4x384xf32>
    %214 = vector.broadcast %212 : vector<1x384xf32> to vector<4x384xf32>
    %215 = arith.mulf %213, %214 : vector<4x384xf32>
    %216 = arith.addf %210, %215 : vector<4x384xf32>
    %217 = vector.extract_strided_slice %2 {offsets = [0, 19], sizes = [4, 365], strides = [1, 1]} : vector<4x384xf32> to vector<4x365xf32>
    %218 = vector.extract_strided_slice %2 {offsets = [0, 0], sizes = [4, 19], strides = [1, 1]} : vector<4x384xf32> to vector<4x19xf32>
    %219 = tpu.concatenate %217, %218 in 1 : vector<4x365xf32>, vector<4x19xf32> -> vector<4x384xf32>
    %c0_37 = arith.constant 0 : index
    %c32 = arith.constant 32 : index
    %220 = vector.load %arg2[%c0_37, %c32] : memref<4x36xf32, #tpu.memory_space<vmem>>, vector<4x1xf32>
    %221 = vector.extract_strided_slice %219 {offsets = [0, 0], sizes = [1, 384], strides = [1, 1]} : vector<4x384xf32> to vector<1x384xf32>
    %222 = vector.broadcast %220 : vector<4x1xf32> to vector<4x384xf32>
    %223 = vector.broadcast %221 : vector<1x384xf32> to vector<4x384xf32>
    %224 = arith.mulf %222, %223 : vector<4x384xf32>
    %225 = arith.addf %216, %224 : vector<4x384xf32>
    %c0_38 = arith.constant 0 : index
    %c33 = arith.constant 33 : index
    %226 = vector.load %arg2[%c0_38, %c33] : memref<4x36xf32, #tpu.memory_space<vmem>>, vector<4x1xf32>
    %227 = vector.extract_strided_slice %219 {offsets = [1, 0], sizes = [1, 384], strides = [1, 1]} : vector<4x384xf32> to vector<1x384xf32>
    %228 = vector.broadcast %226 : vector<4x1xf32> to vector<4x384xf32>
    %229 = vector.broadcast %227 : vector<1x384xf32> to vector<4x384xf32>
    %230 = arith.mulf %228, %229 : vector<4x384xf32>
    %231 = arith.addf %225, %230 : vector<4x384xf32>
    %c0_39 = arith.constant 0 : index
    %c34 = arith.constant 34 : index
    %232 = vector.load %arg2[%c0_39, %c34] : memref<4x36xf32, #tpu.memory_space<vmem>>, vector<4x1xf32>
    %233 = vector.extract_strided_slice %219 {offsets = [2, 0], sizes = [1, 384], strides = [1, 1]} : vector<4x384xf32> to vector<1x384xf32>
    %234 = vector.broadcast %232 : vector<4x1xf32> to vector<4x384xf32>
    %235 = vector.broadcast %233 : vector<1x384xf32> to vector<4x384xf32>
    %236 = arith.mulf %234, %235 : vector<4x384xf32>
    %237 = arith.addf %231, %236 : vector<4x384xf32>
    %c0_40 = arith.constant 0 : index
    %c35 = arith.constant 35 : index
    %238 = vector.load %arg2[%c0_40, %c35] : memref<4x36xf32, #tpu.memory_space<vmem>>, vector<4x1xf32>
    %239 = vector.extract_strided_slice %219 {offsets = [3, 0], sizes = [1, 384], strides = [1, 1]} : vector<4x384xf32> to vector<1x384xf32>
    %240 = vector.broadcast %238 : vector<4x1xf32> to vector<4x384xf32>
    %241 = vector.broadcast %239 : vector<1x384xf32> to vector<4x384xf32>
    %242 = arith.mulf %240, %241 : vector<4x384xf32>
    %243 = arith.addf %237, %242 : vector<4x384xf32>
    %244 = vector.broadcast %0 : vector<1x384xf32> to vector<4x384xf32>
    %245 = arith.mulf %243, %244 : vector<4x384xf32>
    %c0_41 = arith.constant 0 : index
    %c0_42 = arith.constant 0 : index
    %c0_43 = arith.constant 0 : index
    %246 = vector.load %arg4[%c0_41, %c0_42, %c0_43] : memref<1x4x384xf32, #tpu.memory_space<vmem>>, vector<1x4x384xf32>
    %247 = vector.shape_cast %246 : vector<1x4x384xf32> to vector<4x384xf32>
    %248 = vector.shape_cast %245 : vector<4x384xf32> to vector<1x4x384xf32>
    tpu.vector_store %arg4[%c0_41, %c0_42, %c0_43], %248 {strides = array<i32>} : memref<1x4x384xf32, #tpu.memory_space<vmem>>, vector<1x4x384xf32>,
    %cst_44 = arith.constant dense<0.000000e+00> : vector<4xf32>
    %249 = vector.multi_reduction <add>, %245, %cst_44 [1] : vector<4x384xf32> to vector<4xf32>
    %250 = vector.shape_cast %249 : vector<4xf32> to vector<4x1xf32>
    %cst_45 = arith.constant 3.906250e-03 : f32
    %251 = vector.broadcast %cst_45 : f32 to vector<4x1xf32>
    %252 = arith.mulf %250, %251 : vector<4x1xf32>
    %253 = vector.broadcast %252 : vector<4x1xf32> to vector<4x384xf32>
    %254 = arith.subf %245, %253 : vector<4x384xf32>
    %255 = vector.broadcast %0 : vector<1x384xf32> to vector<4x384xf32>
    %256 = arith.mulf %254, %255 : vector<4x384xf32>
    %257 = arith.mulf %256, %256 : vector<4x384xf32>
    %cst_46 = arith.constant dense<0.000000e+00> : vector<4xf32>
    %258 = vector.multi_reduction <add>, %257, %cst_46 [1] : vector<4x384xf32> to vector<4xf32>
    %259 = vector.shape_cast %258 : vector<4xf32> to vector<4x1xf32>
    %260 = tpu.concatenate %250, %259 in 1 : vector<4x1xf32>, vector<4x1xf32> -> vector<4x2xf32>
    %c0_47 = arith.constant 0 : index
    %c0_48 = arith.constant 0 : index
    %c0_49 = arith.constant 0 : index
    %261 = vector.load %arg5[%c0_47, %c0_48, %c0_49] : memref<1x4x2xf32, #tpu.memory_space<vmem>>, vector<1x4x2xf32>
    %262 = vector.shape_cast %261 : vector<1x4x2xf32> to vector<4x2xf32>
    %263 = vector.shape_cast %260 : vector<4x2xf32> to vector<1x4x2xf32>
    tpu.vector_store %arg5[%c0_47, %c0_48, %c0_49], %263 {strides = array<i32>} : memref<1x4x2xf32, #tpu.memory_space<vmem>>, vector<1x4x2xf32>,
    return
  }
  func.func @transform_0(%arg0: i32) -> (i32, i32, i32) {
    %c0_i32 = arith.constant 0 : i32
    %c0_i32_0 = arith.constant 0 : i32
    %c0_i32_1 = arith.constant 0 : i32
    return %arg0, %c0_i32, %c0_i32_0 : i32, i32, i32
  }
  func.func @transform_1(%arg0: i32) -> (i32, i32) {
    %c0_i32 = arith.constant 0 : i32
    %c0_i32_0 = arith.constant 0 : i32
    %c0_i32_1 = arith.constant 0 : i32
    return %c0_i32, %c0_i32_0 : i32, i32
  }
  func.func @transform_2(%arg0: i32) -> (i32, i32) {
    %c0_i32 = arith.constant 0 : i32
    %c0_i32_0 = arith.constant 0 : i32
    %c0_i32_1 = arith.constant 0 : i32
    return %c0_i32, %c0_i32_0 : i32, i32
  }
  func.func @transform_3(%arg0: i32) -> (i32, i32, i32) {
    %c0_i32 = arith.constant 0 : i32
    %c0_i32_0 = arith.constant 0 : i32
    %c0_i32_1 = arith.constant 0 : i32
    return %arg0, %c0_i32, %c0_i32_0 : i32, i32, i32
  }
  func.func @transform_4(%arg0: i32) -> (i32, i32, i32) {
    %c0_i32 = arith.constant 0 : i32
    %c0_i32_0 = arith.constant 0 : i32
    %c0_i32_1 = arith.constant 0 : i32
    return %arg0, %c0_i32, %c0_i32_0 : i32, i32, i32
  }
}

module attributes {stable_mosaic.version = 11 : i64} {
  func.func @_bn_gelu_res_kernel(%arg0: i32, %arg1: memref<1x4x384xf32, #tpu.memory_space<vmem>>, %arg2: memref<4x1xf32, #tpu.memory_space<vmem>>, %arg3: memref<4x1xf32, #tpu.memory_space<vmem>>, %arg4: memref<1x4x384xf32, #tpu.memory_space<vmem>>, %arg5: memref<1x4x384xf32, #tpu.memory_space<vmem>>) attributes {dimension_semantics = [#tpu.dimension_semantics<parallel>], iteration_bounds = array<i64: 2>, scalar_prefetch = 0 : i64, scratch_operands = 0 : i64, tpu.core_type = #tpu.core_type<tc>, window_params = [{transform_indices = @transform_0, window_bounds = array<i64: 1, 4, 384>}, {pipeline_mode = #tpu.pipeline_mode<synchronous>, transform_indices = @transform_1, window_bounds = array<i64: 4, 1>}, {pipeline_mode = #tpu.pipeline_mode<synchronous>, transform_indices = @transform_2, window_bounds = array<i64: 4, 1>}, {transform_indices = @transform_3, window_bounds = array<i64: 1, 4, 384>}, {transform_indices = @transform_4, window_bounds = array<i64: 1, 4, 384>}]} {
    %c0 = arith.constant 0 : index
    %c0_0 = arith.constant 0 : index
    %c0_1 = arith.constant 0 : index
    %0 = vector.load %arg4[%c0, %c0_0, %c0_1] : memref<1x4x384xf32, #tpu.memory_space<vmem>>, vector<1x4x384xf32>
    %1 = vector.shape_cast %0 : vector<1x4x384xf32> to vector<4x384xf32>
    %c0_2 = arith.constant 0 : index
    %c0_3 = arith.constant 0 : index
    %c0_4 = arith.constant 0 : index
    %2 = vector.load %arg1[%c0_2, %c0_3, %c0_4] : memref<1x4x384xf32, #tpu.memory_space<vmem>>, vector<1x4x384xf32>
    %3 = vector.shape_cast %2 : vector<1x4x384xf32> to vector<4x384xf32>
    %c0_5 = arith.constant 0 : index
    %c0_6 = arith.constant 0 : index
    %4 = vector.load %arg2[%c0_5, %c0_6] : memref<4x1xf32, #tpu.memory_space<vmem>>, vector<4x1xf32>
    %5 = vector.broadcast %4 : vector<4x1xf32> to vector<4x384xf32>
    %6 = arith.mulf %3, %5 : vector<4x384xf32>
    %c0_7 = arith.constant 0 : index
    %c0_8 = arith.constant 0 : index
    %7 = vector.load %arg3[%c0_7, %c0_8] : memref<4x1xf32, #tpu.memory_space<vmem>>, vector<4x1xf32>
    %8 = vector.broadcast %7 : vector<4x1xf32> to vector<4x384xf32>
    %9 = arith.addf %6, %8 : vector<4x384xf32>
    %cst = arith.constant 5.000000e-01 : f32
    %10 = vector.broadcast %cst : f32 to vector<4x384xf32>
    %11 = arith.mulf %10, %9 : vector<4x384xf32>
    %cst_9 = arith.constant 0.707106769 : f32
    %12 = vector.broadcast %cst_9 : f32 to vector<4x384xf32>
    %13 = arith.mulf %9, %12 : vector<4x384xf32>
    %cst_10 = arith.constant 0.000000e+00 : f32
    %14 = vector.broadcast %cst_10 : f32 to vector<4x384xf32>
    %15 = arith.cmpf oge, %13, %14 : vector<4x384xf32>
    %cst_11 = arith.constant 1.000000e+00 : f32
    %cst_12 = arith.constant -1.000000e+00 : f32
    %16 = vector.broadcast %cst_11 : f32 to vector<4x384xf32>
    %17 = vector.broadcast %cst_12 : f32 to vector<4x384xf32>
    %18 = arith.select %15, %16, %17 : vector<4x384xi1>, vector<4x384xf32>
    %19 = math.absf %13 : vector<4x384xf32>
    %cst_13 = arith.constant 0.327591091 : f32
    %20 = vector.broadcast %cst_13 : f32 to vector<4x384xf32>
    %21 = arith.mulf %20, %19 : vector<4x384xf32>
    %cst_14 = arith.constant 1.000000e+00 : f32
    %22 = vector.broadcast %cst_14 : f32 to vector<4x384xf32>
    %23 = arith.addf %22, %21 : vector<4x384xf32>
    %cst_15 = arith.constant 1.000000e+00 : f32
    %24 = vector.broadcast %cst_15 : f32 to vector<4x384xf32>
    %25 = arith.divf %24, %23 : vector<4x384xf32>
    %cst_16 = arith.constant 1.06140542 : f32
    %26 = vector.broadcast %cst_16 : f32 to vector<4x384xf32>
    %27 = arith.mulf %26, %25 : vector<4x384xf32>
    %cst_17 = arith.constant -1.45315206 : f32
    %28 = vector.broadcast %cst_17 : f32 to vector<4x384xf32>
    %29 = arith.addf %27, %28 : vector<4x384xf32>
    %30 = arith.mulf %29, %25 : vector<4x384xf32>
    %cst_18 = arith.constant 1.42141378 : f32
    %31 = vector.broadcast %cst_18 : f32 to vector<4x384xf32>
    %32 = arith.addf %30, %31 : vector<4x384xf32>
    %33 = arith.mulf %32, %25 : vector<4x384xf32>
    %cst_19 = arith.constant -0.284496725 : f32
    %34 = vector.broadcast %cst_19 : f32 to vector<4x384xf32>
    %35 = arith.addf %33, %34 : vector<4x384xf32>
    %36 = arith.mulf %35, %25 : vector<4x384xf32>
    %cst_20 = arith.constant 0.254829586 : f32
    %37 = vector.broadcast %cst_20 : f32 to vector<4x384xf32>
    %38 = arith.addf %36, %37 : vector<4x384xf32>
    %39 = arith.mulf %38, %25 : vector<4x384xf32>
    %cst_21 = arith.constant 0.000000e+00 : f32
    %40 = vector.broadcast %cst_21 : f32 to vector<4x384xf32>
    %41 = arith.subf %40, %19 : vector<4x384xf32>
    %42 = arith.mulf %41, %19 : vector<4x384xf32>
    %43 = math.exp %42 : vector<4x384xf32>
    %44 = arith.mulf %39, %43 : vector<4x384xf32>
    %cst_22 = arith.constant 1.000000e+00 : f32
    %45 = vector.broadcast %cst_22 : f32 to vector<4x384xf32>
    %46 = arith.subf %45, %44 : vector<4x384xf32>
    %47 = arith.mulf %18, %46 : vector<4x384xf32>
    %cst_23 = arith.constant 1.000000e+00 : f32
    %48 = vector.broadcast %cst_23 : f32 to vector<4x384xf32>
    %49 = arith.addf %48, %47 : vector<4x384xf32>
    %50 = arith.mulf %11, %49 : vector<4x384xf32>
    %51 = arith.addf %1, %50 : vector<4x384xf32>
    %cst_24 = arith.constant 0.70721358 : f32
    %52 = vector.broadcast %cst_24 : f32 to vector<4x384xf32>
    %53 = arith.mulf %51, %52 : vector<4x384xf32>
    %c0_25 = arith.constant 0 : index
    %c0_26 = arith.constant 0 : index
    %c0_27 = arith.constant 0 : index
    %54 = vector.load %arg5[%c0_25, %c0_26, %c0_27] : memref<1x4x384xf32, #tpu.memory_space<vmem>>, vector<1x4x384xf32>
    %55 = vector.shape_cast %54 : vector<1x4x384xf32> to vector<4x384xf32>
    %56 = vector.shape_cast %53 : vector<4x384xf32> to vector<1x4x384xf32>
    tpu.vector_store %arg5[%c0_25, %c0_26, %c0_27], %56 {strides = array<i32>} : memref<1x4x384xf32, #tpu.memory_space<vmem>>, vector<1x4x384xf32>,
    return
  }
  func.func @transform_0(%arg0: i32) -> (i32, i32, i32) {
    %c0_i32 = arith.constant 0 : i32
    %c0_i32_0 = arith.constant 0 : i32
    %c0_i32_1 = arith.constant 0 : i32
    return %arg0, %c0_i32, %c0_i32_0 : i32, i32, i32
  }
  func.func @transform_1(%arg0: i32) -> (i32, i32) {
    %c0_i32 = arith.constant 0 : i32
    %c0_i32_0 = arith.constant 0 : i32
    %c0_i32_1 = arith.constant 0 : i32
    return %c0_i32, %c0_i32_0 : i32, i32
  }
  func.func @transform_2(%arg0: i32) -> (i32, i32) {
    %c0_i32 = arith.constant 0 : i32
    %c0_i32_0 = arith.constant 0 : i32
    %c0_i32_1 = arith.constant 0 : i32
    return %c0_i32, %c0_i32_0 : i32, i32
  }
  func.func @transform_3(%arg0: i32) -> (i32, i32, i32) {
    %c0_i32 = arith.constant 0 : i32
    %c0_i32_0 = arith.constant 0 : i32
    %c0_i32_1 = arith.constant 0 : i32
    return %arg0, %c0_i32, %c0_i32_0 : i32, i32, i32
  }
  func.func @transform_4(%arg0: i32) -> (i32, i32, i32) {
    %c0_i32 = arith.constant 0 : i32
    %c0_i32_0 = arith.constant 0 : i32
    %c0_i32_1 = arith.constant 0 : i32
    return %arg0, %c0_i32, %c0_i32_0 : i32, i32, i32
  }
}

module attributes {stable_mosaic.version = 11 : i64} {
  func.func @kernel(%arg0: i32, %arg1: memref<1x4x384xf32, #tpu.memory_space<vmem>>, %arg2: memref<4x1xf32, #tpu.memory_space<vmem>>, %arg3: memref<4x1xf32, #tpu.memory_space<vmem>>, %arg4: memref<1x384xf32, #tpu.memory_space<vmem>>, %arg5: memref<4x36xf32, #tpu.memory_space<vmem>>, %arg6: memref<1x4x384xf32, #tpu.memory_space<vmem>>, %arg7: memref<1x4x2xf32, #tpu.memory_space<vmem>>) attributes {dimension_semantics = [#tpu.dimension_semantics<parallel>], iteration_bounds = array<i64: 2>, scalar_prefetch = 0 : i64, scratch_operands = 0 : i64, tpu.core_type = #tpu.core_type<tc>, window_params = [{transform_indices = @transform_0, window_bounds = array<i64: 1, 4, 384>}, {pipeline_mode = #tpu.pipeline_mode<synchronous>, transform_indices = @transform_1, window_bounds = array<i64: 4, 1>}, {pipeline_mode = #tpu.pipeline_mode<synchronous>, transform_indices = @transform_2, window_bounds = array<i64: 4, 1>}, {pipeline_mode = #tpu.pipeline_mode<synchronous>, transform_indices = @transform_3, window_bounds = array<i64: 1, 384>}, {pipeline_mode = #tpu.pipeline_mode<synchronous>, transform_indices = @transform_4, window_bounds = array<i64: 4, 36>}, {transform_indices = @transform_5, window_bounds = array<i64: 1, 4, 384>}, {transform_indices = @transform_6, window_bounds = array<i64: 1, 4, 2>}]} {
    %c0 = arith.constant 0 : index
    %c0_0 = arith.constant 0 : index
    %0 = vector.load %arg4[%c0, %c0_0] : memref<1x384xf32, #tpu.memory_space<vmem>>, vector<1x384xf32>
    %c0_1 = arith.constant 0 : index
    %c0_2 = arith.constant 0 : index
    %c0_3 = arith.constant 0 : index
    %1 = vector.load %arg1[%c0_1, %c0_2, %c0_3] : memref<1x4x384xf32, #tpu.memory_space<vmem>>, vector<1x4x384xf32>
    %2 = vector.shape_cast %1 : vector<1x4x384xf32> to vector<4x384xf32>
    %c0_4 = arith.constant 0 : index
    %c0_5 = arith.constant 0 : index
    %3 = vector.load %arg2[%c0_4, %c0_5] : memref<4x1xf32, #tpu.memory_space<vmem>>, vector<4x1xf32>
    %4 = vector.broadcast %3 : vector<4x1xf32> to vector<4x384xf32>
    %5 = arith.mulf %2, %4 : vector<4x384xf32>
    %c0_6 = arith.constant 0 : index
    %c0_7 = arith.constant 0 : index
    %6 = vector.load %arg3[%c0_6, %c0_7] : memref<4x1xf32, #tpu.memory_space<vmem>>, vector<4x1xf32>
    %7 = vector.broadcast %6 : vector<4x1xf32> to vector<4x384xf32>
    %8 = arith.addf %5, %7 : vector<4x384xf32>
    %cst = arith.constant 5.000000e-01 : f32
    %9 = vector.broadcast %cst : f32 to vector<4x384xf32>
    %10 = arith.mulf %9, %8 : vector<4x384xf32>
    %cst_8 = arith.constant 0.707106769 : f32
    %11 = vector.broadcast %cst_8 : f32 to vector<4x384xf32>
    %12 = arith.mulf %8, %11 : vector<4x384xf32>
    %cst_9 = arith.constant 0.000000e+00 : f32
    %13 = vector.broadcast %cst_9 : f32 to vector<4x384xf32>
    %14 = arith.cmpf oge, %12, %13 : vector<4x384xf32>
    %cst_10 = arith.constant 1.000000e+00 : f32
    %cst_11 = arith.constant -1.000000e+00 : f32
    %15 = vector.broadcast %cst_10 : f32 to vector<4x384xf32>
    %16 = vector.broadcast %cst_11 : f32 to vector<4x384xf32>
    %17 = arith.select %14, %15, %16 : vector<4x384xi1>, vector<4x384xf32>
    %18 = math.absf %12 : vector<4x384xf32>
    %cst_12 = arith.constant 0.327591091 : f32
    %19 = vector.broadcast %cst_12 : f32 to vector<4x384xf32>
    %20 = arith.mulf %19, %18 : vector<4x384xf32>
    %cst_13 = arith.constant 1.000000e+00 : f32
    %21 = vector.broadcast %cst_13 : f32 to vector<4x384xf32>
    %22 = arith.addf %21, %20 : vector<4x384xf32>
    %cst_14 = arith.constant 1.000000e+00 : f32
    %23 = vector.broadcast %cst_14 : f32 to vector<4x384xf32>
    %24 = arith.divf %23, %22 : vector<4x384xf32>
    %cst_15 = arith.constant 1.06140542 : f32
    %25 = vector.broadcast %cst_15 : f32 to vector<4x384xf32>
    %26 = arith.mulf %25, %24 : vector<4x384xf32>
    %cst_16 = arith.constant -1.45315206 : f32
    %27 = vector.broadcast %cst_16 : f32 to vector<4x384xf32>
    %28 = arith.addf %26, %27 : vector<4x384xf32>
    %29 = arith.mulf %28, %24 : vector<4x384xf32>
    %cst_17 = arith.constant 1.42141378 : f32
    %30 = vector.broadcast %cst_17 : f32 to vector<4x384xf32>
    %31 = arith.addf %29, %30 : vector<4x384xf32>
    %32 = arith.mulf %31, %24 : vector<4x384xf32>
    %cst_18 = arith.constant -0.284496725 : f32
    %33 = vector.broadcast %cst_18 : f32 to vector<4x384xf32>
    %34 = arith.addf %32, %33 : vector<4x384xf32>
    %35 = arith.mulf %34, %24 : vector<4x384xf32>
    %cst_19 = arith.constant 0.254829586 : f32
    %36 = vector.broadcast %cst_19 : f32 to vector<4x384xf32>
    %37 = arith.addf %35, %36 : vector<4x384xf32>
    %38 = arith.mulf %37, %24 : vector<4x384xf32>
    %cst_20 = arith.constant 0.000000e+00 : f32
    %39 = vector.broadcast %cst_20 : f32 to vector<4x384xf32>
    %40 = arith.subf %39, %18 : vector<4x384xf32>
    %41 = arith.mulf %40, %18 : vector<4x384xf32>
    %42 = math.exp %41 : vector<4x384xf32>
    %43 = arith.mulf %38, %42 : vector<4x384xf32>
    %cst_21 = arith.constant 1.000000e+00 : f32
    %44 = vector.broadcast %cst_21 : f32 to vector<4x384xf32>
    %45 = arith.subf %44, %43 : vector<4x384xf32>
    %46 = arith.mulf %17, %45 : vector<4x384xf32>
    %cst_22 = arith.constant 1.000000e+00 : f32
    %47 = vector.broadcast %cst_22 : f32 to vector<4x384xf32>
    %48 = arith.addf %47, %46 : vector<4x384xf32>
    %49 = arith.mulf %10, %48 : vector<4x384xf32>
    %50 = vector.broadcast %0 : vector<1x384xf32> to vector<4x384xf32>
    %51 = arith.mulf %49, %50 : vector<4x384xf32>
    %cst_23 = arith.constant 0.000000e+00 : f32
    %52 = vector.broadcast %cst_23 : f32 to vector<4x384xf32>
    %53 = vector.extract_strided_slice %51 {offsets = [0, 365], sizes = [4, 19], strides = [1, 1]} : vector<4x384xf32> to vector<4x19xf32>
    %54 = vector.extract_strided_slice %51 {offsets = [0, 0], sizes = [4, 365], strides = [1, 1]} : vector<4x384xf32> to vector<4x365xf32>
    %55 = tpu.concatenate %53, %54 in 1 : vector<4x19xf32>, vector<4x365xf32> -> vector<4x384xf32>
    %c0_24 = arith.constant 0 : index
    %c0_25 = arith.constant 0 : index
    %56 = vector.load %arg5[%c0_24, %c0_25] : memref<4x36xf32, #tpu.memory_space<vmem>>, vector<4x1xf32>
    %57 = vector.extract_strided_slice %55 {offsets = [0, 0], sizes = [1, 384], strides = [1, 1]} : vector<4x384xf32> to vector<1x384xf32>
    %58 = vector.broadcast %56 : vector<4x1xf32> to vector<4x384xf32>
    %59 = vector.broadcast %57 : vector<1x384xf32> to vector<4x384xf32>
    %60 = arith.mulf %58, %59 : vector<4x384xf32>
    %61 = arith.addf %52, %60 : vector<4x384xf32>
    %c0_26 = arith.constant 0 : index
    %c1 = arith.constant 1 : index
    %62 = vector.load %arg5[%c0_26, %c1] : memref<4x36xf32, #tpu.memory_space<vmem>>, vector<4x1xf32>
    %63 = vector.extract_strided_slice %55 {offsets = [1, 0], sizes = [1, 384], strides = [1, 1]} : vector<4x384xf32> to vector<1x384xf32>
    %64 = vector.broadcast %62 : vector<4x1xf32> to vector<4x384xf32>
    %65 = vector.broadcast %63 : vector<1x384xf32> to vector<4x384xf32>
    %66 = arith.mulf %64, %65 : vector<4x384xf32>
    %67 = arith.addf %61, %66 : vector<4x384xf32>
    %c0_27 = arith.constant 0 : index
    %c2 = arith.constant 2 : index
    %68 = vector.load %arg5[%c0_27, %c2] : memref<4x36xf32, #tpu.memory_space<vmem>>, vector<4x1xf32>
    %69 = vector.extract_strided_slice %55 {offsets = [2, 0], sizes = [1, 384], strides = [1, 1]} : vector<4x384xf32> to vector<1x384xf32>
    %70 = vector.broadcast %68 : vector<4x1xf32> to vector<4x384xf32>
    %71 = vector.broadcast %69 : vector<1x384xf32> to vector<4x384xf32>
    %72 = arith.mulf %70, %71 : vector<4x384xf32>
    %73 = arith.addf %67, %72 : vector<4x384xf32>
    %c0_28 = arith.constant 0 : index
    %c3 = arith.constant 3 : index
    %74 = vector.load %arg5[%c0_28, %c3] : memref<4x36xf32, #tpu.memory_space<vmem>>, vector<4x1xf32>
    %75 = vector.extract_strided_slice %55 {offsets = [3, 0], sizes = [1, 384], strides = [1, 1]} : vector<4x384xf32> to vector<1x384xf32>
    %76 = vector.broadcast %74 : vector<4x1xf32> to vector<4x384xf32>
    %77 = vector.broadcast %75 : vector<1x384xf32> to vector<4x384xf32>
    %78 = arith.mulf %76, %77 : vector<4x384xf32>
    %79 = arith.addf %73, %78 : vector<4x384xf32>
    %80 = vector.extract_strided_slice %51 {offsets = [0, 366], sizes = [4, 18], strides = [1, 1]} : vector<4x384xf32> to vector<4x18xf32>
    %81 = vector.extract_strided_slice %51 {offsets = [0, 0], sizes = [4, 366], strides = [1, 1]} : vector<4x384xf32> to vector<4x366xf32>
    %82 = tpu.concatenate %80, %81 in 1 : vector<4x18xf32>, vector<4x366xf32> -> vector<4x384xf32>
    %c0_29 = arith.constant 0 : index
    %c4 = arith.constant 4 : index
    %83 = vector.load %arg5[%c0_29, %c4] : memref<4x36xf32, #tpu.memory_space<vmem>>, vector<4x1xf32>
    %84 = vector.extract_strided_slice %82 {offsets = [0, 0], sizes = [1, 384], strides = [1, 1]} : vector<4x384xf32> to vector<1x384xf32>
    %85 = vector.broadcast %83 : vector<4x1xf32> to vector<4x384xf32>
    %86 = vector.broadcast %84 : vector<1x384xf32> to vector<4x384xf32>
    %87 = arith.mulf %85, %86 : vector<4x384xf32>
    %88 = arith.addf %79, %87 : vector<4x384xf32>
    %c0_30 = arith.constant 0 : index
    %c5 = arith.constant 5 : index
    %89 = vector.load %arg5[%c0_30, %c5] : memref<4x36xf32, #tpu.memory_space<vmem>>, vector<4x1xf32>
    %90 = vector.extract_strided_slice %82 {offsets = [1, 0], sizes = [1, 384], strides = [1, 1]} : vector<4x384xf32> to vector<1x384xf32>
    %91 = vector.broadcast %89 : vector<4x1xf32> to vector<4x384xf32>
    %92 = vector.broadcast %90 : vector<1x384xf32> to vector<4x384xf32>
    %93 = arith.mulf %91, %92 : vector<4x384xf32>
    %94 = arith.addf %88, %93 : vector<4x384xf32>
    %c0_31 = arith.constant 0 : index
    %c6 = arith.constant 6 : index
    %95 = vector.load %arg5[%c0_31, %c6] : memref<4x36xf32, #tpu.memory_space<vmem>>, vector<4x1xf32>
    %96 = vector.extract_strided_slice %82 {offsets = [2, 0], sizes = [1, 384], strides = [1, 1]} : vector<4x384xf32> to vector<1x384xf32>
    %97 = vector.broadcast %95 : vector<4x1xf32> to vector<4x384xf32>
    %98 = vector.broadcast %96 : vector<1x384xf32> to vector<4x384xf32>
    %99 = arith.mulf %97, %98 : vector<4x384xf32>
    %100 = arith.addf %94, %99 : vector<4x384xf32>
    %c0_32 = arith.constant 0 : index
    %c7 = arith.constant 7 : index
    %101 = vector.load %arg5[%c0_32, %c7] : memref<4x36xf32, #tpu.memory_space<vmem>>, vector<4x1xf32>
    %102 = vector.extract_strided_slice %82 {offsets = [3, 0], sizes = [1, 384], strides = [1, 1]} : vector<4x384xf32> to vector<1x384xf32>
    %103 = vector.broadcast %101 : vector<4x1xf32> to vector<4x384xf32>
    %104 = vector.broadcast %102 : vector<1x384xf32> to vector<4x384xf32>
    %105 = arith.mulf %103, %104 : vector<4x384xf32>
    %106 = arith.addf %100, %105 : vector<4x384xf32>
    %107 = vector.extract_strided_slice %51 {offsets = [0, 367], sizes = [4, 17], strides = [1, 1]} : vector<4x384xf32> to vector<4x17xf32>
    %108 = vector.extract_strided_slice %51 {offsets = [0, 0], sizes = [4, 367], strides = [1, 1]} : vector<4x384xf32> to vector<4x367xf32>
    %109 = tpu.concatenate %107, %108 in 1 : vector<4x17xf32>, vector<4x367xf32> -> vector<4x384xf32>
    %c0_33 = arith.constant 0 : index
    %c8 = arith.constant 8 : index
    %110 = vector.load %arg5[%c0_33, %c8] : memref<4x36xf32, #tpu.memory_space<vmem>>, vector<4x1xf32>
    %111 = vector.extract_strided_slice %109 {offsets = [0, 0], sizes = [1, 384], strides = [1, 1]} : vector<4x384xf32> to vector<1x384xf32>
    %112 = vector.broadcast %110 : vector<4x1xf32> to vector<4x384xf32>
    %113 = vector.broadcast %111 : vector<1x384xf32> to vector<4x384xf32>
    %114 = arith.mulf %112, %113 : vector<4x384xf32>
    %115 = arith.addf %106, %114 : vector<4x384xf32>
    %c0_34 = arith.constant 0 : index
    %c9 = arith.constant 9 : index
    %116 = vector.load %arg5[%c0_34, %c9] : memref<4x36xf32, #tpu.memory_space<vmem>>, vector<4x1xf32>
    %117 = vector.extract_strided_slice %109 {offsets = [1, 0], sizes = [1, 384], strides = [1, 1]} : vector<4x384xf32> to vector<1x384xf32>
    %118 = vector.broadcast %116 : vector<4x1xf32> to vector<4x384xf32>
    %119 = vector.broadcast %117 : vector<1x384xf32> to vector<4x384xf32>
    %120 = arith.mulf %118, %119 : vector<4x384xf32>
    %121 = arith.addf %115, %120 : vector<4x384xf32>
    %c0_35 = arith.constant 0 : index
    %c10 = arith.constant 10 : index
    %122 = vector.load %arg5[%c0_35, %c10] : memref<4x36xf32, #tpu.memory_space<vmem>>, vector<4x1xf32>
    %123 = vector.extract_strided_slice %109 {offsets = [2, 0], sizes = [1, 384], strides = [1, 1]} : vector<4x384xf32> to vector<1x384xf32>
    %124 = vector.broadcast %122 : vector<4x1xf32> to vector<4x384xf32>
    %125 = vector.broadcast %123 : vector<1x384xf32> to vector<4x384xf32>
    %126 = arith.mulf %124, %125 : vector<4x384xf32>
    %127 = arith.addf %121, %126 : vector<4x384xf32>
    %c0_36 = arith.constant 0 : index
    %c11 = arith.constant 11 : index
    %128 = vector.load %arg5[%c0_36, %c11] : memref<4x36xf32, #tpu.memory_space<vmem>>, vector<4x1xf32>
    %129 = vector.extract_strided_slice %109 {offsets = [3, 0], sizes = [1, 384], strides = [1, 1]} : vector<4x384xf32> to vector<1x384xf32>
    %130 = vector.broadcast %128 : vector<4x1xf32> to vector<4x384xf32>
    %131 = vector.broadcast %129 : vector<1x384xf32> to vector<4x384xf32>
    %132 = arith.mulf %130, %131 : vector<4x384xf32>
    %133 = arith.addf %127, %132 : vector<4x384xf32>
    %134 = vector.extract_strided_slice %51 {offsets = [0, 383], sizes = [4, 1], strides = [1, 1]} : vector<4x384xf32> to vector<4x1xf32>
    %135 = vector.extract_strided_slice %51 {offsets = [0, 0], sizes = [4, 383], strides = [1, 1]} : vector<4x384xf32> to vector<4x383xf32>
    %136 = tpu.concatenate %134, %135 in 1 : vector<4x1xf32>, vector<4x383xf32> -> vector<4x384xf32>
    %c0_37 = arith.constant 0 : index
    %c12 = arith.constant 12 : index
    %137 = vector.load %arg5[%c0_37, %c12] : memref<4x36xf32, #tpu.memory_space<vmem>>, vector<4x1xf32>
    %138 = vector.extract_strided_slice %136 {offsets = [0, 0], sizes = [1, 384], strides = [1, 1]} : vector<4x384xf32> to vector<1x384xf32>
    %139 = vector.broadcast %137 : vector<4x1xf32> to vector<4x384xf32>
    %140 = vector.broadcast %138 : vector<1x384xf32> to vector<4x384xf32>
    %141 = arith.mulf %139, %140 : vector<4x384xf32>
    %142 = arith.addf %133, %141 : vector<4x384xf32>
    %c0_38 = arith.constant 0 : index
    %c13 = arith.constant 13 : index
    %143 = vector.load %arg5[%c0_38, %c13] : memref<4x36xf32, #tpu.memory_space<vmem>>, vector<4x1xf32>
    %144 = vector.extract_strided_slice %136 {offsets = [1, 0], sizes = [1, 384], strides = [1, 1]} : vector<4x384xf32> to vector<1x384xf32>
    %145 = vector.broadcast %143 : vector<4x1xf32> to vector<4x384xf32>
    %146 = vector.broadcast %144 : vector<1x384xf32> to vector<4x384xf32>
    %147 = arith.mulf %145, %146 : vector<4x384xf32>
    %148 = arith.addf %142, %147 : vector<4x384xf32>
    %c0_39 = arith.constant 0 : index
    %c14 = arith.constant 14 : index
    %149 = vector.load %arg5[%c0_39, %c14] : memref<4x36xf32, #tpu.memory_space<vmem>>, vector<4x1xf32>
    %150 = vector.extract_strided_slice %136 {offsets = [2, 0], sizes = [1, 384], strides = [1, 1]} : vector<4x384xf32> to vector<1x384xf32>
    %151 = vector.broadcast %149 : vector<4x1xf32> to vector<4x384xf32>
    %152 = vector.broadcast %150 : vector<1x384xf32> to vector<4x384xf32>
    %153 = arith.mulf %151, %152 : vector<4x384xf32>
    %154 = arith.addf %148, %153 : vector<4x384xf32>
    %c0_40 = arith.constant 0 : index
    %c15 = arith.constant 15 : index
    %155 = vector.load %arg5[%c0_40, %c15] : memref<4x36xf32, #tpu.memory_space<vmem>>, vector<4x1xf32>
    %156 = vector.extract_strided_slice %136 {offsets = [3, 0], sizes = [1, 384], strides = [1, 1]} : vector<4x384xf32> to vector<1x384xf32>
    %157 = vector.broadcast %155 : vector<4x1xf32> to vector<4x384xf32>
    %158 = vector.broadcast %156 : vector<1x384xf32> to vector<4x384xf32>
    %159 = arith.mulf %157, %158 : vector<4x384xf32>
    %160 = arith.addf %154, %159 : vector<4x384xf32>
    %c0_41 = arith.constant 0 : index
    %c16 = arith.constant 16 : index
    %161 = vector.load %arg5[%c0_41, %c16] : memref<4x36xf32, #tpu.memory_space<vmem>>, vector<4x1xf32>
    %162 = vector.extract_strided_slice %51 {offsets = [0, 0], sizes = [1, 384], strides = [1, 1]} : vector<4x384xf32> to vector<1x384xf32>
    %163 = vector.broadcast %161 : vector<4x1xf32> to vector<4x384xf32>
    %164 = vector.broadcast %162 : vector<1x384xf32> to vector<4x384xf32>
    %165 = arith.mulf %163, %164 : vector<4x384xf32>
    %166 = arith.addf %160, %165 : vector<4x384xf32>
    %c0_42 = arith.constant 0 : index
    %c17 = arith.constant 17 : index
    %167 = vector.load %arg5[%c0_42, %c17] : memref<4x36xf32, #tpu.memory_space<vmem>>, vector<4x1xf32>
    %168 = vector.extract_strided_slice %51 {offsets = [1, 0], sizes = [1, 384], strides = [1, 1]} : vector<4x384xf32> to vector<1x384xf32>
    %169 = vector.broadcast %167 : vector<4x1xf32> to vector<4x384xf32>
    %170 = vector.broadcast %168 : vector<1x384xf32> to vector<4x384xf32>
    %171 = arith.mulf %169, %170 : vector<4x384xf32>
    %172 = arith.addf %166, %171 : vector<4x384xf32>
    %c0_43 = arith.constant 0 : index
    %c18 = arith.constant 18 : index
    %173 = vector.load %arg5[%c0_43, %c18] : memref<4x36xf32, #tpu.memory_space<vmem>>, vector<4x1xf32>
    %174 = vector.extract_strided_slice %51 {offsets = [2, 0], sizes = [1, 384], strides = [1, 1]} : vector<4x384xf32> to vector<1x384xf32>
    %175 = vector.broadcast %173 : vector<4x1xf32> to vector<4x384xf32>
    %176 = vector.broadcast %174 : vector<1x384xf32> to vector<4x384xf32>
    %177 = arith.mulf %175, %176 : vector<4x384xf32>
    %178 = arith.addf %172, %177 : vector<4x384xf32>
    %c0_44 = arith.constant 0 : index
    %c19 = arith.constant 19 : index
    %179 = vector.load %arg5[%c0_44, %c19] : memref<4x36xf32, #tpu.memory_space<vmem>>, vector<4x1xf32>
    %180 = vector.extract_strided_slice %51 {offsets = [3, 0], sizes = [1, 384], strides = [1, 1]} : vector<4x384xf32> to vector<1x384xf32>
    %181 = vector.broadcast %179 : vector<4x1xf32> to vector<4x384xf32>
    %182 = vector.broadcast %180 : vector<1x384xf32> to vector<4x384xf32>
    %183 = arith.mulf %181, %182 : vector<4x384xf32>
    %184 = arith.addf %178, %183 : vector<4x384xf32>
    %185 = vector.extract_strided_slice %51 {offsets = [0, 1], sizes = [4, 383], strides = [1, 1]} : vector<4x384xf32> to vector<4x383xf32>
    %186 = vector.extract_strided_slice %51 {offsets = [0, 0], sizes = [4, 1], strides = [1, 1]} : vector<4x384xf32> to vector<4x1xf32>
    %187 = tpu.concatenate %185, %186 in 1 : vector<4x383xf32>, vector<4x1xf32> -> vector<4x384xf32>
    %c0_45 = arith.constant 0 : index
    %c20 = arith.constant 20 : index
    %188 = vector.load %arg5[%c0_45, %c20] : memref<4x36xf32, #tpu.memory_space<vmem>>, vector<4x1xf32>
    %189 = vector.extract_strided_slice %187 {offsets = [0, 0], sizes = [1, 384], strides = [1, 1]} : vector<4x384xf32> to vector<1x384xf32>
    %190 = vector.broadcast %188 : vector<4x1xf32> to vector<4x384xf32>
    %191 = vector.broadcast %189 : vector<1x384xf32> to vector<4x384xf32>
    %192 = arith.mulf %190, %191 : vector<4x384xf32>
    %193 = arith.addf %184, %192 : vector<4x384xf32>
    %c0_46 = arith.constant 0 : index
    %c21 = arith.constant 21 : index
    %194 = vector.load %arg5[%c0_46, %c21] : memref<4x36xf32, #tpu.memory_space<vmem>>, vector<4x1xf32>
    %195 = vector.extract_strided_slice %187 {offsets = [1, 0], sizes = [1, 384], strides = [1, 1]} : vector<4x384xf32> to vector<1x384xf32>
    %196 = vector.broadcast %194 : vector<4x1xf32> to vector<4x384xf32>
    %197 = vector.broadcast %195 : vector<1x384xf32> to vector<4x384xf32>
    %198 = arith.mulf %196, %197 : vector<4x384xf32>
    %199 = arith.addf %193, %198 : vector<4x384xf32>
    %c0_47 = arith.constant 0 : index
    %c22 = arith.constant 22 : index
    %200 = vector.load %arg5[%c0_47, %c22] : memref<4x36xf32, #tpu.memory_space<vmem>>, vector<4x1xf32>
    %201 = vector.extract_strided_slice %187 {offsets = [2, 0], sizes = [1, 384], strides = [1, 1]} : vector<4x384xf32> to vector<1x384xf32>
    %202 = vector.broadcast %200 : vector<4x1xf32> to vector<4x384xf32>
    %203 = vector.broadcast %201 : vector<1x384xf32> to vector<4x384xf32>
    %204 = arith.mulf %202, %203 : vector<4x384xf32>
    %205 = arith.addf %199, %204 : vector<4x384xf32>
    %c0_48 = arith.constant 0 : index
    %c23 = arith.constant 23 : index
    %206 = vector.load %arg5[%c0_48, %c23] : memref<4x36xf32, #tpu.memory_space<vmem>>, vector<4x1xf32>
    %207 = vector.extract_strided_slice %187 {offsets = [3, 0], sizes = [1, 384], strides = [1, 1]} : vector<4x384xf32> to vector<1x384xf32>
    %208 = vector.broadcast %206 : vector<4x1xf32> to vector<4x384xf32>
    %209 = vector.broadcast %207 : vector<1x384xf32> to vector<4x384xf32>
    %210 = arith.mulf %208, %209 : vector<4x384xf32>
    %211 = arith.addf %205, %210 : vector<4x384xf32>
    %212 = vector.extract_strided_slice %51 {offsets = [0, 17], sizes = [4, 367], strides = [1, 1]} : vector<4x384xf32> to vector<4x367xf32>
    %213 = vector.extract_strided_slice %51 {offsets = [0, 0], sizes = [4, 17], strides = [1, 1]} : vector<4x384xf32> to vector<4x17xf32>
    %214 = tpu.concatenate %212, %213 in 1 : vector<4x367xf32>, vector<4x17xf32> -> vector<4x384xf32>
    %c0_49 = arith.constant 0 : index
    %c24 = arith.constant 24 : index
    %215 = vector.load %arg5[%c0_49, %c24] : memref<4x36xf32, #tpu.memory_space<vmem>>, vector<4x1xf32>
    %216 = vector.extract_strided_slice %214 {offsets = [0, 0], sizes = [1, 384], strides = [1, 1]} : vector<4x384xf32> to vector<1x384xf32>
    %217 = vector.broadcast %215 : vector<4x1xf32> to vector<4x384xf32>
    %218 = vector.broadcast %216 : vector<1x384xf32> to vector<4x384xf32>
    %219 = arith.mulf %217, %218 : vector<4x384xf32>
    %220 = arith.addf %211, %219 : vector<4x384xf32>
    %c0_50 = arith.constant 0 : index
    %c25 = arith.constant 25 : index
    %221 = vector.load %arg5[%c0_50, %c25] : memref<4x36xf32, #tpu.memory_space<vmem>>, vector<4x1xf32>
    %222 = vector.extract_strided_slice %214 {offsets = [1, 0], sizes = [1, 384], strides = [1, 1]} : vector<4x384xf32> to vector<1x384xf32>
    %223 = vector.broadcast %221 : vector<4x1xf32> to vector<4x384xf32>
    %224 = vector.broadcast %222 : vector<1x384xf32> to vector<4x384xf32>
    %225 = arith.mulf %223, %224 : vector<4x384xf32>
    %226 = arith.addf %220, %225 : vector<4x384xf32>
    %c0_51 = arith.constant 0 : index
    %c26 = arith.constant 26 : index
    %227 = vector.load %arg5[%c0_51, %c26] : memref<4x36xf32, #tpu.memory_space<vmem>>, vector<4x1xf32>
    %228 = vector.extract_strided_slice %214 {offsets = [2, 0], sizes = [1, 384], strides = [1, 1]} : vector<4x384xf32> to vector<1x384xf32>
    %229 = vector.broadcast %227 : vector<4x1xf32> to vector<4x384xf32>
    %230 = vector.broadcast %228 : vector<1x384xf32> to vector<4x384xf32>
    %231 = arith.mulf %229, %230 : vector<4x384xf32>
    %232 = arith.addf %226, %231 : vector<4x384xf32>
    %c0_52 = arith.constant 0 : index
    %c27 = arith.constant 27 : index
    %233 = vector.load %arg5[%c0_52, %c27] : memref<4x36xf32, #tpu.memory_space<vmem>>, vector<4x1xf32>
    %234 = vector.extract_strided_slice %214 {offsets = [3, 0], sizes = [1, 384], strides = [1, 1]} : vector<4x384xf32> to vector<1x384xf32>
    %235 = vector.broadcast %233 : vector<4x1xf32> to vector<4x384xf32>
    %236 = vector.broadcast %234 : vector<1x384xf32> to vector<4x384xf32>
    %237 = arith.mulf %235, %236 : vector<4x384xf32>
    %238 = arith.addf %232, %237 : vector<4x384xf32>
    %239 = vector.extract_strided_slice %51 {offsets = [0, 18], sizes = [4, 366], strides = [1, 1]} : vector<4x384xf32> to vector<4x366xf32>
    %240 = vector.extract_strided_slice %51 {offsets = [0, 0], sizes = [4, 18], strides = [1, 1]} : vector<4x384xf32> to vector<4x18xf32>
    %241 = tpu.concatenate %239, %240 in 1 : vector<4x366xf32>, vector<4x18xf32> -> vector<4x384xf32>
    %c0_53 = arith.constant 0 : index
    %c28 = arith.constant 28 : index
    %242 = vector.load %arg5[%c0_53, %c28] : memref<4x36xf32, #tpu.memory_space<vmem>>, vector<4x1xf32>
    %243 = vector.extract_strided_slice %241 {offsets = [0, 0], sizes = [1, 384], strides = [1, 1]} : vector<4x384xf32> to vector<1x384xf32>
    %244 = vector.broadcast %242 : vector<4x1xf32> to vector<4x384xf32>
    %245 = vector.broadcast %243 : vector<1x384xf32> to vector<4x384xf32>
    %246 = arith.mulf %244, %245 : vector<4x384xf32>
    %247 = arith.addf %238, %246 : vector<4x384xf32>
    %c0_54 = arith.constant 0 : index
    %c29 = arith.constant 29 : index
    %248 = vector.load %arg5[%c0_54, %c29] : memref<4x36xf32, #tpu.memory_space<vmem>>, vector<4x1xf32>
    %249 = vector.extract_strided_slice %241 {offsets = [1, 0], sizes = [1, 384], strides = [1, 1]} : vector<4x384xf32> to vector<1x384xf32>
    %250 = vector.broadcast %248 : vector<4x1xf32> to vector<4x384xf32>
    %251 = vector.broadcast %249 : vector<1x384xf32> to vector<4x384xf32>
    %252 = arith.mulf %250, %251 : vector<4x384xf32>
    %253 = arith.addf %247, %252 : vector<4x384xf32>
    %c0_55 = arith.constant 0 : index
    %c30 = arith.constant 30 : index
    %254 = vector.load %arg5[%c0_55, %c30] : memref<4x36xf32, #tpu.memory_space<vmem>>, vector<4x1xf32>
    %255 = vector.extract_strided_slice %241 {offsets = [2, 0], sizes = [1, 384], strides = [1, 1]} : vector<4x384xf32> to vector<1x384xf32>
    %256 = vector.broadcast %254 : vector<4x1xf32> to vector<4x384xf32>
    %257 = vector.broadcast %255 : vector<1x384xf32> to vector<4x384xf32>
    %258 = arith.mulf %256, %257 : vector<4x384xf32>
    %259 = arith.addf %253, %258 : vector<4x384xf32>
    %c0_56 = arith.constant 0 : index
    %c31 = arith.constant 31 : index
    %260 = vector.load %arg5[%c0_56, %c31] : memref<4x36xf32, #tpu.memory_space<vmem>>, vector<4x1xf32>
    %261 = vector.extract_strided_slice %241 {offsets = [3, 0], sizes = [1, 384], strides = [1, 1]} : vector<4x384xf32> to vector<1x384xf32>
    %262 = vector.broadcast %260 : vector<4x1xf32> to vector<4x384xf32>
    %263 = vector.broadcast %261 : vector<1x384xf32> to vector<4x384xf32>
    %264 = arith.mulf %262, %263 : vector<4x384xf32>
    %265 = arith.addf %259, %264 : vector<4x384xf32>
    %266 = vector.extract_strided_slice %51 {offsets = [0, 19], sizes = [4, 365], strides = [1, 1]} : vector<4x384xf32> to vector<4x365xf32>
    %267 = vector.extract_strided_slice %51 {offsets = [0, 0], sizes = [4, 19], strides = [1, 1]} : vector<4x384xf32> to vector<4x19xf32>
    %268 = tpu.concatenate %266, %267 in 1 : vector<4x365xf32>, vector<4x19xf32> -> vector<4x384xf32>
    %c0_57 = arith.constant 0 : index
    %c32 = arith.constant 32 : index
    %269 = vector.load %arg5[%c0_57, %c32] : memref<4x36xf32, #tpu.memory_space<vmem>>, vector<4x1xf32>
    %270 = vector.extract_strided_slice %268 {offsets = [0, 0], sizes = [1, 384], strides = [1, 1]} : vector<4x384xf32> to vector<1x384xf32>
    %271 = vector.broadcast %269 : vector<4x1xf32> to vector<4x384xf32>
    %272 = vector.broadcast %270 : vector<1x384xf32> to vector<4x384xf32>
    %273 = arith.mulf %271, %272 : vector<4x384xf32>
    %274 = arith.addf %265, %273 : vector<4x384xf32>
    %c0_58 = arith.constant 0 : index
    %c33 = arith.constant 33 : index
    %275 = vector.load %arg5[%c0_58, %c33] : memref<4x36xf32, #tpu.memory_space<vmem>>, vector<4x1xf32>
    %276 = vector.extract_strided_slice %268 {offsets = [1, 0], sizes = [1, 384], strides = [1, 1]} : vector<4x384xf32> to vector<1x384xf32>
    %277 = vector.broadcast %275 : vector<4x1xf32> to vector<4x384xf32>
    %278 = vector.broadcast %276 : vector<1x384xf32> to vector<4x384xf32>
    %279 = arith.mulf %277, %278 : vector<4x384xf32>
    %280 = arith.addf %274, %279 : vector<4x384xf32>
    %c0_59 = arith.constant 0 : index
    %c34 = arith.constant 34 : index
    %281 = vector.load %arg5[%c0_59, %c34] : memref<4x36xf32, #tpu.memory_space<vmem>>, vector<4x1xf32>
    %282 = vector.extract_strided_slice %268 {offsets = [2, 0], sizes = [1, 384], strides = [1, 1]} : vector<4x384xf32> to vector<1x384xf32>
    %283 = vector.broadcast %281 : vector<4x1xf32> to vector<4x384xf32>
    %284 = vector.broadcast %282 : vector<1x384xf32> to vector<4x384xf32>
    %285 = arith.mulf %283, %284 : vector<4x384xf32>
    %286 = arith.addf %280, %285 : vector<4x384xf32>
    %c0_60 = arith.constant 0 : index
    %c35 = arith.constant 35 : index
    %287 = vector.load %arg5[%c0_60, %c35] : memref<4x36xf32, #tpu.memory_space<vmem>>, vector<4x1xf32>
    %288 = vector.extract_strided_slice %268 {offsets = [3, 0], sizes = [1, 384], strides = [1, 1]} : vector<4x384xf32> to vector<1x384xf32>
    %289 = vector.broadcast %287 : vector<4x1xf32> to vector<4x384xf32>
    %290 = vector.broadcast %288 : vector<1x384xf32> to vector<4x384xf32>
    %291 = arith.mulf %289, %290 : vector<4x384xf32>
    %292 = arith.addf %286, %291 : vector<4x384xf32>
    %293 = vector.broadcast %0 : vector<1x384xf32> to vector<4x384xf32>
    %294 = arith.mulf %292, %293 : vector<4x384xf32>
    %c0_61 = arith.constant 0 : index
    %c0_62 = arith.constant 0 : index
    %c0_63 = arith.constant 0 : index
    %295 = vector.load %arg6[%c0_61, %c0_62, %c0_63] : memref<1x4x384xf32, #tpu.memory_space<vmem>>, vector<1x4x384xf32>
    %296 = vector.shape_cast %295 : vector<1x4x384xf32> to vector<4x384xf32>
    %297 = vector.shape_cast %294 : vector<4x384xf32> to vector<1x4x384xf32>
    tpu.vector_store %arg6[%c0_61, %c0_62, %c0_63], %297 {strides = array<i32>} : memref<1x4x384xf32, #tpu.memory_space<vmem>>, vector<1x4x384xf32>,
    %cst_64 = arith.constant dense<0.000000e+00> : vector<4xf32>
    %298 = vector.multi_reduction <add>, %294, %cst_64 [1] : vector<4x384xf32> to vector<4xf32>
    %299 = vector.shape_cast %298 : vector<4xf32> to vector<4x1xf32>
    %cst_65 = arith.constant 3.906250e-03 : f32
    %300 = vector.broadcast %cst_65 : f32 to vector<4x1xf32>
    %301 = arith.mulf %299, %300 : vector<4x1xf32>
    %302 = vector.broadcast %301 : vector<4x1xf32> to vector<4x384xf32>
    %303 = arith.subf %294, %302 : vector<4x384xf32>
    %304 = vector.broadcast %0 : vector<1x384xf32> to vector<4x384xf32>
    %305 = arith.mulf %303, %304 : vector<4x384xf32>
    %306 = arith.mulf %305, %305 : vector<4x384xf32>
    %cst_66 = arith.constant dense<0.000000e+00> : vector<4xf32>
    %307 = vector.multi_reduction <add>, %306, %cst_66 [1] : vector<4x384xf32> to vector<4xf32>
    %308 = vector.shape_cast %307 : vector<4xf32> to vector<4x1xf32>
    %309 = tpu.concatenate %299, %308 in 1 : vector<4x1xf32>, vector<4x1xf32> -> vector<4x2xf32>
    %c0_67 = arith.constant 0 : index
    %c0_68 = arith.constant 0 : index
    %c0_69 = arith.constant 0 : index
    %310 = vector.load %arg7[%c0_67, %c0_68, %c0_69] : memref<1x4x2xf32, #tpu.memory_space<vmem>>, vector<1x4x2xf32>
    %311 = vector.shape_cast %310 : vector<1x4x2xf32> to vector<4x2xf32>
    %312 = vector.shape_cast %309 : vector<4x2xf32> to vector<1x4x2xf32>
    tpu.vector_store %arg7[%c0_67, %c0_68, %c0_69], %312 {strides = array<i32>} : memref<1x4x2xf32, #tpu.memory_space<vmem>>, vector<1x4x2xf32>,
    return
  }
  func.func @transform_0(%arg0: i32) -> (i32, i32, i32) {
    %c0_i32 = arith.constant 0 : i32
    %c0_i32_0 = arith.constant 0 : i32
    %c0_i32_1 = arith.constant 0 : i32
    return %arg0, %c0_i32, %c0_i32_0 : i32, i32, i32
  }
  func.func @transform_1(%arg0: i32) -> (i32, i32) {
    %c0_i32 = arith.constant 0 : i32
    %c0_i32_0 = arith.constant 0 : i32
    %c0_i32_1 = arith.constant 0 : i32
    return %c0_i32, %c0_i32_0 : i32, i32
  }
  func.func @transform_2(%arg0: i32) -> (i32, i32) {
    %c0_i32 = arith.constant 0 : i32
    %c0_i32_0 = arith.constant 0 : i32
    %c0_i32_1 = arith.constant 0 : i32
    return %c0_i32, %c0_i32_0 : i32, i32
  }
  func.func @transform_3(%arg0: i32) -> (i32, i32) {
    %c0_i32 = arith.constant 0 : i32
    %c0_i32_0 = arith.constant 0 : i32
    %c0_i32_1 = arith.constant 0 : i32
    return %c0_i32, %c0_i32_0 : i32, i32
  }
  func.func @transform_4(%arg0: i32) -> (i32, i32) {
    %c0_i32 = arith.constant 0 : i32
    %c0_i32_0 = arith.constant 0 : i32
    %c0_i32_1 = arith.constant 0 : i32
    return %c0_i32, %c0_i32_0 : i32, i32
  }
  func.func @transform_5(%arg0: i32) -> (i32, i32, i32) {
    %c0_i32 = arith.constant 0 : i32
    %c0_i32_0 = arith.constant 0 : i32
    %c0_i32_1 = arith.constant 0 : i32
    return %arg0, %c0_i32, %c0_i32_0 : i32, i32, i32
  }
  func.func @transform_6(%arg0: i32) -> (i32, i32, i32) {
    %c0_i32 = arith.constant 0 : i32
    %c0_i32_0 = arith.constant 0 : i32
    %c0_i32_1 = arith.constant 0 : i32
    return %arg0, %c0_i32, %c0_i32_0 : i32, i32, i32
  }
}

</mosaic_0001>

<llo_original>
// kernel: residual_conv_block.5
$region0: #{residual_conv_block.5}
  #allocation0 [shape = 'u32[]', space=smem, size = 0x4, offset = 0x4, fixed_abs, tag = 'smem constant byte address 0x4 - core index']
  #allocation1 [shape = 'u32[72,128]{1,0:T(1,128)}', space=vmem, size = 0x9000, scoped, tag = 'internal scratch']
  %s0 = inlined_call_operand.vmem [shape: f32[2,4,384], index: 0, kind: input, shape index: {}]
  %s1 = inlined_call_operand.vmem [shape: f32[4,1], index: 1, kind: input, shape index: {}]
  %s2 = inlined_call_operand.vmem [shape: f32[4,1], index: 2, kind: input, shape index: {}]
  %s3 = inlined_call_operand.vmem [shape: f32[2,4,384], index: 3, kind: input, shape index: {}]
  %s4 = inlined_call_operand.vmem [shape: f32[2,4,384], index: 4, kind: output, shape index: {}]
  %s5 = sld [smem:[#allocation0]]
  $region49: #{residual_conv_block.5} parent=0
    _
  %s7 = ssub.s32 1, %s5
  %s8 = scalar_select 0, %s7, %s5
  loop: start=0, step=1, limit=4
  $region2: #{residual_conv_block.5} parent=0 // loop_pre_header
    _
  $region3: #{residual_conv_block.5} parent=0 // loop_header
    %s10 = sphi 0, %s14
    %p11 = scmp.ge.s32.totalorder %s10, 4
    %s20 = sphi 0, %s22
    %s23 = sphi 0, %s20
    %s24 = sphi 0, %s23
    %s40 = sphi 0, %s24
    %s44 = sphi 0, %s44
    %s46 = sphi 0, %s44
    %s47 = sphi 0, %s46
    %s61 = sphi 0, %s47
    %s65 = sphi 0, %s65
    %s67 = sphi 0, %s65
    %s68 = sphi 0, %s67
    %s82 = sphi 0, %s68
    %s88 = sphi 0, %s90
    %s91 = sphi 0, %s88
    %s92 = sphi 0, %s91
    %s108 = sphi 0, %s92
    %s114 = sphi 0, %s116
    %s117 = sphi 0, %s114
    %s118 = sphi 0, %s117
    %s134 = sphi 0, %s118
  $region4: #{residual_conv_block.5} parent=0 // loop_header_branch
    %13 = sbr.rel (%p11) target = $region8
  $region5: #{residual_conv_block.5} parent=0 // loop_body
    %s15 = ssub.s32 %s10, 1
    %s16 = ssub.s32 %s10, 2
    %s17 = sadd.s32 %s10, 1
    %s18 = ssub.s32 %s10, %s17
    %p19 = scmp.eq.s32.totalorder %s18, 0
    %s21 = sadd.s32 %s20, 1
    %s22 = scalar_select %p19, %s20, %s21
    %p25 = pneg %p19
    %p26 = scmp.eq.s32.totalorder %s10, 1
    %p27 = por %p25, %p26
    %p28 = scmp.ne.s32.totalorder %s20, %s23
    %p29 = scmp.eq.s32.totalorder %s10, 0
    %p30 = por %p28, %p29
    %p31 = scmp.ne.s32.totalorder %s20, %s23
    %p32 = scmp.eq.s32.totalorder %s15, 1
    %p33 = por %p31, %p32
    %p34 = scmp.ne.s32.totalorder %s23, %s24
    %p35 = scmp.eq.s32.totalorder %s15, 0
    %p36 = por %p34, %p35
    %p37 = scmp.ne.s32.totalorder %s23, %s24
    %p38 = scmp.eq.s32.totalorder %s16, 1
    %p39 = por %p37, %p38
    %p41 = scmp.ne.s32.totalorder %s24, %s40
    %p42 = scmp.eq.s32.totalorder %s16, 0
    %p43 = por %p41, %p42
    %s45 = sadd.s32 %s44, 1
    %p48 = scmp.eq.s32.totalorder %s10, 1
    %p49 = scmp.ne.s32.totalorder %s44, %s46
    %p50 = scmp.eq.s32.totalorder %s10, 0
    %p51 = por %p49, %p50
    %p52 = scmp.ne.s32.totalorder %s44, %s46
    %p53 = scmp.eq.s32.totalorder %s15, 1
    %p54 = por %p52, %p53
    %p55 = scmp.ne.s32.totalorder %s46, %s47
    %p56 = scmp.eq.s32.totalorder %s15, 0
    %p57 = por %p55, %p56
    %p58 = scmp.ne.s32.totalorder %s46, %s47
    %p59 = scmp.eq.s32.totalorder %s16, 1
    %p60 = por %p58, %p59
    %p62 = scmp.ne.s32.totalorder %s47, %s61
    %p63 = scmp.eq.s32.totalorder %s16, 0
    %p64 = por %p62, %p63
    %s66 = sadd.s32 %s65, 1
    %p69 = scmp.eq.s32.totalorder %s10, 1
    %p70 = scmp.ne.s32.totalorder %s65, %s67
    %p71 = scmp.eq.s32.totalorder %s10, 0
    %p72 = por %p70, %p71
    %p73 = scmp.ne.s32.totalorder %s65, %s67
    %p74 = scmp.eq.s32.totalorder %s15, 1
    %p75 = por %p73, %p74
    %p76 = scmp.ne.s32.totalorder %s67, %s68
    %p77 = scmp.eq.s32.totalorder %s15, 0
    %p78 = por %p76, %p77
    %p79 = scmp.ne.s32.totalorder %s67, %s68
    %p80 = scmp.eq.s32.totalorder %s16, 1
    %p81 = por %p79, %p80
    %p83 = scmp.ne.s32.totalorder %s68, %s82
    %p84 = scmp.eq.s32.totalorder %s16, 0
    %p85 = por %p83, %p84
    %s86 = ssub.s32 %s10, %s17
    %p87 = scmp.eq.s32.totalorder %s86, 0
    %s89 = sadd.s32 %s88, 1
    %s90 = scalar_select %p87, %s88, %s89
    %p93 = pneg %p87
    %p94 = scmp.eq.s32.totalorder %s10, 1
    %p95 = por %p93, %p94
    %p96 = scmp.ne.s32.totalorder %s88, %s91
    %p97 = scmp.eq.s32.totalorder %s10, 0
    %p98 = por %p96, %p97
    %p99 = scmp.ne.s32.totalorder %s88, %s91
    %p100 = scmp.eq.s32.totalorder %s15, 1
    %p101 = por %p99, %p100
    %p102 = scmp.ne.s32.totalorder %s91, %s92
    %p103 = scmp.eq.s32.totalorder %s15, 0
    %p104 = por %p102, %p103
    %p105 = scmp.ne.s32.totalorder %s91, %s92
    %p106 = scmp.eq.s32.totalorder %s16, 1
    %p107 = por %p105, %p106
    %p109 = scmp.ne.s32.totalorder %s92, %s108
    %p110 = scmp.eq.s32.totalorder %s16, 0
    %p111 = por %p109, %p110
    %s112 = ssub.s32 %s10, %s17
    %p113 = scmp.eq.s32.totalorder %s112, 0
    %s115 = sadd.s32 %s114, 1
    %s116 = scalar_select %p113, %s114, %s115
    %p119 = pneg %p113
    %p120 = scmp.eq.s32.totalorder %s10, 1
    %p121 = por %p119, %p120
    %p122 = scmp.ne.s32.totalorder %s114, %s117
    %p123 = scmp.eq.s32.totalorder %s10, 0
    %p124 = por %p122, %p123
    %p125 = scmp.ne.s32.totalorder %s114, %s117
    %p126 = scmp.eq.s32.totalorder %s15, 1
    %p127 = por %p125, %p126
    %p128 = scmp.ne.s32.totalorder %s117, %s118
    %p129 = scmp.eq.s32.totalorder %s15, 0
    %p130 = por %p128, %p129
    %p131 = scmp.ne.s32.totalorder %s117, %s118
    %p132 = scmp.eq.s32.totalorder %s16, 1
    %p133 = por %p131, %p132
    %p135 = scmp.ne.s32.totalorder %s118, %s134
    %p136 = scmp.eq.s32.totalorder %s16, 0
    %p137 = por %p135, %p136
    %p138 = scmp.le.s32.totalorder 1, %s10
    %p139 = scmp.lt.s32.totalorder %s10, 3
    %p140 = pnand %p138, %p139
    %p141 = pneg %p140
    // Predicated region
    $region9: #{residual_conv_block.5} parent=5 // pred_check
      _
    $region10: #{residual_conv_block.5} parent=5 // pred_check_branch
      %143 = sbr.rel (%p140) target = $region12
    $region11: #{residual_conv_block.5} parent=5 // pred_region
      %s144 = ssub.s32 %s10, 1
      // Predicated region
      $region13: #{residual_conv_block.5} parent=11 // pred_check
        %p145 = pneg %p57
      $region14: #{residual_conv_block.5} parent=11 // pred_check_branch
        %147 = sbr.rel (%p145) target = $region16
      $region15: #{residual_conv_block.5} parent=11 // pred_region
        _
      $region16: #{residual_conv_block.5} parent=11 // pred_fallthru
        _
      // Predicated region
      $region17: #{residual_conv_block.5} parent=11 // pred_check
        %p148 = pneg %p78
      $region18: #{residual_conv_block.5} parent=11 // pred_check_branch
        %150 = sbr.rel (%p148) target = $region20
      $region19: #{residual_conv_block.5} parent=11 // pred_region
        _
      $region20: #{residual_conv_block.5} parent=11 // pred_fallthru
        _
    $region12: #{residual_conv_block.5} parent=5 // pred_fallthru
      _
    %p151 = scmp.lt.s32.totalorder %s10, 2
    // Predicated region
    $region21: #{residual_conv_block.5} parent=5 // pred_check
      %p152 = pneg %p151
    $region22: #{residual_conv_block.5} parent=5 // pred_check_branch
      %154 = sbr.rel (%p152) target = $region24
    $region23: #{residual_conv_block.5} parent=5 // pred_region
      // Predicated region
      $region25: #{residual_conv_block.5} parent=23 // pred_check
        %p155 = pneg %p30
      $region26: #{residual_conv_block.5} parent=23 // pred_check_branch
        %157 = sbr.rel (%p155) target = $region28
      $region27: #{residual_conv_block.5} parent=23 // pred_region
        %p158 = scmp.lt.s32.totalorder %s10, 1
        %s159 = scalar_select %p158, %s10, 1
        %s160 = smul.addr %s159, 3
        %s161 = smul.addr %s160, 4
        %s162 = scalar_lea.vmem %s0, %s161
      $region28: #{residual_conv_block.5} parent=23 // pred_fallthru
        _
      // Predicated region
      $region29: #{residual_conv_block.5} parent=23 // pred_check
        %p163 = pneg %p98
      $region30: #{residual_conv_block.5} parent=23 // pred_check_branch
        %165 = sbr.rel (%p163) target = $region32
      $region31: #{residual_conv_block.5} parent=23 // pred_region
        %p166 = scmp.lt.s32.totalorder %s10, 1
        %s167 = scalar_select %p166, %s10, 1
        %s168 = smul.addr %s167, 3
        %s169 = smul.addr %s168, 4
        %s170 = scalar_lea.vmem %s3, %s169
      $region32: #{residual_conv_block.5} parent=23 // pred_fallthru
        _
    $region24: #{residual_conv_block.5} parent=5 // pred_fallthru
      _
    %p171 = scmp.le.s32.totalorder 1, %s10
    %p172 = scmp.lt.s32.totalorder %s10, 3
    %p173 = pnand %p171, %p172
    %p174 = pneg %p173
    // Predicated region
    $region33: #{residual_conv_block.5} parent=5 // pred_check
      _
    $region34: #{residual_conv_block.5} parent=5 // pred_check_branch
      %176 = sbr.rel (%p173) target = $region36
    $region35: #{residual_conv_block.5} parent=5 // pred_region
      %s177 = ssub.s32 %s10, 1
      %p178 = scmp.lt.s32.totalorder %s15, 1
      %s179 = scalar_select %p178, %s15, 1
      %s180 = smul.addr %s179, 3
      %s181 = smul.addr %s180, 4
      %s182 = scalar_lea.vmem %s0, %s181
      %p183 = pneg %p36
      %p184 = pneg %p33
      %p185 = pneg %p57
      %p186 = pneg %p54
      %p187 = pneg %p78
      %p188 = pneg %p75
      %p189 = scmp.lt.s32.totalorder %s15, 1
      %s190 = scalar_select %p189, %s15, 1
      %s191 = smul.addr %s190, 3
      %s192 = smul.addr %s191, 4
      %s193 = scalar_lea.vmem %s3, %s192
      %p194 = pneg %p104
      %p195 = pneg %p101
      %p196 = pneg %p130
      %p197 = pneg %p127
      %p198 = scmp.lt.s32.totalorder %s15, 1
      %s199 = scalar_select %p198, %s15, 1
      %s200 = smul.addr %s199, 3
      %s201 = smul.addr %s200, 4
      %s202 = scalar_lea.vmem %s4, %s201
      %p203 = scmp.lt.s32.totalorder %s15, 1
      %s204 = scalar_select %p203, %s15, 1
      %s205 = smul.addr %s204, 3
      %s206 = smul.addr %s205, 4
      %s207 = scalar_lea.vmem %s0, %s206
      %p208 = scmp.lt.s32.totalorder %s15, 1
      %s209 = scalar_select %p208, %s15, 1
      %s210 = smul.addr %s209, 3
      %s211 = smul.addr %s210, 4
      %s212 = scalar_lea.vmem %s3, %s211
      %p213 = scmp.lt.s32.totalorder %s15, 1
      %s214 = scalar_select %p213, %s15, 1
      %s215 = smul.addr %s214, 3
      %s216 = smul.addr %s215, 4
      %s217 = scalar_lea.vmem %s4, %s216
      %v218 = vld [vmem:[%s212] sm:$0xff]
      %v219 = vld [vmem:[%s212 + $0x8] sm:$0xf]
      %v220 = vld [vmem:[%s207] sm:$0xff]
      %v221 = vld [vmem:[%s207 + $0x8] sm:$0xf]
      %v222 = vld [vmem:[%s1] sm:$0xf]
      %224 = vset.pattern.permute.xlu0 0
      %225 = vperm.xlu0 %224, %v222
      %v226 = vpop.permute.xlu0 %225
      %v228 = vunpack.c.l.s4 839922192
      %v229 = vunpack.c.0.s8 %v228
      %v230 = vperm.slane %v226, %v229
      %v232 = vmul.f32 %v220, %v230
      %v233 = vmul.f32 %v221, %v230
      %v234 = vld [vmem:[%s2] sm:$0xf]
      %236 = vset.pattern.permute.xlu0 0
      %237 = vperm.xlu0 %236, %v234
      %v238 = vpop.permute.xlu0 %237
      %v240 = vunpack.c.l.s4 839922192
      %v241 = vunpack.c.0.s8 %v240
      %v242 = vperm.slane %v238, %v241
      %v244 = vadd.f32 %v232, %v242
      %v245 = vadd.f32 %v233, %v242
      %v246 = vmul.f32 %v244, 0.5
      %v247 = vmul.f32 %v245, 0.5
      %v248 = vmul.f32 %v244, 0.70710677
      %v249 = vmul.f32 %v245, 0.70710677
      %vm250 = vcmp.ge.f32.partialorder %v248, 0.0
      %vm251 = vcmp.ge.f32.partialorder %v249, 0.0
      %v252 = vsel %vm250, 1.0, -1.0
      %v253 = vsel %vm251, 1.0, -1.0
      %v254 = vand.u32 2147483647, %v248
      %v255 = vand.u32 2147483647, %v249
      %v256 = vmul.f32 %v254, 0.3275911
      %v257 = vmul.f32 %v255, 0.3275911
      %v258 = vadd.f32 %v256, 1.0
      %v259 = vadd.f32 %v257, 1.0
      %v260 = vrcp.pop %v258
      %v261 = vmul.f32 %v258, %v260
      %v262 = vsub.f32 1.0, %v261
      %v263 = vmul.f32 %v260, %v262
      %v264 = vadd.f32 %v260, %v263
      %vm265 = vweird.f32 %v258
      %vm266 = vweird.f32 %v260
      %vm267 = vmor %vm265, %vm266
      %v268 = vsel %vm267, %v260, %v264
      %v269 = vand.u32 2147483647, %v258
      %vm270 = vcmp.eq.f32.partialorder %v269, 8.507059e+37
      %v271 = vand.u32 %v258, 2147483648
      %v272 = vor.u32 1.1754944e-38, %v271
      %v273 = vsel %vm270, %v272, %v268
      %v274 = vmul.f32 1.0, %v273
      %v275 = vrcp.pop %v259
      %v276 = vmul.f32 %v259, %v275
      %v277 = vsub.f32 1.0, %v276
      %v278 = vmul.f32 %v275, %v277
      %v279 = vadd.f32 %v275, %v278
      %vm280 = vweird.f32 %v259
      %vm281 = vweird.f32 %v275
      %vm282 = vmor %vm280, %vm281
      %v283 = vsel %vm282, %v275, %v279
      %v284 = vand.u32 2147483647, %v259
      %vm285 = vcmp.eq.f32.partialorder %v284, 8.507059e+37
      %v286 = vand.u32 %v259, 2147483648
      %v287 = vor.u32 1.1754944e-38, %v286
      %v288 = vsel %vm285, %v287, %v283
      %v289 = vmul.f32 1.0, %v288
      %v290 = vmul.f32 %v274, 1.0614054
      %v291 = vmul.f32 %v289, 1.0614054
      %v292 = vadd.f32 %v290, -1.4531521
      %v293 = vadd.f32 %v291, -1.4531521
      %v294 = vmul.f32 %v292, %v274
      %v295 = vmul.f32 %v293, %v289
      %v296 = vadd.f32 %v294, 1.4214138
      %v297 = vadd.f32 %v295, 1.4214138
      %v298 = vmul.f32 %v296, %v274
      %v299 = vmul.f32 %v297, %v289
      %v300 = vadd.f32 %v298, -0.28449672
      %v301 = vadd.f32 %v299, -0.28449672
      %v302 = vmul.f32 %v300, %v274
      %v303 = vmul.f32 %v301, %v289
      %v304 = vadd.f32 %v302, 0.2548296
      %v305 = vadd.f32 %v303, 0.2548296
      %v306 = vmul.f32 %v304, %v274
      %v307 = vmul.f32 %v305, %v289
      %v308 = vsub.f32 0.0, %v254
      %v309 = vsub.f32 0.0, %v255
      %v310 = vmul.f32 %v308, %v254
      %v311 = vmul.f32 %v309, %v255
      %v312 = vmul.f32 %v310, 1.442695
      %v313 = vpow.pop %v312
      %v314 = vmul.f32 %v311, 1.442695
      %v315 = vpow.pop %v314
      %v316 = vmul.f32 %v306, %v313
      %v317 = vmul.f32 %v307, %v315
      %v318 = vsub.f32 1.0, %v316
      %v319 = vsub.f32 1.0, %v317
      %v320 = vmul.f32 %v252, %v318
      %v321 = vmul.f32 %v253, %v319
      %v322 = vadd.f32 %v320, 1.0
      %v323 = vadd.f32 %v321, 1.0
      %v324 = vmul.f32 %v246, %v322
      %v325 = vmul.f32 %v247, %v323
      %v326 = vadd.f32 %v218, %v324
      %v327 = vadd.f32 %v219, %v325
      %v328 = vmul.f32 %v326, 0.7072136
      %v329 = vmul.f32 %v327, 0.7072136
      %330 = vst [vmem:[%s217] sm:$0xff] %v328
      %331 = vst [vmem:[%s217 + $0x8] sm:$0xf] %v329
      %p332 = scmp.lt.s32.totalorder %s15, 1
      %s333 = scalar_select %p332, %s15, 1
      %s334 = smul.addr %s333, 3
      %s335 = smul.addr %s334, 4
      %s336 = scalar_lea.vmem %s4, %s335
      // Predicated region
      $region37: #{residual_conv_block.5} parent=35 // pred_check
        %p337 = pneg %p127
      $region38: #{residual_conv_block.5} parent=35 // pred_check_branch
        %339 = sbr.rel (%p337) target = $region40
      $region39: #{residual_conv_block.5} parent=35 // pred_region
        _
      $region40: #{residual_conv_block.5} parent=35 // pred_fallthru
        _
    $region36: #{residual_conv_block.5} parent=5 // pred_fallthru
      _
    %p340 = scmp.le.s32.totalorder 2, %s10
    // Predicated region
    $region41: #{residual_conv_block.5} parent=5 // pred_check
      %p341 = pneg %p340
    $region42: #{residual_conv_block.5} parent=5 // pred_check_branch
      %343 = sbr.rel (%p341) target = $region44
    $region43: #{residual_conv_block.5} parent=5 // pred_region
      %s344 = ssub.s32 %s10, 2
      // Predicated region
      $region45: #{residual_conv_block.5} parent=43 // pred_check
        %p345 = pneg %p133
      $region46: #{residual_conv_block.5} parent=43 // pred_check_branch
        %347 = sbr.rel (%p345) target = $region48
      $region47: #{residual_conv_block.5} parent=43 // pred_region
        %p348 = scmp.lt.s32.totalorder %s16, 1
        %s349 = scalar_select %p348, %s16, 1
        %s350 = smul.addr %s349, 3
        %s351 = smul.addr %s350, 4
        %s352 = scalar_lea.vmem %s4, %s351
      $region48: #{residual_conv_block.5} parent=43 // pred_fallthru
        _
    $region44: #{residual_conv_block.5} parent=5 // pred_fallthru
      _
  $region6: #{residual_conv_block.5} parent=0 // loop_footer
    %s14 = sadd.s32 1, %s10
  $region7: #{residual_conv_block.5} parent=0 // loop_footer_branch
    %9 = sbr.rel target = $region3
  $region8: #{residual_conv_block.5} parent=0 // loop_exit
    _

// kernel: residual_conv_block.3
$region0: #{residual_conv_block.3}
  #allocation0 [shape = 'u32[]', space=smem, size = 0x4, offset = 0x4, fixed_abs, tag = 'smem constant byte address 0x4 - core index']
  #allocation1 [shape = 'u32[72,128]{1,0:T(1,128)}', space=vmem, size = 0x9000, scoped, tag = 'internal scratch']
  %s0 = inlined_call_operand.vmem [shape: f32[2,4,384], index: 0, kind: input, shape index: {}]
  %s1 = inlined_call_operand.vmem [shape: f32[4,36], index: 1, kind: input, shape index: {}]
  %s2 = inlined_call_operand.vmem [shape: f32[1,384], index: 2, kind: input, shape index: {}]
  %s3 = inlined_call_operand.vmem [shape: f32[2,4,384], index: 3, kind: output, shape index: {0}]
  %s4 = inlined_call_operand.vmem [shape: f32[2,4,2], index: 4, kind: output, shape index: {1}]
  %5 = xla_tuple %s3, %s4
  %s6 = sld [smem:[#allocation0]]
  $region53: #{residual_conv_block.3} parent=0
    _
  %s8 = ssub.s32 1, %s6
  %s9 = scalar_select 0, %s8, %s6
  loop: start=0, step=1, limit=4
  $region2: #{residual_conv_block.3} parent=0 // loop_pre_header
    _
  $region3: #{residual_conv_block.3} parent=0 // loop_header
    %s11 = sphi 0, %s15
    %p12 = scmp.ge.s32.totalorder %s11, 4
    %s21 = sphi 0, %s23
    %s24 = sphi 0, %s21
    %s25 = sphi 0, %s24
    %s41 = sphi 0, %s25
    %s45 = sphi 0, %s45
    %s47 = sphi 0, %s45
    %s48 = sphi 0, %s47
    %s62 = sphi 0, %s48
    %s66 = sphi 0, %s66
    %s68 = sphi 0, %s66
    %s69 = sphi 0, %s68
    %s83 = sphi 0, %s69
    %s89 = sphi 0, %s91
    %s92 = sphi 0, %s89
    %s93 = sphi 0, %s92
    %s109 = sphi 0, %s93
    %s115 = sphi 0, %s117
    %s118 = sphi 0, %s115
    %s119 = sphi 0, %s118
    %s135 = sphi 0, %s119
  $region4: #{residual_conv_block.3} parent=0 // loop_header_branch
    %14 = sbr.rel (%p12) target = $region8
  $region5: #{residual_conv_block.3} parent=0 // loop_body
    %s16 = ssub.s32 %s11, 1
    %s17 = ssub.s32 %s11, 2
    %s18 = sadd.s32 %s11, 1
    %s19 = ssub.s32 %s11, %s18
    %p20 = scmp.eq.s32.totalorder %s19, 0
    %s22 = sadd.s32 %s21, 1
    %s23 = scalar_select %p20, %s21, %s22
    %p26 = pneg %p20
    %p27 = scmp.eq.s32.totalorder %s11, 1
    %p28 = por %p26, %p27
    %p29 = scmp.ne.s32.totalorder %s21, %s24
    %p30 = scmp.eq.s32.totalorder %s11, 0
    %p31 = por %p29, %p30
    %p32 = scmp.ne.s32.totalorder %s21, %s24
    %p33 = scmp.eq.s32.totalorder %s16, 1
    %p34 = por %p32, %p33
    %p35 = scmp.ne.s32.totalorder %s24, %s25
    %p36 = scmp.eq.s32.totalorder %s16, 0
    %p37 = por %p35, %p36
    %p38 = scmp.ne.s32.totalorder %s24, %s25
    %p39 = scmp.eq.s32.totalorder %s17, 1
    %p40 = por %p38, %p39
    %p42 = scmp.ne.s32.totalorder %s25, %s41
    %p43 = scmp.eq.s32.totalorder %s17, 0
    %p44 = por %p42, %p43
    %s46 = sadd.s32 %s45, 1
    %p49 = scmp.eq.s32.totalorder %s11, 1
    %p50 = scmp.ne.s32.totalorder %s45, %s47
    %p51 = scmp.eq.s32.totalorder %s11, 0
    %p52 = por %p50, %p51
    %p53 = scmp.ne.s32.totalorder %s45, %s47
    %p54 = scmp.eq.s32.totalorder %s16, 1
    %p55 = por %p53, %p54
    %p56 = scmp.ne.s32.totalorder %s47, %s48
    %p57 = scmp.eq.s32.totalorder %s16, 0
    %p58 = por %p56, %p57
    %p59 = scmp.ne.s32.totalorder %s47, %s48
    %p60 = scmp.eq.s32.totalorder %s17, 1
    %p61 = por %p59, %p60
    %p63 = scmp.ne.s32.totalorder %s48, %s62
    %p64 = scmp.eq.s32.totalorder %s17, 0
    %p65 = por %p63, %p64
    %s67 = sadd.s32 %s66, 1
    %p70 = scmp.eq.s32.totalorder %s11, 1
    %p71 = scmp.ne.s32.totalorder %s66, %s68
    %p72 = scmp.eq.s32.totalorder %s11, 0
    %p73 = por %p71, %p72
    %p74 = scmp.ne.s32.totalorder %s66, %s68
    %p75 = scmp.eq.s32.totalorder %s16, 1
    %p76 = por %p74, %p75
    %p77 = scmp.ne.s32.totalorder %s68, %s69
    %p78 = scmp.eq.s32.totalorder %s16, 0
    %p79 = por %p77, %p78
    %p80 = scmp.ne.s32.totalorder %s68, %s69
    %p81 = scmp.eq.s32.totalorder %s17, 1
    %p82 = por %p80, %p81
    %p84 = scmp.ne.s32.totalorder %s69, %s83
    %p85 = scmp.eq.s32.totalorder %s17, 0
    %p86 = por %p84, %p85
    %s87 = ssub.s32 %s11, %s18
    %p88 = scmp.eq.s32.totalorder %s87, 0
    %s90 = sadd.s32 %s89, 1
    %s91 = scalar_select %p88, %s89, %s90
    %p94 = pneg %p88
    %p95 = scmp.eq.s32.totalorder %s11, 1
    %p96 = por %p94, %p95
    %p97 = scmp.ne.s32.totalorder %s89, %s92
    %p98 = scmp.eq.s32.totalorder %s11, 0
    %p99 = por %p97, %p98
    %p100 = scmp.ne.s32.totalorder %s89, %s92
    %p101 = scmp.eq.s32.totalorder %s16, 1
    %p102 = por %p100, %p101
    %p103 = scmp.ne.s32.totalorder %s92, %s93
    %p104 = scmp.eq.s32.totalorder %s16, 0
    %p105 = por %p103, %p104
    %p106 = scmp.ne.s32.totalorder %s92, %s93
    %p107 = scmp.eq.s32.totalorder %s17, 1
    %p108 = por %p106, %p107
    %p110 = scmp.ne.s32.totalorder %s93, %s109
    %p111 = scmp.eq.s32.totalorder %s17, 0
    %p112 = por %p110, %p111
    %s113 = ssub.s32 %s11, %s18
    %p114 = scmp.eq.s32.totalorder %s113, 0
    %s116 = sadd.s32 %s115, 1
    %s117 = scalar_select %p114, %s115, %s116
    %p120 = pneg %p114
    %p121 = scmp.eq.s32.totalorder %s11, 1
    %p122 = por %p120, %p121
    %p123 = scmp.ne.s32.totalorder %s115, %s118
    %p124 = scmp.eq.s32.totalorder %s11, 0
    %p125 = por %p123, %p124
    %p126 = scmp.ne.s32.totalorder %s115, %s118
    %p127 = scmp.eq.s32.totalorder %s16, 1
    %p128 = por %p126, %p127
    %p129 = scmp.ne.s32.totalorder %s118, %s119
    %p130 = scmp.eq.s32.totalorder %s16, 0
    %p131 = por %p129, %p130
    %p132 = scmp.ne.s32.totalorder %s118, %s119
    %p133 = scmp.eq.s32.totalorder %s17, 1
    %p134 = por %p132, %p133
    %p136 = scmp.ne.s32.totalorder %s119, %s135
    %p137 = scmp.eq.s32.totalorder %s17, 0
    %p138 = por %p136, %p137
    %p139 = scmp.le.s32.totalorder 1, %s11
    %p140 = scmp.lt.s32.totalorder %s11, 3
    %p141 = pnand %p139, %p140
    %p142 = pneg %p141
    // Predicated region
    $region9: #{residual_conv_block.3} parent=5 // pred_check
      _
    $region10: #{residual_conv_block.3} parent=5 // pred_check_branch
      %144 = sbr.rel (%p141) target = $region12
    $region11: #{residual_conv_block.3} parent=5 // pred_region
      %s145 = ssub.s32 %s11, 1
      // Predicated region
      $region13: #{residual_conv_block.3} parent=11 // pred_check
        %p146 = pneg %p58
      $region14: #{residual_conv_block.3} parent=11 // pred_check_branch
        %148 = sbr.rel (%p146) target = $region16
      $region15: #{residual_conv_block.3} parent=11 // pred_region
        _
      $region16: #{residual_conv_block.3} parent=11 // pred_fallthru
        _
      // Predicated region
      $region17: #{residual_conv_block.3} parent=11 // pred_check
        %p149 = pneg %p79
      $region18: #{residual_conv_block.3} parent=11 // pred_check_branch
        %151 = sbr.rel (%p149) target = $region20
      $region19: #{residual_conv_block.3} parent=11 // pred_region
        _
      $region20: #{residual_conv_block.3} parent=11 // pred_fallthru
        _
    $region12: #{residual_conv_block.3} parent=5 // pred_fallthru
      _
    %p152 = scmp.lt.s32.totalorder %s11, 2
    // Predicated region
    $region21: #{residual_conv_block.3} parent=5 // pred_check
      %p153 = pneg %p152
    $region22: #{residual_conv_block.3} parent=5 // pred_check_branch
      %155 = sbr.rel (%p153) target = $region24
    $region23: #{residual_conv_block.3} parent=5 // pred_region
      // Predicated region
      $region25: #{residual_conv_block.3} parent=23 // pred_check
        %p156 = pneg %p31
      $region26: #{residual_conv_block.3} parent=23 // pred_check_branch
        %158 = sbr.rel (%p156) target = $region28
      $region27: #{residual_conv_block.3} parent=23 // pred_region
        %p159 = scmp.lt.s32.totalorder %s11, 1
        %s160 = scalar_select %p159, %s11, 1
        %s161 = smul.addr %s160, 3
        %s162 = smul.addr %s161, 4
        %s163 = scalar_lea.vmem %s0, %s162
      $region28: #{residual_conv_block.3} parent=23 // pred_fallthru
        _
    $region24: #{residual_conv_block.3} parent=5 // pred_fallthru
      _
    %p164 = scmp.le.s32.totalorder 1, %s11
    %p165 = scmp.lt.s32.totalorder %s11, 3
    %p166 = pnand %p164, %p165
    %p167 = pneg %p166
    // Predicated region
    $region29: #{residual_conv_block.3} parent=5 // pred_check
      _
    $region30: #{residual_conv_block.3} parent=5 // pred_check_branch
      %169 = sbr.rel (%p166) target = $region32
    $region31: #{residual_conv_block.3} parent=5 // pred_region
      %s170 = ssub.s32 %s11, 1
      %p171 = scmp.lt.s32.totalorder %s16, 1
      %s172 = scalar_select %p171, %s16, 1
      %s173 = smul.addr %s172, 3
      %s174 = smul.addr %s173, 4
      %s175 = scalar_lea.vmem %s0, %s174
      %p176 = pneg %p37
      %p177 = pneg %p34
      %p178 = pneg %p58
      %p179 = pneg %p55
      %p180 = pneg %p79
      %p181 = pneg %p76
      %p182 = pneg %p105
      %p183 = pneg %p102
      %p184 = scmp.lt.s32.totalorder %s16, 1
      %s185 = scalar_select %p184, %s16, 1
      %s186 = smul.addr %s185, 3
      %s187 = smul.addr %s186, 4
      %s188 = scalar_lea.vmem %s3, %s187
      %p189 = pneg %p131
      %p190 = pneg %p128
      %p191 = scmp.lt.s32.totalorder %s16, 1
      %s192 = scalar_select %p191, %s16, 1
      %s193 = smul.addr %s192, 4
      %s194 = scalar_lea.vmem %s4, %s193
      %p195 = scmp.lt.s32.totalorder %s16, 1
      %s196 = scalar_select %p195, %s16, 1
      %s197 = smul.addr %s196, 3
      %s198 = smul.addr %s197, 4
      %s199 = scalar_lea.vmem %s0, %s198
      %p200 = scmp.lt.s32.totalorder %s16, 1
      %s201 = scalar_select %p200, %s16, 1
      %s202 = smul.addr %s201, 3
      %s203 = smul.addr %s202, 4
      %s204 = scalar_lea.vmem %s3, %s203
      %p205 = scmp.lt.s32.totalorder %s16, 1
      %s206 = scalar_select %p205, %s16, 1
      %s207 = smul.addr %s206, 4
      %s208 = scalar_lea.vmem %s4, %s207
      %v209 = vld [vmem:[%s2] sm:$0x7]
      %v210 = vld [vmem:[%s199] sm:$0xff]
      %v211 = vld [vmem:[%s199 + $0x8] sm:$0xf]
      %213 = vst [vmem:[#allocation1] ss:$2 sm:$0xff] %v211
      %v214 = vld.sshfl [vmem:[#allocation1] sm:$0xff pattern:$0x75316420]
      %215 = vrot.lane.b32.xlu0 %v214, 19
      %v216 = vpop.permute.xlu0 %215
      %219 = vst [vmem:[#allocation1] ss:$2 sm:$0xff] %v210
      %s220 = scalar_lea.vmem [#allocation1], 16
      %221 = vst [vmem:[%s220] ss:$2 sm:$0xff] %v211
      %v222 = vld.sshfl [vmem:[#allocation1] sm:$0xff pattern:$0x75316420]
      %v223 = vld.sshfl [vmem:[#allocation1 + $0x8] sm:$0xff pattern:$0x75316420]
      %v224 = vld.sshfl [vmem:[#allocation1 + $0x10] sm:$0xff pattern:$0x75316420]
      %225 = vrot.lane.b32.xlu0 %v222, 19
      %v226 = vpop.permute.xlu0 %225
      %227 = vrot.lane.b32.xlu0 %v223, 19
      %v228 = vpop.permute.xlu0 %227
      %229 = vrot.lane.b32.xlu0 %v224, 19
      %v230 = vpop.permute.xlu0 %229
      %vm231 = vcmask 154624
      %v232 = vsel %vm231, %v226, %v228
      %v233 = vsel %vm231, %v228, %v230
      %v237 = vsel %vm231, %v216, %v226
      %v238 = vld [vmem:[%s1] sm:$0xf]
      %240 = vset.pattern.permute.xlu0 0
      %241 = vperm.xlu0 %240, %v238
      %v242 = vpop.permute.xlu0 %241
      %v244 = vperm.slane %v237, 0
      %v245 = vperm.slane %v232, 0
      %v246 = vperm.slane %v233, 0
      %v247 = vmul.f32 %v242, %v244
      %v248 = vmul.f32 %v242, %v245
      %v249 = vmul.f32 %v242, %v246
      %v250 = vadd.f32 %v247, 0.0
      %v251 = vadd.f32 %v248, 0.0
      %v252 = vadd.f32 %v249, 0.0
      %253 = vset.pattern.permute.xlu0 1
      %254 = vperm.xlu0 %253, %v238
      %v255 = vpop.permute.xlu0 %254
      %v257 = vperm.slane %v237, 1
      %v258 = vperm.slane %v232, 1
      %v259 = vperm.slane %v233, 1
      %v260 = vmul.f32 %v255, %v257
      %v261 = vmul.f32 %v255, %v258
      %v262 = vmul.f32 %v255, %v259
      %v263 = vadd.f32 %v250, %v260
      %v264 = vadd.f32 %v251, %v261
      %v265 = vadd.f32 %v252, %v262
      %266 = vset.pattern.permute.xlu0 2
      %267 = vperm.xlu0 %266, %v238
      %v268 = vpop.permute.xlu0 %267
      %v270 = vperm.slane %v237, 2
      %v271 = vperm.slane %v232, 2
      %v272 = vperm.slane %v233, 2
      %v273 = vmul.f32 %v268, %v270
      %v274 = vmul.f32 %v268, %v271
      %v275 = vmul.f32 %v268, %v272
      %v276 = vadd.f32 %v263, %v273
      %v277 = vadd.f32 %v264, %v274
      %v278 = vadd.f32 %v265, %v275
      %279 = vset.pattern.permute.xlu0 3
      %280 = vperm.xlu0 %279, %v238
      %v281 = vpop.permute.xlu0 %280
      %v283 = vperm.slane %v237, 3
      %v284 = vperm.slane %v232, 3
      %v285 = vperm.slane %v233, 3
      %v286 = vmul.f32 %v281, %v283
      %v287 = vmul.f32 %v281, %v284
      %v288 = vmul.f32 %v281, %v285
      %v289 = vadd.f32 %v276, %v286
      %v290 = vadd.f32 %v277, %v287
      %v291 = vadd.f32 %v278, %v288
      %292 = vst [vmem:[#allocation1] ss:$2 sm:$0xff] %v211
      %v293 = vld.sshfl [vmem:[#allocation1] sm:$0xff pattern:$0x75316420]
      %294 = vrot.lane.b32.xlu0 %v293, 18
      %v295 = vpop.permute.xlu0 %294
      %297 = vst [vmem:[#allocation1] ss:$2 sm:$0xff] %v210
      %s298 = scalar_lea.vmem [#allocation1], 16
      %299 = vst [vmem:[%s298] ss:$2 sm:$0xff] %v211
      %v300 = vld.sshfl [vmem:[#allocation1] sm:$0xff pattern:$0x75316420]
      %v301 = vld.sshfl [vmem:[#allocation1 + $0x8] sm:$0xff pattern:$0x75316420]
      %v302 = vld.sshfl [vmem:[#allocation1 + $0x10] sm:$0xff pattern:$0x75316420]
      %303 = vrot.lane.b32.xlu0 %v300, 18
      %v304 = vpop.permute.xlu0 %303
      %305 = vrot.lane.b32.xlu0 %v301, 18
      %v306 = vpop.permute.xlu0 %305
      %307 = vrot.lane.b32.xlu0 %v302, 18
      %v308 = vpop.permute.xlu0 %307
      %vm309 = vcmask 146432
      %v310 = vsel %vm309, %v304, %v306
      %v311 = vsel %vm309, %v306, %v308
      %v315 = vsel %vm309, %v295, %v304
      %v316 = vld [vmem:[%s1] sm:$0xf]
      %318 = vset.pattern.permute.xlu0 4
      %319 = vperm.xlu0 %318, %v316
      %v320 = vpop.permute.xlu0 %319
      %v322 = vperm.slane %v315, 0
      %v323 = vperm.slane %v310, 0
      %v324 = vperm.slane %v311, 0
      %v325 = vmul.f32 %v320, %v322
      %v326 = vmul.f32 %v320, %v323
      %v327 = vmul.f32 %v320, %v324
      %v328 = vadd.f32 %v289, %v325
      %v329 = vadd.f32 %v290, %v326
      %v330 = vadd.f32 %v291, %v327
      %331 = vset.pattern.permute.xlu0 5
      %332 = vperm.xlu0 %331, %v316
      %v333 = vpop.permute.xlu0 %332
      %v335 = vperm.slane %v315, 1
      %v336 = vperm.slane %v310, 1
      %v337 = vperm.slane %v311, 1
      %v338 = vmul.f32 %v333, %v335
      %v339 = vmul.f32 %v333, %v336
      %v340 = vmul.f32 %v333, %v337
      %v341 = vadd.f32 %v328, %v338
      %v342 = vadd.f32 %v329, %v339
      %v343 = vadd.f32 %v330, %v340
      %344 = vset.pattern.permute.xlu0 6
      %345 = vperm.xlu0 %344, %v316
      %v346 = vpop.permute.xlu0 %345
      %v348 = vperm.slane %v315, 2
      %v349 = vperm.slane %v310, 2
      %v350 = vperm.slane %v311, 2
      %v351 = vmul.f32 %v346, %v348
      %v352 = vmul.f32 %v346, %v349
      %v353 = vmul.f32 %v346, %v350
      %v354 = vadd.f32 %v341, %v351
      %v355 = vadd.f32 %v342, %v352
      %v356 = vadd.f32 %v343, %v353
      %357 = vset.pattern.permute.xlu0 7
      %358 = vperm.xlu0 %357, %v316
      %v359 = vpop.permute.xlu0 %358
      %v361 = vperm.slane %v315, 3
      %v362 = vperm.slane %v310, 3
      %v363 = vperm.slane %v311, 3
      %v364 = vmul.f32 %v359, %v361
      %v365 = vmul.f32 %v359, %v362
      %v366 = vmul.f32 %v359, %v363
      %v367 = vadd.f32 %v354, %v364
      %v368 = vadd.f32 %v355, %v365
      %v369 = vadd.f32 %v356, %v366
      %370 = vst [vmem:[#allocation1] ss:$2 sm:$0xff] %v211
      %v371 = vld.sshfl [vmem:[#allocation1] sm:$0xff pattern:$0x75316420]
      %372 = vrot.lane.b32.xlu0 %v371, 17
      %v373 = vpop.permute.xlu0 %372
      %375 = vst [vmem:[#allocation1] ss:$2 sm:$0xff] %v210
      %s376 = scalar_lea.vmem [#allocation1], 16
      %377 = vst [vmem:[%s376] ss:$2 sm:$0xff] %v211
      %v378 = vld.sshfl [vmem:[#allocation1] sm:$0xff pattern:$0x75316420]
      %v379 = vld.sshfl [vmem:[#allocation1 + $0x8] sm:$0xff pattern:$0x75316420]
      %v380 = vld.sshfl [vmem:[#allocation1 + $0x10] sm:$0xff pattern:$0x75316420]
      %381 = vrot.lane.b32.xlu0 %v378, 17
      %v382 = vpop.permute.xlu0 %381
      %383 = vrot.lane.b32.xlu0 %v379, 17
      %v384 = vpop.permute.xlu0 %383
      %385 = vrot.lane.b32.xlu0 %v380, 17
      %v386 = vpop.permute.xlu0 %385
      %vm387 = vcmask 138240
      %v388 = vsel %vm387, %v382, %v384
      %v389 = vsel %vm387, %v384, %v386
      %v393 = vsel %vm387, %v373, %v382
      %v394 = vld [vmem:[%s1] sm:$0xf]
      %396 = vset.pattern.permute.xlu0 8
      %397 = vperm.xlu0 %396, %v394
      %v398 = vpop.permute.xlu0 %397
      %v400 = vperm.slane %v393, 0
      %v401 = vperm.slane %v388, 0
      %v402 = vperm.slane %v389, 0
      %v403 = vmul.f32 %v398, %v400
      %v404 = vmul.f32 %v398, %v401
      %v405 = vmul.f32 %v398, %v402
      %v406 = vadd.f32 %v367, %v403
      %v407 = vadd.f32 %v368, %v404
      %v408 = vadd.f32 %v369, %v405
      %409 = vset.pattern.permute.xlu0 9
      %410 = vperm.xlu0 %409, %v394
      %v411 = vpop.permute.xlu0 %410
      %v413 = vperm.slane %v393, 1
      %v414 = vperm.slane %v388, 1
      %v415 = vperm.slane %v389, 1
      %v416 = vmul.f32 %v411, %v413
      %v417 = vmul.f32 %v411, %v414
      %v418 = vmul.f32 %v411, %v415
      %v419 = vadd.f32 %v406, %v416
      %v420 = vadd.f32 %v407, %v417
      %v421 = vadd.f32 %v408, %v418
      %422 = vset.pattern.permute.xlu0 10
      %423 = vperm.xlu0 %422, %v394
      %v424 = vpop.permute.xlu0 %423
      %v426 = vperm.slane %v393, 2
      %v427 = vperm.slane %v388, 2
      %v428 = vperm.slane %v389, 2
      %v429 = vmul.f32 %v424, %v426
      %v430 = vmul.f32 %v424, %v427
      %v431 = vmul.f32 %v424, %v428
      %v432 = vadd.f32 %v419, %v429
      %v433 = vadd.f32 %v420, %v430
      %v434 = vadd.f32 %v421, %v431
      %435 = vset.pattern.permute.xlu0 11
      %436 = vperm.xlu0 %435, %v394
      %v437 = vpop.permute.xlu0 %436
      %v439 = vperm.slane %v393, 3
      %v440 = vperm.slane %v388, 3
      %v441 = vperm.slane %v389, 3
      %v442 = vmul.f32 %v437, %v439
      %v443 = vmul.f32 %v437, %v440
      %v444 = vmul.f32 %v437, %v441
      %v445 = vadd.f32 %v432, %v442
      %v446 = vadd.f32 %v433, %v443
      %v447 = vadd.f32 %v434, %v444
      %448 = vst [vmem:[#allocation1] ss:$2 sm:$0xff] %v211
      %v449 = vld.sshfl [vmem:[#allocation1] sm:$0xff pattern:$0x75316420]
      %450 = vrot.lane.b32.xlu0 %v449, 1
      %v451 = vpop.permute.xlu0 %450
      %453 = vst [vmem:[#allocation1] ss:$2 sm:$0xff] %v210
      %s454 = scalar_lea.vmem [#allocation1], 16
      %455 = vst [vmem:[%s454] ss:$2 sm:$0xff] %v211
      %v456 = vld.sshfl [vmem:[#allocation1] sm:$0xff pattern:$0x75316420]
      %v457 = vld.sshfl [vmem:[#allocation1 + $0x8] sm:$0xff pattern:$0x75316420]
      %v458 = vld.sshfl [vmem:[#allocation1 + $0x10] sm:$0xff pattern:$0x75316420]
      %459 = vrot.lane.b32.xlu0 %v456, 1
      %v460 = vpop.permute.xlu0 %459
      %461 = vrot.lane.b32.xlu0 %v457, 1
      %v462 = vpop.permute.xlu0 %461
      %463 = vrot.lane.b32.xlu0 %v458, 1
      %v464 = vpop.permute.xlu0 %463
      %vm465 = vcmask 7168
      %v466 = vsel %vm465, %v460, %v462
      %v467 = vsel %vm465, %v462, %v464
      %v471 = vsel %vm465, %v451, %v460
      %v472 = vld [vmem:[%s1] sm:$0xf]
      %474 = vset.pattern.permute.xlu0 12
      %475 = vperm.xlu0 %474, %v472
      %v476 = vpop.permute.xlu0 %475
      %v478 = vperm.slane %v471, 0
      %v479 = vperm.slane %v466, 0
      %v480 = vperm.slane %v467, 0
      %v481 = vmul.f32 %v476, %v478
      %v482 = vmul.f32 %v476, %v479
      %v483 = vmul.f32 %v476, %v480
      %v484 = vadd.f32 %v445, %v481
      %v485 = vadd.f32 %v446, %v482
      %v486 = vadd.f32 %v447, %v483
      %487 = vset.pattern.permute.xlu0 13
      %488 = vperm.xlu0 %487, %v472
      %v489 = vpop.permute.xlu0 %488
      %v491 = vperm.slane %v471, 1
      %v492 = vperm.slane %v466, 1
      %v493 = vperm.slane %v467, 1
      %v494 = vmul.f32 %v489, %v491
      %v495 = vmul.f32 %v489, %v492
      %v496 = vmul.f32 %v489, %v493
      %v497 = vadd.f32 %v484, %v494
      %v498 = vadd.f32 %v485, %v495
      %v499 = vadd.f32 %v486, %v496
      %500 = vset.pattern.permute.xlu0 14
      %501 = vperm.xlu0 %500, %v472
      %v502 = vpop.permute.xlu0 %501
      %v504 = vperm.slane %v471, 2
      %v505 = vperm.slane %v466, 2
      %v506 = vperm.slane %v467, 2
      %v507 = vmul.f32 %v502, %v504
      %v508 = vmul.f32 %v502, %v505
      %v509 = vmul.f32 %v502, %v506
      %v510 = vadd.f32 %v497, %v507
      %v511 = vadd.f32 %v498, %v508
      %v512 = vadd.f32 %v499, %v509
      %513 = vset.pattern.permute.xlu0 15
      %514 = vperm.xlu0 %513, %v472
      %v515 = vpop.permute.xlu0 %514
      %v517 = vperm.slane %v471, 3
      %v518 = vperm.slane %v466, 3
      %v519 = vperm.slane %v467, 3
      %v520 = vmul.f32 %v515, %v517
      %v521 = vmul.f32 %v515, %v518
      %v522 = vmul.f32 %v515, %v519
      %v523 = vadd.f32 %v510, %v520
      %v524 = vadd.f32 %v511, %v521
      %v525 = vadd.f32 %v512, %v522
      %526 = vset.pattern.permute.xlu0 16
      %527 = vperm.xlu0 %526, %v472
      %v528 = vpop.permute.xlu0 %527
      %v530 = vperm.slane %v210, 0
      %v531 = vperm.slane %v210, 4
      %v532 = vperm.slane %v211, 0
      %v536 = vperm.slane %v530, 0
      %v537 = vperm.slane %v531, 0
      %v538 = vperm.slane %v532, 0
      %v539 = vmul.f32 %v528, %v536
      %v540 = vmul.f32 %v528, %v537
      %v541 = vmul.f32 %v528, %v538
      %v542 = vadd.f32 %v523, %v539
      %v543 = vadd.f32 %v524, %v540
      %v544 = vadd.f32 %v525, %v541
      %545 = vset.pattern.permute.xlu0 17
      %546 = vperm.xlu0 %545, %v472
      %v547 = vpop.permute.xlu0 %546
      %v549 = vperm.slane %v210, 1
      %v550 = vperm.slane %v210, 5
      %v551 = vperm.slane %v211, 1
      %v555 = vperm.slane %v549, 1
      %v556 = vperm.slane %v550, 1
      %v557 = vperm.slane %v551, 1
      %v558 = vmul.f32 %v547, %v555
      %v559 = vmul.f32 %v547, %v556
      %v560 = vmul.f32 %v547, %v557
      %v561 = vadd.f32 %v542, %v558
      %v562 = vadd.f32 %v543, %v559
      %v563 = vadd.f32 %v544, %v560
      %564 = vset.pattern.permute.xlu0 18
      %565 = vperm.xlu0 %564, %v472
      %v566 = vpop.permute.xlu0 %565
      %v568 = vperm.slane %v210, 2
      %v569 = vperm.slane %v210, 6
      %v570 = vperm.slane %v211, 2
      %v574 = vperm.slane %v568, 2
      %v575 = vperm.slane %v569, 2
      %v576 = vperm.slane %v570, 2
      %v577 = vmul.f32 %v566, %v574
      %v578 = vmul.f32 %v566, %v575
      %v579 = vmul.f32 %v566, %v576
      %v580 = vadd.f32 %v561, %v577
      %v581 = vadd.f32 %v562, %v578
      %v582 = vadd.f32 %v563, %v579
      %583 = vset.pattern.permute.xlu0 19
      %584 = vperm.xlu0 %583, %v472
      %v585 = vpop.permute.xlu0 %584
      %v587 = vperm.slane %v210, 3
      %v588 = vperm.slane %v210, 7
      %v589 = vperm.slane %v211, 3
      %v593 = vperm.slane %v587, 3
      %v594 = vperm.slane %v588, 3
      %v595 = vperm.slane %v589, 3
      %v596 = vmul.f32 %v585, %v593
      %v597 = vmul.f32 %v585, %v594
      %v598 = vmul.f32 %v585, %v595
      %v599 = vadd.f32 %v580, %v596
      %v600 = vadd.f32 %v581, %v597
      %v601 = vadd.f32 %v582, %v598
      %602 = vst [vmem:[#allocation1] ss:$2 sm:$0xff] %v210
      %s603 = scalar_lea.vmem [#allocation1], 16
      %604 = vst [vmem:[%s603] ss:$2 sm:$0xff] %v211
      %v605 = vld.sshfl [vmem:[#allocation1] sm:$0xff pattern:$0x75316420]
      %v606 = vld.sshfl [vmem:[#allocation1 + $0x8] sm:$0xff pattern:$0x75316420]
      %v607 = vld.sshfl [vmem:[#allocation1 + $0x10] sm:$0xff pattern:$0x75316420]
      %608 = vrot.lane.b32.xlu0 %v605, 127
      %v609 = vpop.permute.xlu0 %608
      %610 = vrot.lane.b32.xlu0 %v606, 127
      %v611 = vpop.permute.xlu0 %610
      %612 = vrot.lane.b32.xlu0 %v607, 127
      %v613 = vpop.permute.xlu0 %612
      %vm614 = vcmask 1039360
      %v615 = vsel %vm614, %v609, %v611
      %v616 = vsel %vm614, %v611, %v613
      %620 = vst [vmem:[#allocation1] ss:$2 sm:$0xff] %v210
      %v621 = vld.sshfl [vmem:[#allocation1] sm:$0xff pattern:$0x75316420]
      %622 = vrot.lane.b32.xlu0 %v621, 127
      %v623 = vpop.permute.xlu0 %622
      %v625 = vsel %vm614, %v613, %v623
      %v626 = vld [vmem:[%s1] sm:$0xf]
      %628 = vset.pattern.permute.xlu0 20
      %629 = vperm.xlu0 %628, %v626
      %v630 = vpop.permute.xlu0 %629
      %v632 = vperm.slane %v615, 0
      %v633 = vperm.slane %v616, 0
      %v634 = vperm.slane %v625, 0
      %v635 = vmul.f32 %v630, %v632
      %v636 = vmul.f32 %v630, %v633
      %v637 = vmul.f32 %v630, %v634
      %v638 = vadd.f32 %v599, %v635
      %v639 = vadd.f32 %v600, %v636
      %v640 = vadd.f32 %v601, %v637
      %641 = vset.pattern.permute.xlu0 21
      %642 = vperm.xlu0 %641, %v626
      %v643 = vpop.permute.xlu0 %642
      %v645 = vperm.slane %v615, 1
      %v646 = vperm.slane %v616, 1
      %v647 = vperm.slane %v625, 1
      %v648 = vmul.f32 %v643, %v645
      %v649 = vmul.f32 %v643, %v646
      %v650 = vmul.f32 %v643, %v647
      %v651 = vadd.f32 %v638, %v648
      %v652 = vadd.f32 %v639, %v649
      %v653 = vadd.f32 %v640, %v650
      %654 = vset.pattern.permute.xlu0 22
      %655 = vperm.xlu0 %654, %v626
      %v656 = vpop.permute.xlu0 %655
      %v658 = vperm.slane %v615, 2
      %v659 = vperm.slane %v616, 2
      %v660 = vperm.slane %v625, 2
      %v661 = vmul.f32 %v656, %v658
      %v662 = vmul.f32 %v656, %v659
      %v663 = vmul.f32 %v656, %v660
      %v664 = vadd.f32 %v651, %v661
      %v665 = vadd.f32 %v652, %v662
      %v666 = vadd.f32 %v653, %v663
      %667 = vset.pattern.permute.xlu0 23
      %668 = vperm.xlu0 %667, %v626
      %v669 = vpop.permute.xlu0 %668
      %v671 = vperm.slane %v615, 3
      %v672 = vperm.slane %v616, 3
      %v673 = vperm.slane %v625, 3
      %v674 = vmul.f32 %v669, %v671
      %v675 = vmul.f32 %v669, %v672
      %v676 = vmul.f32 %v669, %v673
      %v677 = vadd.f32 %v664, %v674
      %v678 = vadd.f32 %v665, %v675
      %v679 = vadd.f32 %v666, %v676
      %680 = vst [vmem:[#allocation1] ss:$2 sm:$0xff] %v210
      %s681 = scalar_lea.vmem [#allocation1], 16
      %682 = vst [vmem:[%s681] ss:$2 sm:$0xff] %v211
      %v683 = vld.sshfl [vmem:[#allocation1] sm:$0xff pattern:$0x75316420]
      %v684 = vld.sshfl [vmem:[#allocation1 + $0x8] sm:$0xff pattern:$0x75316420]
      %v685 = vld.sshfl [vmem:[#allocation1 + $0x10] sm:$0xff pattern:$0x75316420]
      %686 = vrot.lane.b32.xlu0 %v683, 111
      %v687 = vpop.permute.xlu0 %686
      %688 = vrot.lane.b32.xlu0 %v684, 111
      %v689 = vpop.permute.xlu0 %688
      %690 = vrot.lane.b32.xlu0 %v685, 111
      %v691 = vpop.permute.xlu0 %690
      %vm692 = vcmask 908288
      %v693 = vsel %vm692, %v687, %v689
      %v694 = vsel %vm692, %v689, %v691
      %698 = vst [vmem:[#allocation1] ss:$2 sm:$0xff] %v210
      %v699 = vld.sshfl [vmem:[#allocation1] sm:$0xff pattern:$0x75316420]
      %700 = vrot.lane.b32.xlu0 %v699, 111
      %v701 = vpop.permute.xlu0 %700
      %v703 = vsel %vm692, %v691, %v701
      %v704 = vld [vmem:[%s1] sm:$0xf]
      %706 = vset.pattern.permute.xlu0 24
      %707 = vperm.xlu0 %706, %v704
      %v708 = vpop.permute.xlu0 %707
      %v710 = vperm.slane %v693, 0
      %v711 = vperm.slane %v694, 0
      %v712 = vperm.slane %v703, 0
      %v713 = vmul.f32 %v708, %v710
      %v714 = vmul.f32 %v708, %v711
      %v715 = vmul.f32 %v708, %v712
      %v716 = vadd.f32 %v677, %v713
      %v717 = vadd.f32 %v678, %v714
      %v718 = vadd.f32 %v679, %v715
      %719 = vset.pattern.permute.xlu0 25
      %720 = vperm.xlu0 %719, %v704
      %v721 = vpop.permute.xlu0 %720
      %v723 = vperm.slane %v693, 1
      %v724 = vperm.slane %v694, 1
      %v725 = vperm.slane %v703, 1
      %v726 = vmul.f32 %v721, %v723
      %v727 = vmul.f32 %v721, %v724
      %v728 = vmul.f32 %v721, %v725
      %v729 = vadd.f32 %v716, %v726
      %v730 = vadd.f32 %v717, %v727
      %v731 = vadd.f32 %v718, %v728
      %732 = vset.pattern.permute.xlu0 26
      %733 = vperm.xlu0 %732, %v704
      %v734 = vpop.permute.xlu0 %733
      %v736 = vperm.slane %v693, 2
      %v737 = vperm.slane %v694, 2
      %v738 = vperm.slane %v703, 2
      %v739 = vmul.f32 %v734, %v736
      %v740 = vmul.f32 %v734, %v737
      %v741 = vmul.f32 %v734, %v738
      %v742 = vadd.f32 %v729, %v739
      %v743 = vadd.f32 %v730, %v740
      %v744 = vadd.f32 %v731, %v741
      %745 = vset.pattern.permute.xlu0 27
      %746 = vperm.xlu0 %745, %v704
      %v747 = vpop.permute.xlu0 %746
      %v749 = vperm.slane %v693, 3
      %v750 = vperm.slane %v694, 3
      %v751 = vperm.slane %v703, 3
      %v752 = vmul.f32 %v747, %v749
      %v753 = vmul.f32 %v747, %v750
      %v754 = vmul.f32 %v747, %v751
      %v755 = vadd.f32 %v742, %v752
      %v756 = vadd.f32 %v743, %v753
      %v757 = vadd.f32 %v744, %v754
      %758 = vst [vmem:[#allocation1] ss:$2 sm:$0xff] %v210
      %s759 = scalar_lea.vmem [#allocation1], 16
      %760 = vst [vmem:[%s759] ss:$2 sm:$0xff] %v211
      %v761 = vld.sshfl [vmem:[#allocation1] sm:$0xff pattern:$0x75316420]
      %v762 = vld.sshfl [vmem:[#allocation1 + $0x8] sm:$0xff pattern:$0x75316420]
      %v763 = vld.sshfl [vmem:[#allocation1 + $0x10] sm:$0xff pattern:$0x75316420]
      %764 = vrot.lane.b32.xlu0 %v761, 110
      %v765 = vpop.permute.xlu0 %764
      %766 = vrot.lane.b32.xlu0 %v762, 110
      %v767 = vpop.permute.xlu0 %766
      %768 = vrot.lane.b32.xlu0 %v763, 110
      %v769 = vpop.permute.xlu0 %768
      %vm770 = vcmask 900096
      %v771 = vsel %vm770, %v765, %v767
      %v772 = vsel %vm770, %v767, %v769
      %776 = vst [vmem:[#allocation1] ss:$2 sm:$0xff] %v210
      %v777 = vld.sshfl [vmem:[#allocation1] sm:$0xff pattern:$0x75316420]
      %778 = vrot.lane.b32.xlu0 %v777, 110
      %v779 = vpop.permute.xlu0 %778
      %v781 = vsel %vm770, %v769, %v779
      %v782 = vld [vmem:[%s1] sm:$0xf]
      %784 = vset.pattern.permute.xlu0 28
      %785 = vperm.xlu0 %784, %v782
      %v786 = vpop.permute.xlu0 %785
      %v788 = vperm.slane %v771, 0
      %v789 = vperm.slane %v772, 0
      %v790 = vperm.slane %v781, 0
      %v791 = vmul.f32 %v786, %v788
      %v792 = vmul.f32 %v786, %v789
      %v793 = vmul.f32 %v786, %v790
      %v794 = vadd.f32 %v755, %v791
      %v795 = vadd.f32 %v756, %v792
      %v796 = vadd.f32 %v757, %v793
      %797 = vset.pattern.permute.xlu0 29
      %798 = vperm.xlu0 %797, %v782
      %v799 = vpop.permute.xlu0 %798
      %v801 = vperm.slane %v771, 1
      %v802 = vperm.slane %v772, 1
      %v803 = vperm.slane %v781, 1
      %v804 = vmul.f32 %v799, %v801
      %v805 = vmul.f32 %v799, %v802
      %v806 = vmul.f32 %v799, %v803
      %v807 = vadd.f32 %v794, %v804
      %v808 = vadd.f32 %v795, %v805
      %v809 = vadd.f32 %v796, %v806
      %810 = vset.pattern.permute.xlu0 30
      %811 = vperm.xlu0 %810, %v782
      %v812 = vpop.permute.xlu0 %811
      %v814 = vperm.slane %v771, 2
      %v815 = vperm.slane %v772, 2
      %v816 = vperm.slane %v781, 2
      %v817 = vmul.f32 %v812, %v814
      %v818 = vmul.f32 %v812, %v815
      %v819 = vmul.f32 %v812, %v816
      %v820 = vadd.f32 %v807, %v817
      %v821 = vadd.f32 %v808, %v818
      %v822 = vadd.f32 %v809, %v819
      %823 = vset.pattern.permute.xlu0 31
      %824 = vperm.xlu0 %823, %v782
      %v825 = vpop.permute.xlu0 %824
      %v827 = vperm.slane %v771, 3
      %v828 = vperm.slane %v772, 3
      %v829 = vperm.slane %v781, 3
      %v830 = vmul.f32 %v825, %v827
      %v831 = vmul.f32 %v825, %v828
      %v832 = vmul.f32 %v825, %v829
      %v833 = vadd.f32 %v820, %v830
      %v834 = vadd.f32 %v821, %v831
      %v835 = vadd.f32 %v822, %v832
      %836 = vst [vmem:[#allocation1] ss:$2 sm:$0xff] %v210
      %s837 = scalar_lea.vmem [#allocation1], 16
      %838 = vst [vmem:[%s837] ss:$2 sm:$0xff] %v211
      %v839 = vld.sshfl [vmem:[#allocation1] sm:$0xff pattern:$0x75316420]
      %v840 = vld.sshfl [vmem:[#allocation1 + $0x8] sm:$0xff pattern:$0x75316420]
      %v841 = vld.sshfl [vmem:[#allocation1 + $0x10] sm:$0xff pattern:$0x75316420]
      %842 = vrot.lane.b32.xlu0 %v839, 109
      %v843 = vpop.permute.xlu0 %842
      %844 = vrot.lane.b32.xlu0 %v840, 109
      %v845 = vpop.permute.xlu0 %844
      %846 = vrot.lane.b32.xlu0 %v841, 109
      %v847 = vpop.permute.xlu0 %846
      %vm848 = vcmask 891904
      %v849 = vsel %vm848, %v843, %v845
      %v850 = vsel %vm848, %v845, %v847
      %854 = vst [vmem:[#allocation1] ss:$2 sm:$0xff] %v210
      %v855 = vld.sshfl [vmem:[#allocation1] sm:$0xff pattern:$0x75316420]
      %856 = vrot.lane.b32.xlu0 %v855, 109
      %v857 = vpop.permute.xlu0 %856
      %v859 = vsel %vm848, %v847, %v857
      %v860 = vld [vmem:[%s1] sm:$0xf]
      %862 = vset.pattern.permute.xlu0 32
      %863 = vperm.xlu0 %862, %v860
      %v864 = vpop.permute.xlu0 %863
      %v866 = vperm.slane %v849, 0
      %v867 = vperm.slane %v850, 0
      %v868 = vperm.slane %v859, 0
      %v869 = vmul.f32 %v864, %v866
      %v870 = vmul.f32 %v864, %v867
      %v871 = vmul.f32 %v864, %v868
      %v872 = vadd.f32 %v833, %v869
      %v873 = vadd.f32 %v834, %v870
      %v874 = vadd.f32 %v835, %v871
      %875 = vset.pattern.permute.xlu0 33
      %876 = vperm.xlu0 %875, %v860
      %v877 = vpop.permute.xlu0 %876
      %v879 = vperm.slane %v849, 1
      %v880 = vperm.slane %v850, 1
      %v881 = vperm.slane %v859, 1
      %v882 = vmul.f32 %v877, %v879
      %v883 = vmul.f32 %v877, %v880
      %v884 = vmul.f32 %v877, %v881
      %v885 = vadd.f32 %v872, %v882
      %v886 = vadd.f32 %v873, %v883
      %v887 = vadd.f32 %v874, %v884
      %888 = vset.pattern.permute.xlu0 34
      %889 = vperm.xlu0 %888, %v860
      %v890 = vpop.permute.xlu0 %889
      %v892 = vperm.slane %v849, 2
      %v893 = vperm.slane %v850, 2
      %v894 = vperm.slane %v859, 2
      %v895 = vmul.f32 %v890, %v892
      %v896 = vmul.f32 %v890, %v893
      %v897 = vmul.f32 %v890, %v894
      %v898 = vadd.f32 %v885, %v895
      %v899 = vadd.f32 %v886, %v896
      %v900 = vadd.f32 %v887, %v897
      %901 = vset.pattern.permute.xlu0 35
      %902 = vperm.xlu0 %901, %v860
      %v903 = vpop.permute.xlu0 %902
      %v905 = vperm.slane %v849, 3
      %v906 = vperm.slane %v850, 3
      %v907 = vperm.slane %v859, 3
      %v908 = vmul.f32 %v903, %v905
      %v909 = vmul.f32 %v903, %v906
      %v910 = vmul.f32 %v903, %v907
      %v911 = vadd.f32 %v898, %v908
      %v912 = vadd.f32 %v899, %v909
      %v913 = vadd.f32 %v900, %v910
      %v915 = vperm.slane %v209, 0
      %v916 = vperm.slane %v209, 1
      %v917 = vperm.slane %v209, 2
      %v921 = vmul.f32 %v911, %v915
      %v922 = vmul.f32 %v912, %v916
      %v923 = vmul.f32 %v913, %v917
      %v926 = vrot.slane %v922, 4
      %vm927 = vcmask 1043456
      %v928 = vsel %vm927, %v921, %v926
      %930 = vst [vmem:[%s204] sm:$0xff] %v928
      %931 = vst [vmem:[%s204 + $0x8] sm:$0xf] %v923
      %v932 = vsel %vm927, %v921, 0.0
      %v933 = vsel %vm927, %v922, 0.0
      %v934 = vadd.f32 %v932, %v933
      %v935 = vsel %vm927, %v923, 0.0
      %v936 = vadd.f32 %v934, %v935
      %937 = vadd.xlane.f32.xlu0 %v936
      %v938 = vpop.xlane.xlu0 %937
      %v939 = vmul.f32 %v938, 0.00390625
      %v940 = vsub.f32 %v921, %v939
      %v941 = vsub.f32 %v922, %v939
      %v942 = vsub.f32 %v923, %v939
      %v943 = vmul.f32 %v940, %v915
      %v944 = vmul.f32 %v941, %v916
      %v945 = vmul.f32 %v942, %v917
      %v946 = vmul.f32 %v943, %v943
      %v947 = vmul.f32 %v944, %v944
      %v948 = vmul.f32 %v945, %v945
      %v949 = vsel %vm927, %v946, 0.0
      %v950 = vsel %vm927, %v947, 0.0
      %v951 = vadd.f32 %v949, %v950
      %v952 = vsel %vm927, %v948, 0.0
      %v953 = vadd.f32 %v951, %v952
      %954 = vadd.xlane.f32.xlu0 %v953
      %v955 = vpop.xlane.xlu0 %954
      %v956 = vsel %vm465, %v938, %v955
      %vm957 = vcmask 11264
      %958 = vst.msk [vmem:[%s208] sm:$0xf] %vm957, %v956
      %p959 = scmp.lt.s32.totalorder %s16, 1
      %s960 = scalar_select %p959, %s16, 1
      %s961 = smul.addr %s960, 3
      %s962 = smul.addr %s961, 4
      %s963 = scalar_lea.vmem %s3, %s962
      %p964 = scmp.lt.s32.totalorder %s16, 1
      %s965 = scalar_select %p964, %s16, 1
      %s966 = smul.addr %s965, 4
      %s967 = scalar_lea.vmem %s4, %s966
      // Predicated region
      $region33: #{residual_conv_block.3} parent=31 // pred_check
        %p968 = pneg %p102
      $region34: #{residual_conv_block.3} parent=31 // pred_check_branch
        %970 = sbr.rel (%p968) target = $region36
      $region35: #{residual_conv_block.3} parent=31 // pred_region
        _
      $region36: #{residual_conv_block.3} parent=31 // pred_fallthru
        _
      // Predicated region
      $region37: #{residual_conv_block.3} parent=31 // pred_check
        %p971 = pneg %p128
      $region38: #{residual_conv_block.3} parent=31 // pred_check_branch
        %973 = sbr.rel (%p971) target = $region40
      $region39: #{residual_conv_block.3} parent=31 // pred_region
        _
      $region40: #{residual_conv_block.3} parent=31 // pred_fallthru
        _
    $region32: #{residual_conv_block.3} parent=5 // pred_fallthru
      _
    %p974 = scmp.le.s32.totalorder 2, %s11
    // Predicated region
    $region41: #{residual_conv_block.3} parent=5 // pred_check
      %p975 = pneg %p974
    $region42: #{residual_conv_block.3} parent=5 // pred_check_branch
      %977 = sbr.rel (%p975) target = $region44
    $region43: #{residual_conv_block.3} parent=5 // pred_region
      %s978 = ssub.s32 %s11, 2
      // Predicated region
      $region45: #{residual_conv_block.3} parent=43 // pred_check
        %p979 = pneg %p108
      $region46: #{residual_conv_block.3} parent=43 // pred_check_branch
        %981 = sbr.rel (%p979) target = $region48
      $region47: #{residual_conv_block.3} parent=43 // pred_region
        %p982 = scmp.lt.s32.totalorder %s17, 1
        %s983 = scalar_select %p982, %s17, 1
        %s984 = smul.addr %s983, 3
        %s985 = smul.addr %s984, 4
        %s986 = scalar_lea.vmem %s3, %s985
      $region48: #{residual_conv_block.3} parent=43 // pred_fallthru
        _
      // Predicated region
      $region49: #{residual_conv_block.3} parent=43 // pred_check
        %p987 = pneg %p134
      $region50: #{residual_conv_block.3} parent=43 // pred_check_branch
        %989 = sbr.rel (%p987) target = $region52
      $region51: #{residual_conv_block.3} parent=43 // pred_region
        %p990 = scmp.lt.s32.totalorder %s17, 1
        %s991 = scalar_select %p990, %s17, 1
        %s992 = smul.addr %s991, 4
        %s993 = scalar_lea.vmem %s4, %s992
      $region52: #{residual_conv_block.3} parent=43 // pred_fallthru
        _
    $region44: #{residual_conv_block.3} parent=5 // pred_fallthru
      _
  $region6: #{residual_conv_block.3} parent=0 // loop_footer
    %s15 = sadd.s32 1, %s11
  $region7: #{residual_conv_block.3} parent=0 // loop_footer_branch
    %10 = sbr.rel target = $region3
  $region8: #{residual_conv_block.3} parent=0 // loop_exit
    _

// kernel: residual_conv_block.4
$region0: #{residual_conv_block.4}
  #allocation0 [shape = 'u32[]', space=smem, size = 0x4, offset = 0x4, fixed_abs, tag = 'smem constant byte address 0x4 - core index']
  #allocation1 [shape = 'u32[72,128]{1,0:T(1,128)}', space=vmem, size = 0x9000, scoped, tag = 'internal scratch']
  %s0 = inlined_call_operand.vmem [shape: f32[2,4,384], index: 0, kind: input, shape index: {}]
  %s1 = inlined_call_operand.vmem [shape: f32[4,1], index: 1, kind: input, shape index: {}]
  %s2 = inlined_call_operand.vmem [shape: f32[4,1], index: 2, kind: input, shape index: {}]
  %s3 = inlined_call_operand.vmem [shape: f32[1,384], index: 3, kind: input, shape index: {}]
  %s4 = inlined_call_operand.vmem [shape: f32[4,36], index: 4, kind: input, shape index: {}]
  %s5 = inlined_call_operand.vmem [shape: f32[2,4,384], index: 5, kind: output, shape index: {0}]
  %s6 = inlined_call_operand.vmem [shape: f32[2,4,2], index: 6, kind: output, shape index: {1}]
  %7 = xla_tuple %s5, %s6
  %s8 = sld [smem:[#allocation0]]
  $region61: #{residual_conv_block.4} parent=0
    _
  %s10 = ssub.s32 1, %s8
  %s11 = scalar_select 0, %s10, %s8
  loop: start=0, step=1, limit=4
  $region2: #{residual_conv_block.4} parent=0 // loop_pre_header
    _
  $region3: #{residual_conv_block.4} parent=0 // loop_header
    %s13 = sphi 0, %s17
    %p14 = scmp.ge.s32.totalorder %s13, 4
    %s23 = sphi 0, %s25
    %s26 = sphi 0, %s23
    %s27 = sphi 0, %s26
    %s43 = sphi 0, %s27
    %s47 = sphi 0, %s47
    %s49 = sphi 0, %s47
    %s50 = sphi 0, %s49
    %s64 = sphi 0, %s50
    %s68 = sphi 0, %s68
    %s70 = sphi 0, %s68
    %s71 = sphi 0, %s70
    %s85 = sphi 0, %s71
    %s89 = sphi 0, %s89
    %s91 = sphi 0, %s89
    %s92 = sphi 0, %s91
    %s106 = sphi 0, %s92
    %s110 = sphi 0, %s110
    %s112 = sphi 0, %s110
    %s113 = sphi 0, %s112
    %s127 = sphi 0, %s113
    %s133 = sphi 0, %s135
    %s136 = sphi 0, %s133
    %s137 = sphi 0, %s136
    %s153 = sphi 0, %s137
    %s159 = sphi 0, %s161
    %s162 = sphi 0, %s159
    %s163 = sphi 0, %s162
    %s179 = sphi 0, %s163
  $region4: #{residual_conv_block.4} parent=0 // loop_header_branch
    %16 = sbr.rel (%p14) target = $region8
  $region5: #{residual_conv_block.4} parent=0 // loop_body
    %s18 = ssub.s32 %s13, 1
    %s19 = ssub.s32 %s13, 2
    %s20 = sadd.s32 %s13, 1
    %s21 = ssub.s32 %s13, %s20
    %p22 = scmp.eq.s32.totalorder %s21, 0
    %s24 = sadd.s32 %s23, 1
    %s25 = scalar_select %p22, %s23, %s24
    %p28 = pneg %p22
    %p29 = scmp.eq.s32.totalorder %s13, 1
    %p30 = por %p28, %p29
    %p31 = scmp.ne.s32.totalorder %s23, %s26
    %p32 = scmp.eq.s32.totalorder %s13, 0
    %p33 = por %p31, %p32
    %p34 = scmp.ne.s32.totalorder %s23, %s26
    %p35 = scmp.eq.s32.totalorder %s18, 1
    %p36 = por %p34, %p35
    %p37 = scmp.ne.s32.totalorder %s26, %s27
    %p38 = scmp.eq.s32.totalorder %s18, 0
    %p39 = por %p37, %p38
    %p40 = scmp.ne.s32.totalorder %s26, %s27
    %p41 = scmp.eq.s32.totalorder %s19, 1
    %p42 = por %p40, %p41
    %p44 = scmp.ne.s32.totalorder %s27, %s43
    %p45 = scmp.eq.s32.totalorder %s19, 0
    %p46 = por %p44, %p45
    %s48 = sadd.s32 %s47, 1
    %p51 = scmp.eq.s32.totalorder %s13, 1
    %p52 = scmp.ne.s32.totalorder %s47, %s49
    %p53 = scmp.eq.s32.totalorder %s13, 0
    %p54 = por %p52, %p53
    %p55 = scmp.ne.s32.totalorder %s47, %s49
    %p56 = scmp.eq.s32.totalorder %s18, 1
    %p57 = por %p55, %p56
    %p58 = scmp.ne.s32.totalorder %s49, %s50
    %p59 = scmp.eq.s32.totalorder %s18, 0
    %p60 = por %p58, %p59
    %p61 = scmp.ne.s32.totalorder %s49, %s50
    %p62 = scmp.eq.s32.totalorder %s19, 1
    %p63 = por %p61, %p62
    %p65 = scmp.ne.s32.totalorder %s50, %s64
    %p66 = scmp.eq.s32.totalorder %s19, 0
    %p67 = por %p65, %p66
    %s69 = sadd.s32 %s68, 1
    %p72 = scmp.eq.s32.totalorder %s13, 1
    %p73 = scmp.ne.s32.totalorder %s68, %s70
    %p74 = scmp.eq.s32.totalorder %s13, 0
    %p75 = por %p73, %p74
    %p76 = scmp.ne.s32.totalorder %s68, %s70
    %p77 = scmp.eq.s32.totalorder %s18, 1
    %p78 = por %p76, %p77
    %p79 = scmp.ne.s32.totalorder %s70, %s71
    %p80 = scmp.eq.s32.totalorder %s18, 0
    %p81 = por %p79, %p80
    %p82 = scmp.ne.s32.totalorder %s70, %s71
    %p83 = scmp.eq.s32.totalorder %s19, 1
    %p84 = por %p82, %p83
    %p86 = scmp.ne.s32.totalorder %s71, %s85
    %p87 = scmp.eq.s32.totalorder %s19, 0
    %p88 = por %p86, %p87
    %s90 = sadd.s32 %s89, 1
    %p93 = scmp.eq.s32.totalorder %s13, 1
    %p94 = scmp.ne.s32.totalorder %s89, %s91
    %p95 = scmp.eq.s32.totalorder %s13, 0
    %p96 = por %p94, %p95
    %p97 = scmp.ne.s32.totalorder %s89, %s91
    %p98 = scmp.eq.s32.totalorder %s18, 1
    %p99 = por %p97, %p98
    %p100 = scmp.ne.s32.totalorder %s91, %s92
    %p101 = scmp.eq.s32.totalorder %s18, 0
    %p102 = por %p100, %p101
    %p103 = scmp.ne.s32.totalorder %s91, %s92
    %p104 = scmp.eq.s32.totalorder %s19, 1
    %p105 = por %p103, %p104
    %p107 = scmp.ne.s32.totalorder %s92, %s106
    %p108 = scmp.eq.s32.totalorder %s19, 0
    %p109 = por %p107, %p108
    %s111 = sadd.s32 %s110, 1
    %p114 = scmp.eq.s32.totalorder %s13, 1
    %p115 = scmp.ne.s32.totalorder %s110, %s112
    %p116 = scmp.eq.s32.totalorder %s13, 0
    %p117 = por %p115, %p116
    %p118 = scmp.ne.s32.totalorder %s110, %s112
    %p119 = scmp.eq.s32.totalorder %s18, 1
    %p120 = por %p118, %p119
    %p121 = scmp.ne.s32.totalorder %s112, %s113
    %p122 = scmp.eq.s32.totalorder %s18, 0
    %p123 = por %p121, %p122
    %p124 = scmp.ne.s32.totalorder %s112, %s113
    %p125 = scmp.eq.s32.totalorder %s19, 1
    %p126 = por %p124, %p125
    %p128 = scmp.ne.s32.totalorder %s113, %s127
    %p129 = scmp.eq.s32.totalorder %s19, 0
    %p130 = por %p128, %p129
    %s131 = ssub.s32 %s13, %s20
    %p132 = scmp.eq.s32.totalorder %s131, 0
    %s134 = sadd.s32 %s133, 1
    %s135 = scalar_select %p132, %s133, %s134
    %p138 = pneg %p132
    %p139 = scmp.eq.s32.totalorder %s13, 1
    %p140 = por %p138, %p139
    %p141 = scmp.ne.s32.totalorder %s133, %s136
    %p142 = scmp.eq.s32.totalorder %s13, 0
    %p143 = por %p141, %p142
    %p144 = scmp.ne.s32.totalorder %s133, %s136
    %p145 = scmp.eq.s32.totalorder %s18, 1
    %p146 = por %p144, %p145
    %p147 = scmp.ne.s32.totalorder %s136, %s137
    %p148 = scmp.eq.s32.totalorder %s18, 0
    %p149 = por %p147, %p148
    %p150 = scmp.ne.s32.totalorder %s136, %s137
    %p151 = scmp.eq.s32.totalorder %s19, 1
    %p152 = por %p150, %p151
    %p154 = scmp.ne.s32.totalorder %s137, %s153
    %p155 = scmp.eq.s32.totalorder %s19, 0
    %p156 = por %p154, %p155
    %s157 = ssub.s32 %s13, %s20
    %p158 = scmp.eq.s32.totalorder %s157, 0
    %s160 = sadd.s32 %s159, 1
    %s161 = scalar_select %p158, %s159, %s160
    %p164 = pneg %p158
    %p165 = scmp.eq.s32.totalorder %s13, 1
    %p166 = por %p164, %p165
    %p167 = scmp.ne.s32.totalorder %s159, %s162
    %p168 = scmp.eq.s32.totalorder %s13, 0
    %p169 = por %p167, %p168
    %p170 = scmp.ne.s32.totalorder %s159, %s162
    %p171 = scmp.eq.s32.totalorder %s18, 1
    %p172 = por %p170, %p171
    %p173 = scmp.ne.s32.totalorder %s162, %s163
    %p174 = scmp.eq.s32.totalorder %s18, 0
    %p175 = por %p173, %p174
    %p176 = scmp.ne.s32.totalorder %s162, %s163
    %p177 = scmp.eq.s32.totalorder %s19, 1
    %p178 = por %p176, %p177
    %p180 = scmp.ne.s32.totalorder %s163, %s179
    %p181 = scmp.eq.s32.totalorder %s19, 0
    %p182 = por %p180, %p181
    %p183 = scmp.le.s32.totalorder 1, %s13
    %p184 = scmp.lt.s32.totalorder %s13, 3
    %p185 = pnand %p183, %p184
    %p186 = pneg %p185
    // Predicated region
    $region9: #{residual_conv_block.4} parent=5 // pred_check
      _
    $region10: #{residual_conv_block.4} parent=5 // pred_check_branch
      %188 = sbr.rel (%p185) target = $region12
    $region11: #{residual_conv_block.4} parent=5 // pred_region
      %s189 = ssub.s32 %s13, 1
      // Predicated region
      $region13: #{residual_conv_block.4} parent=11 // pred_check
        %p190 = pneg %p60
      $region14: #{residual_conv_block.4} parent=11 // pred_check_branch
        %192 = sbr.rel (%p190) target = $region16
      $region15: #{residual_conv_block.4} parent=11 // pred_region
        _
      $region16: #{residual_conv_block.4} parent=11 // pred_fallthru
        _
      // Predicated region
      $region17: #{residual_conv_block.4} parent=11 // pred_check
        %p193 = pneg %p81
      $region18: #{residual_conv_block.4} parent=11 // pred_check_branch
        %195 = sbr.rel (%p193) target = $region20
      $region19: #{residual_conv_block.4} parent=11 // pred_region
        _
      $region20: #{residual_conv_block.4} parent=11 // pred_fallthru
        _
      // Predicated region
      $region21: #{residual_conv_block.4} parent=11 // pred_check
        %p196 = pneg %p102
      $region22: #{residual_conv_block.4} parent=11 // pred_check_branch
        %198 = sbr.rel (%p196) target = $region24
      $region23: #{residual_conv_block.4} parent=11 // pred_region
        _
      $region24: #{residual_conv_block.4} parent=11 // pred_fallthru
        _
      // Predicated region
      $region25: #{residual_conv_block.4} parent=11 // pred_check
        %p199 = pneg %p123
      $region26: #{residual_conv_block.4} parent=11 // pred_check_branch
        %201 = sbr.rel (%p199) target = $region28
      $region27: #{residual_conv_block.4} parent=11 // pred_region
        _
      $region28: #{residual_conv_block.4} parent=11 // pred_fallthru
        _
    $region12: #{residual_conv_block.4} parent=5 // pred_fallthru
      _
    %p202 = scmp.lt.s32.totalorder %s13, 2
    // Predicated region
    $region29: #{residual_conv_block.4} parent=5 // pred_check
      %p203 = pneg %p202
    $region30: #{residual_conv_block.4} parent=5 // pred_check_branch
      %205 = sbr.rel (%p203) target = $region32
    $region31: #{residual_conv_block.4} parent=5 // pred_region
      // Predicated region
      $region33: #{residual_conv_block.4} parent=31 // pred_check
        %p206 = pneg %p33
      $region34: #{residual_conv_block.4} parent=31 // pred_check_branch
        %208 = sbr.rel (%p206) target = $region36
      $region35: #{residual_conv_block.4} parent=31 // pred_region
        %p209 = scmp.lt.s32.totalorder %s13, 1
        %s210 = scalar_select %p209, %s13, 1
        %s211 = smul.addr %s210, 3
        %s212 = smul.addr %s211, 4
        %s213 = scalar_lea.vmem %s0, %s212
      $region36: #{residual_conv_block.4} parent=31 // pred_fallthru
        _
    $region32: #{residual_conv_block.4} parent=5 // pred_fallthru
      _
    %p214 = scmp.le.s32.totalorder 1, %s13
    %p215 = scmp.lt.s32.totalorder %s13, 3
    %p216 = pnand %p214, %p215
    %p217 = pneg %p216
    // Predicated region
    $region37: #{residual_conv_block.4} parent=5 // pred_check
      _
    $region38: #{residual_conv_block.4} parent=5 // pred_check_branch
      %219 = sbr.rel (%p216) target = $region40
    $region39: #{residual_conv_block.4} parent=5 // pred_region
      %s220 = ssub.s32 %s13, 1
      %p221 = scmp.lt.s32.totalorder %s18, 1
      %s222 = scalar_select %p221, %s18, 1
      %s223 = smul.addr %s222, 3
      %s224 = smul.addr %s223, 4
      %s225 = scalar_lea.vmem %s0, %s224
      %p226 = pneg %p39
      %p227 = pneg %p36
      %p228 = pneg %p60
      %p229 = pneg %p57
      %p230 = pneg %p81
      %p231 = pneg %p78
      %p232 = pneg %p102
      %p233 = pneg %p99
      %p234 = pneg %p123
      %p235 = pneg %p120
      %p236 = pneg %p149
      %p237 = pneg %p146
      %p238 = scmp.lt.s32.totalorder %s18, 1
      %s239 = scalar_select %p238, %s18, 1
      %s240 = smul.addr %s239, 3
      %s241 = smul.addr %s240, 4
      %s242 = scalar_lea.vmem %s5, %s241
      %p243 = pneg %p175
      %p244 = pneg %p172
      %p245 = scmp.lt.s32.totalorder %s18, 1
      %s246 = scalar_select %p245, %s18, 1
      %s247 = smul.addr %s246, 4
      %s248 = scalar_lea.vmem %s6, %s247
      %p249 = scmp.lt.s32.totalorder %s18, 1
      %s250 = scalar_select %p249, %s18, 1
      %s251 = smul.addr %s250, 3
      %s252 = smul.addr %s251, 4
      %s253 = scalar_lea.vmem %s0, %s252
      %p254 = scmp.lt.s32.totalorder %s18, 1
      %s255 = scalar_select %p254, %s18, 1
      %s256 = smul.addr %s255, 3
      %s257 = smul.addr %s256, 4
      %s258 = scalar_lea.vmem %s5, %s257
      %p259 = scmp.lt.s32.totalorder %s18, 1
      %s260 = scalar_select %p259, %s18, 1
      %s261 = smul.addr %s260, 4
      %s262 = scalar_lea.vmem %s6, %s261
      %v263 = vld [vmem:[%s3] sm:$0x7]
      %v264 = vld [vmem:[%s253] sm:$0xff]
      %v265 = vld [vmem:[%s253 + $0x8] sm:$0xf]
      %v266 = vld [vmem:[%s1] sm:$0xf]
      %268 = vset.pattern.permute.xlu0 0
      %269 = vperm.xlu0 %268, %v266
      %v270 = vpop.permute.xlu0 %269
      %v272 = vunpack.c.l.s4 839922192
      %v273 = vunpack.c.0.s8 %v272
      %v274 = vperm.slane %v270, %v273
      %v276 = vmul.f32 %v264, %v274
      %v277 = vmul.f32 %v265, %v274
      %v278 = vld [vmem:[%s2] sm:$0xf]
      %280 = vset.pattern.permute.xlu0 0
      %281 = vperm.xlu0 %280, %v278
      %v282 = vpop.permute.xlu0 %281
      %v284 = vunpack.c.l.s4 839922192
      %v285 = vunpack.c.0.s8 %v284
      %v286 = vperm.slane %v282, %v285
      %v288 = vadd.f32 %v276, %v286
      %v289 = vadd.f32 %v277, %v286
      %v290 = vmul.f32 %v288, 0.5
      %v291 = vmul.f32 %v289, 0.5
      %v292 = vmul.f32 %v288, 0.70710677
      %v293 = vmul.f32 %v289, 0.70710677
      %vm294 = vcmp.ge.f32.partialorder %v292, 0.0
      %vm295 = vcmp.ge.f32.partialorder %v293, 0.0
      %v296 = vsel %vm294, 1.0, -1.0
      %v297 = vsel %vm295, 1.0, -1.0
      %v298 = vand.u32 2147483647, %v292
      %v299 = vand.u32 2147483647, %v293
      %v300 = vmul.f32 %v298, 0.3275911
      %v301 = vmul.f32 %v299, 0.3275911
      %v302 = vadd.f32 %v300, 1.0
      %v303 = vadd.f32 %v301, 1.0
      %v304 = vrcp.pop %v302
      %v305 = vmul.f32 %v302, %v304
      %v306 = vsub.f32 1.0, %v305
      %v307 = vmul.f32 %v304, %v306
      %v308 = vadd.f32 %v304, %v307
      %vm309 = vweird.f32 %v302
      %vm310 = vweird.f32 %v304
      %vm311 = vmor %vm309, %vm310
      %v312 = vsel %vm311, %v304, %v308
      %v313 = vand.u32 2147483647, %v302
      %vm314 = vcmp.eq.f32.partialorder %v313, 8.507059e+37
      %v315 = vand.u32 %v302, 2147483648
      %v316 = vor.u32 1.1754944e-38, %v315
      %v317 = vsel %vm314, %v316, %v312
      %v318 = vmul.f32 1.0, %v317
      %v319 = vrcp.pop %v303
      %v320 = vmul.f32 %v303, %v319
      %v321 = vsub.f32 1.0, %v320
      %v322 = vmul.f32 %v319, %v321
      %v323 = vadd.f32 %v319, %v322
      %vm324 = vweird.f32 %v303
      %vm325 = vweird.f32 %v319
      %vm326 = vmor %vm324, %vm325
      %v327 = vsel %vm326, %v319, %v323
      %v328 = vand.u32 2147483647, %v303
      %vm329 = vcmp.eq.f32.partialorder %v328, 8.507059e+37
      %v330 = vand.u32 %v303, 2147483648
      %v331 = vor.u32 1.1754944e-38, %v330
      %v332 = vsel %vm329, %v331, %v327
      %v333 = vmul.f32 1.0, %v332
      %v334 = vmul.f32 %v318, 1.0614054
      %v335 = vmul.f32 %v333, 1.0614054
      %v336 = vadd.f32 %v334, -1.4531521
      %v337 = vadd.f32 %v335, -1.4531521
      %v338 = vmul.f32 %v336, %v318
      %v339 = vmul.f32 %v337, %v333
      %v340 = vadd.f32 %v338, 1.4214138
      %v341 = vadd.f32 %v339, 1.4214138
      %v342 = vmul.f32 %v340, %v318
      %v343 = vmul.f32 %v341, %v333
      %v344 = vadd.f32 %v342, -0.28449672
      %v345 = vadd.f32 %v343, -0.28449672
      %v346 = vmul.f32 %v344, %v318
      %v347 = vmul.f32 %v345, %v333
      %v348 = vadd.f32 %v346, 0.2548296
      %v349 = vadd.f32 %v347, 0.2548296
      %v350 = vmul.f32 %v348, %v318
      %v351 = vmul.f32 %v349, %v333
      %v352 = vsub.f32 0.0, %v298
      %v353 = vsub.f32 0.0, %v299
      %v354 = vmul.f32 %v352, %v298
      %v355 = vmul.f32 %v353, %v299
      %v356 = vmul.f32 %v354, 1.442695
      %v357 = vpow.pop %v356
      %v358 = vmul.f32 %v355, 1.442695
      %v359 = vpow.pop %v358
      %v360 = vmul.f32 %v350, %v357
      %v361 = vmul.f32 %v351, %v359
      %v362 = vsub.f32 1.0, %v360
      %v363 = vsub.f32 1.0, %v361
      %v364 = vmul.f32 %v296, %v362
      %v365 = vmul.f32 %v297, %v363
      %v366 = vadd.f32 %v364, 1.0
      %v367 = vadd.f32 %v365, 1.0
      %v368 = vmul.f32 %v290, %v366
      %v369 = vmul.f32 %v291, %v367
      %v371 = vperm.slane %v263, 0
      %v372 = vperm.slane %v263, 1
      %v373 = vperm.slane %v263, 2
      %v377 = vrot.slane %v372, 4
      %vm378 = vcmask 1043456
      %v379 = vsel %vm378, %v371, %v377
      %v381 = vmul.f32 %v368, %v379
      %v382 = vmul.f32 %v369, %v373
      %384 = vst [vmem:[#allocation1] ss:$2 sm:$0xff] %v382
      %v385 = vld.sshfl [vmem:[#allocation1] sm:$0xff pattern:$0x75316420]
      %386 = vrot.lane.b32.xlu0 %v385, 19
      %v387 = vpop.permute.xlu0 %386
      %390 = vst [vmem:[#allocation1] ss:$2 sm:$0xff] %v381
      %s391 = scalar_lea.vmem [#allocation1], 16
      %392 = vst [vmem:[%s391] ss:$2 sm:$0xff] %v382
      %v393 = vld.sshfl [vmem:[#allocation1] sm:$0xff pattern:$0x75316420]
      %v394 = vld.sshfl [vmem:[#allocation1 + $0x8] sm:$0xff pattern:$0x75316420]
      %v395 = vld.sshfl [vmem:[#allocation1 + $0x10] sm:$0xff pattern:$0x75316420]
      %396 = vrot.lane.b32.xlu0 %v393, 19
      %v397 = vpop.permute.xlu0 %396
      %398 = vrot.lane.b32.xlu0 %v394, 19
      %v399 = vpop.permute.xlu0 %398
      %400 = vrot.lane.b32.xlu0 %v395, 19
      %v401 = vpop.permute.xlu0 %400
      %vm402 = vcmask 154624
      %v403 = vsel %vm402, %v397, %v399
      %v404 = vsel %vm402, %v399, %v401
      %v408 = vsel %vm402, %v387, %v397
      %v409 = vld [vmem:[%s4] sm:$0xf]
      %411 = vset.pattern.permute.xlu0 0
      %412 = vperm.xlu0 %411, %v409
      %v413 = vpop.permute.xlu0 %412
      %v415 = vperm.slane %v408, 0
      %v416 = vperm.slane %v403, 0
      %v417 = vperm.slane %v404, 0
      %v418 = vmul.f32 %v413, %v415
      %v419 = vmul.f32 %v413, %v416
      %v420 = vmul.f32 %v413, %v417
      %v421 = vadd.f32 %v418, 0.0
      %v422 = vadd.f32 %v419, 0.0
      %v423 = vadd.f32 %v420, 0.0
      %424 = vset.pattern.permute.xlu0 1
      %425 = vperm.xlu0 %424, %v409
      %v426 = vpop.permute.xlu0 %425
      %v428 = vperm.slane %v408, 1
      %v429 = vperm.slane %v403, 1
      %v430 = vperm.slane %v404, 1
      %v431 = vmul.f32 %v426, %v428
      %v432 = vmul.f32 %v426, %v429
      %v433 = vmul.f32 %v426, %v430
      %v434 = vadd.f32 %v421, %v431
      %v435 = vadd.f32 %v422, %v432
      %v436 = vadd.f32 %v423, %v433
      %437 = vset.pattern.permute.xlu0 2
      %438 = vperm.xlu0 %437, %v409
      %v439 = vpop.permute.xlu0 %438
      %v441 = vperm.slane %v408, 2
      %v442 = vperm.slane %v403, 2
      %v443 = vperm.slane %v404, 2
      %v444 = vmul.f32 %v439, %v441
      %v445 = vmul.f32 %v439, %v442
      %v446 = vmul.f32 %v439, %v443
      %v447 = vadd.f32 %v434, %v444
      %v448 = vadd.f32 %v435, %v445
      %v449 = vadd.f32 %v436, %v446
      %450 = vset.pattern.permute.xlu0 3
      %451 = vperm.xlu0 %450, %v409
      %v452 = vpop.permute.xlu0 %451
      %v454 = vperm.slane %v408, 3
      %v455 = vperm.slane %v403, 3
      %v456 = vperm.slane %v404, 3
      %v457 = vmul.f32 %v452, %v454
      %v458 = vmul.f32 %v452, %v455
      %v459 = vmul.f32 %v452, %v456
      %v460 = vadd.f32 %v447, %v457
      %v461 = vadd.f32 %v448, %v458
      %v462 = vadd.f32 %v449, %v459
      %463 = vst [vmem:[#allocation1] ss:$2 sm:$0xff] %v382
      %v464 = vld.sshfl [vmem:[#allocation1] sm:$0xff pattern:$0x75316420]
      %465 = vrot.lane.b32.xlu0 %v464, 18
      %v466 = vpop.permute.xlu0 %465
      %468 = vst [vmem:[#allocation1] ss:$2 sm:$0xff] %v381
      %s469 = scalar_lea.vmem [#allocation1], 16
      %470 = vst [vmem:[%s469] ss:$2 sm:$0xff] %v382
      %v471 = vld.sshfl [vmem:[#allocation1] sm:$0xff pattern:$0x75316420]
      %v472 = vld.sshfl [vmem:[#allocation1 + $0x8] sm:$0xff pattern:$0x75316420]
      %v473 = vld.sshfl [vmem:[#allocation1 + $0x10] sm:$0xff pattern:$0x75316420]
      %474 = vrot.lane.b32.xlu0 %v471, 18
      %v475 = vpop.permute.xlu0 %474
      %476 = vrot.lane.b32.xlu0 %v472, 18
      %v477 = vpop.permute.xlu0 %476
      %478 = vrot.lane.b32.xlu0 %v473, 18
      %v479 = vpop.permute.xlu0 %478
      %vm480 = vcmask 146432
      %v481 = vsel %vm480, %v475, %v477
      %v482 = vsel %vm480, %v477, %v479
      %v486 = vsel %vm480, %v466, %v475
      %v487 = vld [vmem:[%s4] sm:$0xf]
      %489 = vset.pattern.permute.xlu0 4
      %490 = vperm.xlu0 %489, %v487
      %v491 = vpop.permute.xlu0 %490
      %v493 = vperm.slane %v486, 0
      %v494 = vperm.slane %v481, 0
      %v495 = vperm.slane %v482, 0
      %v496 = vmul.f32 %v491, %v493
      %v497 = vmul.f32 %v491, %v494
      %v498 = vmul.f32 %v491, %v495
      %v499 = vadd.f32 %v460, %v496
      %v500 = vadd.f32 %v461, %v497
      %v501 = vadd.f32 %v462, %v498
      %502 = vset.pattern.permute.xlu0 5
      %503 = vperm.xlu0 %502, %v487
      %v504 = vpop.permute.xlu0 %503
      %v506 = vperm.slane %v486, 1
      %v507 = vperm.slane %v481, 1
      %v508 = vperm.slane %v482, 1
      %v509 = vmul.f32 %v504, %v506
      %v510 = vmul.f32 %v504, %v507
      %v511 = vmul.f32 %v504, %v508
      %v512 = vadd.f32 %v499, %v509
      %v513 = vadd.f32 %v500, %v510
      %v514 = vadd.f32 %v501, %v511
      %515 = vset.pattern.permute.xlu0 6
      %516 = vperm.xlu0 %515, %v487
      %v517 = vpop.permute.xlu0 %516
      %v519 = vperm.slane %v486, 2
      %v520 = vperm.slane %v481, 2
      %v521 = vperm.slane %v482, 2
      %v522 = vmul.f32 %v517, %v519
      %v523 = vmul.f32 %v517, %v520
      %v524 = vmul.f32 %v517, %v521
      %v525 = vadd.f32 %v512, %v522
      %v526 = vadd.f32 %v513, %v523
      %v527 = vadd.f32 %v514, %v524
      %528 = vset.pattern.permute.xlu0 7
      %529 = vperm.xlu0 %528, %v487
      %v530 = vpop.permute.xlu0 %529
      %v532 = vperm.slane %v486, 3
      %v533 = vperm.slane %v481, 3
      %v534 = vperm.slane %v482, 3
      %v535 = vmul.f32 %v530, %v532
      %v536 = vmul.f32 %v530, %v533
      %v537 = vmul.f32 %v530, %v534
      %v538 = vadd.f32 %v525, %v535
      %v539 = vadd.f32 %v526, %v536
      %v540 = vadd.f32 %v527, %v537
      %541 = vst [vmem:[#allocation1] ss:$2 sm:$0xff] %v382
      %v542 = vld.sshfl [vmem:[#allocation1] sm:$0xff pattern:$0x75316420]
      %543 = vrot.lane.b32.xlu0 %v542, 17
      %v544 = vpop.permute.xlu0 %543
      %546 = vst [vmem:[#allocation1] ss:$2 sm:$0xff] %v381
      %s547 = scalar_lea.vmem [#allocation1], 16
      %548 = vst [vmem:[%s547] ss:$2 sm:$0xff] %v382
      %v549 = vld.sshfl [vmem:[#allocation1] sm:$0xff pattern:$0x75316420]
      %v550 = vld.sshfl [vmem:[#allocation1 + $0x8] sm:$0xff pattern:$0x75316420]
      %v551 = vld.sshfl [vmem:[#allocation1 + $0x10] sm:$0xff pattern:$0x75316420]
      %552 = vrot.lane.b32.xlu0 %v549, 17
      %v553 = vpop.permute.xlu0 %552
      %554 = vrot.lane.b32.xlu0 %v550, 17
      %v555 = vpop.permute.xlu0 %554
      %556 = vrot.lane.b32.xlu0 %v551, 17
      %v557 = vpop.permute.xlu0 %556
      %vm558 = vcmask 138240
      %v559 = vsel %vm558, %v553, %v555
      %v560 = vsel %vm558, %v555, %v557
      %v564 = vsel %vm558, %v544, %v553
      %v565 = vld [vmem:[%s4] sm:$0xf]
      %567 = vset.pattern.permute.xlu0 8
      %568 = vperm.xlu0 %567, %v565
      %v569 = vpop.permute.xlu0 %568
      %v571 = vperm.slane %v564, 0
      %v572 = vperm.slane %v559, 0
      %v573 = vperm.slane %v560, 0
      %v574 = vmul.f32 %v569, %v571
      %v575 = vmul.f32 %v569, %v572
      %v576 = vmul.f32 %v569, %v573
      %v577 = vadd.f32 %v538, %v574
      %v578 = vadd.f32 %v539, %v575
      %v579 = vadd.f32 %v540, %v576
      %580 = vset.pattern.permute.xlu0 9
      %581 = vperm.xlu0 %580, %v565
      %v582 = vpop.permute.xlu0 %581
      %v584 = vperm.slane %v564, 1
      %v585 = vperm.slane %v559, 1
      %v586 = vperm.slane %v560, 1
      %v587 = vmul.f32 %v582, %v584
      %v588 = vmul.f32 %v582, %v585
      %v589 = vmul.f32 %v582, %v586
      %v590 = vadd.f32 %v577, %v587
      %v591 = vadd.f32 %v578, %v588
      %v592 = vadd.f32 %v579, %v589
      %593 = vset.pattern.permute.xlu0 10
      %594 = vperm.xlu0 %593, %v565
      %v595 = vpop.permute.xlu0 %594
      %v597 = vperm.slane %v564, 2
      %v598 = vperm.slane %v559, 2
      %v599 = vperm.slane %v560, 2
      %v600 = vmul.f32 %v595, %v597
      %v601 = vmul.f32 %v595, %v598
      %v602 = vmul.f32 %v595, %v599
      %v603 = vadd.f32 %v590, %v600
      %v604 = vadd.f32 %v591, %v601
      %v605 = vadd.f32 %v592, %v602
      %606 = vset.pattern.permute.xlu0 11
      %607 = vperm.xlu0 %606, %v565
      %v608 = vpop.permute.xlu0 %607
      %v610 = vperm.slane %v564, 3
      %v611 = vperm.slane %v559, 3
      %v612 = vperm.slane %v560, 3
      %v613 = vmul.f32 %v608, %v610
      %v614 = vmul.f32 %v608, %v611
      %v615 = vmul.f32 %v608, %v612
      %v616 = vadd.f32 %v603, %v613
      %v617 = vadd.f32 %v604, %v614
      %v618 = vadd.f32 %v605, %v615
      %619 = vst [vmem:[#allocation1] ss:$2 sm:$0xff] %v382
      %v620 = vld.sshfl [vmem:[#allocation1] sm:$0xff pattern:$0x75316420]
      %621 = vrot.lane.b32.xlu0 %v620, 1
      %v622 = vpop.permute.xlu0 %621
      %624 = vst [vmem:[#allocation1] ss:$2 sm:$0xff] %v381
      %s625 = scalar_lea.vmem [#allocation1], 16
      %626 = vst [vmem:[%s625] ss:$2 sm:$0xff] %v382
      %v627 = vld.sshfl [vmem:[#allocation1] sm:$0xff pattern:$0x75316420]
      %v628 = vld.sshfl [vmem:[#allocation1 + $0x8] sm:$0xff pattern:$0x75316420]
      %v629 = vld.sshfl [vmem:[#allocation1 + $0x10] sm:$0xff pattern:$0x75316420]
      %630 = vrot.lane.b32.xlu0 %v627, 1
      %v631 = vpop.permute.xlu0 %630
      %632 = vrot.lane.b32.xlu0 %v628, 1
      %v633 = vpop.permute.xlu0 %632
      %634 = vrot.lane.b32.xlu0 %v629, 1
      %v635 = vpop.permute.xlu0 %634
      %vm636 = vcmask 7168
      %v637 = vsel %vm636, %v631, %v633
      %v638 = vsel %vm636, %v633, %v635
      %v642 = vsel %vm636, %v622, %v631
      %v643 = vld [vmem:[%s4] sm:$0xf]
      %645 = vset.pattern.permute.xlu0 12
      %646 = vperm.xlu0 %645, %v643
      %v647 = vpop.permute.xlu0 %646
      %v649 = vperm.slane %v642, 0
      %v650 = vperm.slane %v637, 0
      %v651 = vperm.slane %v638, 0
      %v652 = vmul.f32 %v647, %v649
      %v653 = vmul.f32 %v647, %v650
      %v654 = vmul.f32 %v647, %v651
      %v655 = vadd.f32 %v616, %v652
      %v656 = vadd.f32 %v617, %v653
      %v657 = vadd.f32 %v618, %v654
      %658 = vset.pattern.permute.xlu0 13
      %659 = vperm.xlu0 %658, %v643
      %v660 = vpop.permute.xlu0 %659
      %v662 = vperm.slane %v642, 1
      %v663 = vperm.slane %v637, 1
      %v664 = vperm.slane %v638, 1
      %v665 = vmul.f32 %v660, %v662
      %v666 = vmul.f32 %v660, %v663
      %v667 = vmul.f32 %v660, %v664
      %v668 = vadd.f32 %v655, %v665
      %v669 = vadd.f32 %v656, %v666
      %v670 = vadd.f32 %v657, %v667
      %671 = vset.pattern.permute.xlu0 14
      %672 = vperm.xlu0 %671, %v643
      %v673 = vpop.permute.xlu0 %672
      %v675 = vperm.slane %v642, 2
      %v676 = vperm.slane %v637, 2
      %v677 = vperm.slane %v638, 2
      %v678 = vmul.f32 %v673, %v675
      %v679 = vmul.f32 %v673, %v676
      %v680 = vmul.f32 %v673, %v677
      %v681 = vadd.f32 %v668, %v678
      %v682 = vadd.f32 %v669, %v679
      %v683 = vadd.f32 %v670, %v680
      %684 = vset.pattern.permute.xlu0 15
      %685 = vperm.xlu0 %684, %v643
      %v686 = vpop.permute.xlu0 %685
      %v688 = vperm.slane %v642, 3
      %v689 = vperm.slane %v637, 3
      %v690 = vperm.slane %v638, 3
      %v691 = vmul.f32 %v686, %v688
      %v692 = vmul.f32 %v686, %v689
      %v693 = vmul.f32 %v686, %v690
      %v694 = vadd.f32 %v681, %v691
      %v695 = vadd.f32 %v682, %v692
      %v696 = vadd.f32 %v683, %v693
      %697 = vset.pattern.permute.xlu0 16
      %698 = vperm.xlu0 %697, %v643
      %v699 = vpop.permute.xlu0 %698
      %v701 = vperm.slane %v381, 0
      %v702 = vperm.slane %v381, 4
      %v703 = vperm.slane %v382, 0
      %v707 = vperm.slane %v701, 0
      %v708 = vperm.slane %v702, 0
      %v709 = vperm.slane %v703, 0
      %v710 = vmul.f32 %v699, %v707
      %v711 = vmul.f32 %v699, %v708
      %v712 = vmul.f32 %v699, %v709
      %v713 = vadd.f32 %v694, %v710
      %v714 = vadd.f32 %v695, %v711
      %v715 = vadd.f32 %v696, %v712
      %716 = vset.pattern.permute.xlu0 17
      %717 = vperm.xlu0 %716, %v643
      %v718 = vpop.permute.xlu0 %717
      %v720 = vperm.slane %v381, 1
      %v721 = vperm.slane %v381, 5
      %v722 = vperm.slane %v382, 1
      %v726 = vperm.slane %v720, 1
      %v727 = vperm.slane %v721, 1
      %v728 = vperm.slane %v722, 1
      %v729 = vmul.f32 %v718, %v726
      %v730 = vmul.f32 %v718, %v727
      %v731 = vmul.f32 %v718, %v728
      %v732 = vadd.f32 %v713, %v729
      %v733 = vadd.f32 %v714, %v730
      %v734 = vadd.f32 %v715, %v731
      %735 = vset.pattern.permute.xlu0 18
      %736 = vperm.xlu0 %735, %v643
      %v737 = vpop.permute.xlu0 %736
      %v739 = vperm.slane %v381, 2
      %v740 = vperm.slane %v381, 6
      %v741 = vperm.slane %v382, 2
      %v745 = vperm.slane %v739, 2
      %v746 = vperm.slane %v740, 2
      %v747 = vperm.slane %v741, 2
      %v748 = vmul.f32 %v737, %v745
      %v749 = vmul.f32 %v737, %v746
      %v750 = vmul.f32 %v737, %v747
      %v751 = vadd.f32 %v732, %v748
      %v752 = vadd.f32 %v733, %v749
      %v753 = vadd.f32 %v734, %v750
      %754 = vset.pattern.permute.xlu0 19
      %755 = vperm.xlu0 %754, %v643
      %v756 = vpop.permute.xlu0 %755
      %v758 = vperm.slane %v381, 3
      %v759 = vperm.slane %v381, 7
      %v760 = vperm.slane %v382, 3
      %v764 = vperm.slane %v758, 3
      %v765 = vperm.slane %v759, 3
      %v766 = vperm.slane %v760, 3
      %v767 = vmul.f32 %v756, %v764
      %v768 = vmul.f32 %v756, %v765
      %v769 = vmul.f32 %v756, %v766
      %v770 = vadd.f32 %v751, %v767
      %v771 = vadd.f32 %v752, %v768
      %v772 = vadd.f32 %v753, %v769
      %773 = vst [vmem:[#allocation1] ss:$2 sm:$0xff] %v381
      %s774 = scalar_lea.vmem [#allocation1], 16
      %775 = vst [vmem:[%s774] ss:$2 sm:$0xff] %v382
      %v776 = vld.sshfl [vmem:[#allocation1] sm:$0xff pattern:$0x75316420]
      %v777 = vld.sshfl [vmem:[#allocation1 + $0x8] sm:$0xff pattern:$0x75316420]
      %v778 = vld.sshfl [vmem:[#allocation1 + $0x10] sm:$0xff pattern:$0x75316420]
      %779 = vrot.lane.b32.xlu0 %v776, 127
      %v780 = vpop.permute.xlu0 %779
      %781 = vrot.lane.b32.xlu0 %v777, 127
      %v782 = vpop.permute.xlu0 %781
      %783 = vrot.lane.b32.xlu0 %v778, 127
      %v784 = vpop.permute.xlu0 %783
      %vm785 = vcmask 1039360
      %v786 = vsel %vm785, %v780, %v782
      %v787 = vsel %vm785, %v782, %v784
      %791 = vst [vmem:[#allocation1] ss:$2 sm:$0xff] %v381
      %v792 = vld.sshfl [vmem:[#allocation1] sm:$0xff pattern:$0x75316420]
      %793 = vrot.lane.b32.xlu0 %v792, 127
      %v794 = vpop.permute.xlu0 %793
      %v796 = vsel %vm785, %v784, %v794
      %v797 = vld [vmem:[%s4] sm:$0xf]
      %799 = vset.pattern.permute.xlu0 20
      %800 = vperm.xlu0 %799, %v797
      %v801 = vpop.permute.xlu0 %800
      %v803 = vperm.slane %v786, 0
      %v804 = vperm.slane %v787, 0
      %v805 = vperm.slane %v796, 0
      %v806 = vmul.f32 %v801, %v803
      %v807 = vmul.f32 %v801, %v804
      %v808 = vmul.f32 %v801, %v805
      %v809 = vadd.f32 %v770, %v806
      %v810 = vadd.f32 %v771, %v807
      %v811 = vadd.f32 %v772, %v808
      %812 = vset.pattern.permute.xlu0 21
      %813 = vperm.xlu0 %812, %v797
      %v814 = vpop.permute.xlu0 %813
      %v816 = vperm.slane %v786, 1
      %v817 = vperm.slane %v787, 1
      %v818 = vperm.slane %v796, 1
      %v819 = vmul.f32 %v814, %v816
      %v820 = vmul.f32 %v814, %v817
      %v821 = vmul.f32 %v814, %v818
      %v822 = vadd.f32 %v809, %v819
      %v823 = vadd.f32 %v810, %v820
      %v824 = vadd.f32 %v811, %v821
      %825 = vset.pattern.permute.xlu0 22
      %826 = vperm.xlu0 %825, %v797
      %v827 = vpop.permute.xlu0 %826
      %v829 = vperm.slane %v786, 2
      %v830 = vperm.slane %v787, 2
      %v831 = vperm.slane %v796, 2
      %v832 = vmul.f32 %v827, %v829
      %v833 = vmul.f32 %v827, %v830
      %v834 = vmul.f32 %v827, %v831
      %v835 = vadd.f32 %v822, %v832
      %v836 = vadd.f32 %v823, %v833
      %v837 = vadd.f32 %v824, %v834
      %838 = vset.pattern.permute.xlu0 23
      %839 = vperm.xlu0 %838, %v797
      %v840 = vpop.permute.xlu0 %839
      %v842 = vperm.slane %v786, 3
      %v843 = vperm.slane %v787, 3
      %v844 = vperm.slane %v796, 3
      %v845 = vmul.f32 %v840, %v842
      %v846 = vmul.f32 %v840, %v843
      %v847 = vmul.f32 %v840, %v844
      %v848 = vadd.f32 %v835, %v845
      %v849 = vadd.f32 %v836, %v846
      %v850 = vadd.f32 %v837, %v847
      %851 = vst [vmem:[#allocation1] ss:$2 sm:$0xff] %v381
      %s852 = scalar_lea.vmem [#allocation1], 16
      %853 = vst [vmem:[%s852] ss:$2 sm:$0xff] %v382
      %v854 = vld.sshfl [vmem:[#allocation1] sm:$0xff pattern:$0x75316420]
      %v855 = vld.sshfl [vmem:[#allocation1 + $0x8] sm:$0xff pattern:$0x75316420]
      %v856 = vld.sshfl [vmem:[#allocation1 + $0x10] sm:$0xff pattern:$0x75316420]
      %857 = vrot.lane.b32.xlu0 %v854, 111
      %v858 = vpop.permute.xlu0 %857
      %859 = vrot.lane.b32.xlu0 %v855, 111
      %v860 = vpop.permute.xlu0 %859
      %861 = vrot.lane.b32.xlu0 %v856, 111
      %v862 = vpop.permute.xlu0 %861
      %vm863 = vcmask 908288
      %v864 = vsel %vm863, %v858, %v860
      %v865 = vsel %vm863, %v860, %v862
      %869 = vst [vmem:[#allocation1] ss:$2 sm:$0xff] %v381
      %v870 = vld.sshfl [vmem:[#allocation1] sm:$0xff pattern:$0x75316420]
      %871 = vrot.lane.b32.xlu0 %v870, 111
      %v872 = vpop.permute.xlu0 %871
      %v874 = vsel %vm863, %v862, %v872
      %v875 = vld [vmem:[%s4] sm:$0xf]
      %877 = vset.pattern.permute.xlu0 24
      %878 = vperm.xlu0 %877, %v875
      %v879 = vpop.permute.xlu0 %878
      %v881 = vperm.slane %v864, 0
      %v882 = vperm.slane %v865, 0
      %v883 = vperm.slane %v874, 0
      %v884 = vmul.f32 %v879, %v881
      %v885 = vmul.f32 %v879, %v882
      %v886 = vmul.f32 %v879, %v883
      %v887 = vadd.f32 %v848, %v884
      %v888 = vadd.f32 %v849, %v885
      %v889 = vadd.f32 %v850, %v886
      %890 = vset.pattern.permute.xlu0 25
      %891 = vperm.xlu0 %890, %v875
      %v892 = vpop.permute.xlu0 %891
      %v894 = vperm.slane %v864, 1
      %v895 = vperm.slane %v865, 1
      %v896 = vperm.slane %v874, 1
      %v897 = vmul.f32 %v892, %v894
      %v898 = vmul.f32 %v892, %v895
      %v899 = vmul.f32 %v892, %v896
      %v900 = vadd.f32 %v887, %v897
      %v901 = vadd.f32 %v888, %v898
      %v902 = vadd.f32 %v889, %v899
      %903 = vset.pattern.permute.xlu0 26
      %904 = vperm.xlu0 %903, %v875
      %v905 = vpop.permute.xlu0 %904
      %v907 = vperm.slane %v864, 2
      %v908 = vperm.slane %v865, 2
      %v909 = vperm.slane %v874, 2
      %v910 = vmul.f32 %v905, %v907
      %v911 = vmul.f32 %v905, %v908
      %v912 = vmul.f32 %v905, %v909
      %v913 = vadd.f32 %v900, %v910
      %v914 = vadd.f32 %v901, %v911
      %v915 = vadd.f32 %v902, %v912
      %916 = vset.pattern.permute.xlu0 27
      %917 = vperm.xlu0 %916, %v875
      %v918 = vpop.permute.xlu0 %917
      %v920 = vperm.slane %v864, 3
      %v921 = vperm.slane %v865, 3
      %v922 = vperm.slane %v874, 3
      %v923 = vmul.f32 %v918, %v920
      %v924 = vmul.f32 %v918, %v921
      %v925 = vmul.f32 %v918, %v922
      %v926 = vadd.f32 %v913, %v923
      %v927 = vadd.f32 %v914, %v924
      %v928 = vadd.f32 %v915, %v925
      %929 = vst [vmem:[#allocation1] ss:$2 sm:$0xff] %v381
      %s930 = scalar_lea.vmem [#allocation1], 16
      %931 = vst [vmem:[%s930] ss:$2 sm:$0xff] %v382
      %v932 = vld.sshfl [vmem:[#allocation1] sm:$0xff pattern:$0x75316420]
      %v933 = vld.sshfl [vmem:[#allocation1 + $0x8] sm:$0xff pattern:$0x75316420]
      %v934 = vld.sshfl [vmem:[#allocation1 + $0x10] sm:$0xff pattern:$0x75316420]
      %935 = vrot.lane.b32.xlu0 %v932, 110
      %v936 = vpop.permute.xlu0 %935
      %937 = vrot.lane.b32.xlu0 %v933, 110
      %v938 = vpop.permute.xlu0 %937
      %939 = vrot.lane.b32.xlu0 %v934, 110
      %v940 = vpop.permute.xlu0 %939
      %vm941 = vcmask 900096
      %v942 = vsel %vm941, %v936, %v938
      %v943 = vsel %vm941, %v938, %v940
      %947 = vst [vmem:[#allocation1] ss:$2 sm:$0xff] %v381
      %v948 = vld.sshfl [vmem:[#allocation1] sm:$0xff pattern:$0x75316420]
      %949 = vrot.lane.b32.xlu0 %v948, 110
      %v950 = vpop.permute.xlu0 %949
      %v952 = vsel %vm941, %v940, %v950
      %v953 = vld [vmem:[%s4] sm:$0xf]
      %955 = vset.pattern.permute.xlu0 28
      %956 = vperm.xlu0 %955, %v953
      %v957 = vpop.permute.xlu0 %956
      %v959 = vperm.slane %v942, 0
      %v960 = vperm.slane %v943, 0
      %v961 = vperm.slane %v952, 0
      %v962 = vmul.f32 %v957, %v959
      %v963 = vmul.f32 %v957, %v960
      %v964 = vmul.f32 %v957, %v961
      %v965 = vadd.f32 %v926, %v962
      %v966 = vadd.f32 %v927, %v963
      %v967 = vadd.f32 %v928, %v964
      %968 = vset.pattern.permute.xlu0 29
      %969 = vperm.xlu0 %968, %v953
      %v970 = vpop.permute.xlu0 %969
      %v972 = vperm.slane %v942, 1
      %v973 = vperm.slane %v943, 1
      %v974 = vperm.slane %v952, 1
      %v975 = vmul.f32 %v970, %v972
      %v976 = vmul.f32 %v970, %v973
      %v977 = vmul.f32 %v970, %v974
      %v978 = vadd.f32 %v965, %v975
      %v979 = vadd.f32 %v966, %v976
      %v980 = vadd.f32 %v967, %v977
      %981 = vset.pattern.permute.xlu0 30
      %982 = vperm.xlu0 %981, %v953
      %v983 = vpop.permute.xlu0 %982
      %v985 = vperm.slane %v942, 2
      %v986 = vperm.slane %v943, 2
      %v987 = vperm.slane %v952, 2
      %v988 = vmul.f32 %v983, %v985
      %v989 = vmul.f32 %v983, %v986
      %v990 = vmul.f32 %v983, %v987
      %v991 = vadd.f32 %v978, %v988
      %v992 = vadd.f32 %v979, %v989
      %v993 = vadd.f32 %v980, %v990
      %994 = vset.pattern.permute.xlu0 31
      %995 = vperm.xlu0 %994, %v953
      %v996 = vpop.permute.xlu0 %995
      %v998 = vperm.slane %v942, 3
      %v999 = vperm.slane %v943, 3
      %v1000 = vperm.slane %v952, 3
      %v1001 = vmul.f32 %v996, %v998
      %v1002 = vmul.f32 %v996, %v999
      %v1003 = vmul.f32 %v996, %v1000
      %v1004 = vadd.f32 %v991, %v1001
      %v1005 = vadd.f32 %v992, %v1002
      %v1006 = vadd.f32 %v993, %v1003
      %1007 = vst [vmem:[#allocation1] ss:$2 sm:$0xff] %v381
      %s1008 = scalar_lea.vmem [#allocation1], 16
      %1009 = vst [vmem:[%s1008] ss:$2 sm:$0xff] %v382
      %v1010 = vld.sshfl [vmem:[#allocation1] sm:$0xff pattern:$0x75316420]
      %v1011 = vld.sshfl [vmem:[#allocation1 + $0x8] sm:$0xff pattern:$0x75316420]
      %v1012 = vld.sshfl [vmem:[#allocation1 + $0x10] sm:$0xff pattern:$0x75316420]
      %1013 = vrot.lane.b32.xlu0 %v1010, 109
      %v1014 = vpop.permute.xlu0 %1013
      %1015 = vrot.lane.b32.xlu0 %v1011, 109
      %v1016 = vpop.permute.xlu0 %1015
      %1017 = vrot.lane.b32.xlu0 %v1012, 109
      %v1018 = vpop.permute.xlu0 %1017
      %vm1019 = vcmask 891904
      %v1020 = vsel %vm1019, %v1014, %v1016
      %v1021 = vsel %vm1019, %v1016, %v1018
      %1025 = vst [vmem:[#allocation1] ss:$2 sm:$0xff] %v381
      %v1026 = vld.sshfl [vmem:[#allocation1] sm:$0xff pattern:$0x75316420]
      %1027 = vrot.lane.b32.xlu0 %v1026, 109
      %v1028 = vpop.permute.xlu0 %1027
      %v1030 = vsel %vm1019, %v1018, %v1028
      %v1031 = vld [vmem:[%s4] sm:$0xf]
      %1033 = vset.pattern.permute.xlu0 32
      %1034 = vperm.xlu0 %1033, %v1031
      %v1035 = vpop.permute.xlu0 %1034
      %v1037 = vperm.slane %v1020, 0
      %v1038 = vperm.slane %v1021, 0
      %v1039 = vperm.slane %v1030, 0
      %v1040 = vmul.f32 %v1035, %v1037
      %v1041 = vmul.f32 %v1035, %v1038
      %v1042 = vmul.f32 %v1035, %v1039
      %v1043 = vadd.f32 %v1004, %v1040
      %v1044 = vadd.f32 %v1005, %v1041
      %v1045 = vadd.f32 %v1006, %v1042
      %1046 = vset.pattern.permute.xlu0 33
      %1047 = vperm.xlu0 %1046, %v1031
      %v1048 = vpop.permute.xlu0 %1047
      %v1050 = vperm.slane %v1020, 1
      %v1051 = vperm.slane %v1021, 1
      %v1052 = vperm.slane %v1030, 1
      %v1053 = vmul.f32 %v1048, %v1050
      %v1054 = vmul.f32 %v1048, %v1051
      %v1055 = vmul.f32 %v1048, %v1052
      %v1056 = vadd.f32 %v1043, %v1053
      %v1057 = vadd.f32 %v1044, %v1054
      %v1058 = vadd.f32 %v1045, %v1055
      %1059 = vset.pattern.permute.xlu0 34
      %1060 = vperm.xlu0 %1059, %v1031
      %v1061 = vpop.permute.xlu0 %1060
      %v1063 = vperm.slane %v1020, 2
      %v1064 = vperm.slane %v1021, 2
      %v1065 = vperm.slane %v1030, 2
      %v1066 = vmul.f32 %v1061, %v1063
      %v1067 = vmul.f32 %v1061, %v1064
      %v1068 = vmul.f32 %v1061, %v1065
      %v1069 = vadd.f32 %v1056, %v1066
      %v1070 = vadd.f32 %v1057, %v1067
      %v1071 = vadd.f32 %v1058, %v1068
      %1072 = vset.pattern.permute.xlu0 35
      %1073 = vperm.xlu0 %1072, %v1031
      %v1074 = vpop.permute.xlu0 %1073
      %v1076 = vperm.slane %v1020, 3
      %v1077 = vperm.slane %v1021, 3
      %v1078 = vperm.slane %v1030, 3
      %v1079 = vmul.f32 %v1074, %v1076
      %v1080 = vmul.f32 %v1074, %v1077
      %v1081 = vmul.f32 %v1074, %v1078
      %v1082 = vadd.f32 %v1069, %v1079
      %v1083 = vadd.f32 %v1070, %v1080
      %v1084 = vadd.f32 %v1071, %v1081
      %v1085 = vmul.f32 %v1082, %v371
      %v1086 = vmul.f32 %v1083, %v372
      %v1087 = vmul.f32 %v1084, %v373
      %v1090 = vrot.slane %v1086, 4
      %v1091 = vsel %vm378, %v1085, %v1090
      %1093 = vst [vmem:[%s258] sm:$0xff] %v1091
      %1094 = vst [vmem:[%s258 + $0x8] sm:$0xf] %v1087
      %v1095 = vsel %vm378, %v1085, 0.0
      %v1096 = vsel %vm378, %v1086, 0.0
      %v1097 = vadd.f32 %v1095, %v1096
      %v1098 = vsel %vm378, %v1087, 0.0
      %v1099 = vadd.f32 %v1097, %v1098
      %1100 = vadd.xlane.f32.xlu0 %v1099
      %v1101 = vpop.xlane.xlu0 %1100
      %v1102 = vmul.f32 %v1101, 0.00390625
      %v1103 = vsub.f32 %v1085, %v1102
      %v1104 = vsub.f32 %v1086, %v1102
      %v1105 = vsub.f32 %v1087, %v1102
      %v1106 = vmul.f32 %v1103, %v371
      %v1107 = vmul.f32 %v1104, %v372
      %v1108 = vmul.f32 %v1105, %v373
      %v1109 = vmul.f32 %v1106, %v1106
      %v1110 = vmul.f32 %v1107, %v1107
      %v1111 = vmul.f32 %v1108, %v1108
      %v1112 = vsel %vm378, %v1109, 0.0
      %v1113 = vsel %vm378, %v1110, 0.0
      %v1114 = vadd.f32 %v1112, %v1113
      %v1115 = vsel %vm378, %v1111, 0.0
      %v1116 = vadd.f32 %v1114, %v1115
      %1117 = vadd.xlane.f32.xlu0 %v1116
      %v1118 = vpop.xlane.xlu0 %1117
      %v1119 = vsel %vm636, %v1101, %v1118
      %vm1120 = vcmask 11264
      %1121 = vst.msk [vmem:[%s262] sm:$0xf] %vm1120, %v1119
      %p1122 = scmp.lt.s32.totalorder %s18, 1
      %s1123 = scalar_select %p1122, %s18, 1
      %s1124 = smul.addr %s1123, 3
      %s1125 = smul.addr %s1124, 4
      %s1126 = scalar_lea.vmem %s5, %s1125
      %p1127 = scmp.lt.s32.totalorder %s18, 1
      %s1128 = scalar_select %p1127, %s18, 1
      %s1129 = smul.addr %s1128, 4
      %s1130 = scalar_lea.vmem %s6, %s1129
      // Predicated region
      $region41: #{residual_conv_block.4} parent=39 // pred_check
        %p1131 = pneg %p146
      $region42: #{residual_conv_block.4} parent=39 // pred_check_branch
        %1133 = sbr.rel (%p1131) target = $region44
      $region43: #{residual_conv_block.4} parent=39 // pred_region
        _
      $region44: #{residual_conv_block.4} parent=39 // pred_fallthru
        _
      // Predicated region
      $region45: #{residual_conv_block.4} parent=39 // pred_check
        %p1134 = pneg %p172
      $region46: #{residual_conv_block.4} parent=39 // pred_check_branch
        %1136 = sbr.rel (%p1134) target = $region48
      $region47: #{residual_conv_block.4} parent=39 // pred_region
        _
      $region48: #{residual_conv_block.4} parent=39 // pred_fallthru
        _
    $region40: #{residual_conv_block.4} parent=5 // pred_fallthru
      _
    %p1137 = scmp.le.s32.totalorder 2, %s13
    // Predicated region
    $region49: #{residual_conv_block.4} parent=5 // pred_check
      %p1138 = pneg %p1137
    $region50: #{residual_conv_block.4} parent=5 // pred_check_branch
      %1140 = sbr.rel (%p1138) target = $region52
    $region51: #{residual_conv_block.4} parent=5 // pred_region
      %s1141 = ssub.s32 %s13, 2
      // Predicated region
      $region53: #{residual_conv_block.4} parent=51 // pred_check
        %p1142 = pneg %p152
      $region54: #{residual_conv_block.4} parent=51 // pred_check_branch
        %1144 = sbr.rel (%p1142) target = $region56
      $region55: #{residual_conv_block.4} parent=51 // pred_region
        %p1145 = scmp.lt.s32.totalorder %s19, 1
        %s1146 = scalar_select %p1145, %s19, 1
        %s1147 = smul.addr %s1146, 3
        %s1148 = smul.addr %s1147, 4
        %s1149 = scalar_lea.vmem %s5, %s1148
      $region56: #{residual_conv_block.4} parent=51 // pred_fallthru
        _
      // Predicated region
      $region57: #{residual_conv_block.4} parent=51 // pred_check
        %p1150 = pneg %p178
      $region58: #{residual_conv_block.4} parent=51 // pred_check_branch
        %1152 = sbr.rel (%p1150) target = $region60
      $region59: #{residual_conv_block.4} parent=51 // pred_region
        %p1153 = scmp.lt.s32.totalorder %s19, 1
        %s1154 = scalar_select %p1153, %s19, 1
        %s1155 = smul.addr %s1154, 4
        %s1156 = scalar_lea.vmem %s6, %s1155
      $region60: #{residual_conv_block.4} parent=51 // pred_fallthru
        _
    $region52: #{residual_conv_block.4} parent=5 // pred_fallthru
      _
  $region6: #{residual_conv_block.4} parent=0 // loop_footer
    %s17 = sadd.s32 1, %s13
  $region7: #{residual_conv_block.4} parent=0 // loop_footer_branch
    %12 = sbr.rel target = $region3
  $region8: #{residual_conv_block.4} parent=0 // loop_exit
    _

</llo_original>
